<compile_context>
chip_gen: v7x
topology: tpu7x:2x2x1
jax: 0.10.0
libtpu: 0.0.40
codegen_flags: <defaults>
</compile_context>

<pallas_src>
import math
from functools import partial

import jax
import jax.numpy as jnp
from jax.experimental import pallas as pl
from jax.experimental.pallas import tpu as pltpu


# ----------------------------- in-kernel helpers -----------------------------
def _layernorm(x, g, b, eps=1e-5):
    mu = jnp.mean(x, axis=-1, keepdims=True)
    var = jnp.mean((x - mu) ** 2, axis=-1, keepdims=True)
    return (x - mu) * jax.lax.rsqrt(var + eps) * g + b


def _mm(a, w):
    # Cast the activation to the (possibly bf16) weight dtype so the MXU runs
    # at the narrow-dtype rate; accumulate in f32.
    return jnp.dot(a.astype(w.dtype), w, preferred_element_type=jnp.float32)


# --------------------------------- kernel ------------------------------------
def encoder_kernel(*refs, h, dk, has_att):
    if has_att:
        (x_ref, mas_ref, am_ref,
         wq_ref, wk_ref, wv_ref, wo_ref,
         g1_ref, b1_ref, l1w_ref, l1b_ref, l2w_ref, l2b_ref,
         g2_ref, b2_ref, out_ref) = refs
    else:
        (x_ref, mas_ref,
         wq_ref, wk_ref, wv_ref, wo_ref,
         g1_ref, b1_ref, l1w_ref, l1b_ref, l2w_ref, l2b_ref,
         g2_ref, b2_ref, out_ref) = refs
        am_ref = None

    layer = pl.program_id(1)

    # Layer 0: seed the resident activation.  The output block keeps the same
    # block index across the layer axis, so it stays in VMEM; HBM writeback
    # happens once per batch element after the last layer.
    @pl.when(layer == 0)
    def _():
        out_ref[...] = x_ref[...]

    x = out_ref[0]                       # (n, d) f32 = previous layer output
    m = mas_ref[0]                       # (n, 1) f32 sequence mask
    n, d = x.shape
    inv = 1.0 / math.sqrt(dk)

    # Attention mask built in-kernel (no (n, n) ones tensor DMA'd from HBM).
    mask = m * m.T                       # (n, n)
    if am_ref is not None:
        mask = mask * am_ref[0]
    neg = (1.0 - mask) * (-10000.0 * inv)   # additive mask, pre-scaled once

    # ------------------------ multi-head self-attention ----------------------
    xq = _mm(x, wq_ref[0]) * inv         # scale folded into Q once
    xk = _mm(x, wk_ref[0])
    xv = _mm(x, wv_ref[0])

    def split_heads(z):                  # (n, h*dk) -> (h, n, dk)
        return jnp.concatenate(
            [z[None, :, i * dk:(i + 1) * dk] for i in range(h)], axis=0)

    q3, k3, v3 = split_heads(xq), split_heads(xk), split_heads(xv)

    # Batched over heads; contraction on the last dims (no explicit k.T).
    sc = jnp.einsum('hqd,hkd->hqk', q3, k3,
                    preferred_element_type=jnp.float32)       # (h, n, n)
    sc = sc + neg[None]
    sc = sc - jnp.max(sc, axis=-1, keepdims=True)
    e = jnp.exp(sc)
    p = e * pl.reciprocal(jnp.sum(e, axis=-1, keepdims=True), approx=True)
    p = p * mask[None]
    ctx = jnp.einsum('hqk,hkd->hqd', p, v3,
                     preferred_element_type=jnp.float32)      # (h, n, dk)

    # Output projection without any lane-axis concat of head outputs:
    #   concat_h(ctx_h) @ WO  ==  sum_h ctx_h @ WO[h*dk:(h+1)*dk, :]
    wo = wo_ref[0]                       # (h, dk, d)
    y = _mm(ctx[0], wo[0])
    for i in range(1, h):
        y = y + _mm(ctx[i], wo[i])
    y = y * m
    # TODO(synk): attention / FFN dropout treated as identity (eval mode).

    # ------------------------- residual + LayerNorm 1 ------------------------
    x1 = _layernorm(x + y, g1_ref[0], b1_ref[0]) * m

    # ---------------------------------- FFN ----------------------------------
    hid = jnp.maximum(_mm(x1, l1w_ref[0]) + l1b_ref[0], 0.0)
    ff = (_mm(hid, l2w_ref[0]) + l2b_ref[0]) * m

    # ------------------------- residual + LayerNorm 2 ------------------------
    out_ref[0] = (_layernorm(x1 + ff, g2_ref[0], b2_ref[0]) * m).astype(out_ref.dtype)


# ------------------------------ host-side wrapper -----------------------------
def encoder_forward(x, seq_mas, params, att_mas=None, *, h):
    bs, n, d = x.shape
    L = params["wq"].shape[0]
    assert d % h == 0
    dk = d // h
    dh = params["l1w"].shape[-1]

    seq_mas = seq_mas.reshape(bs, n, 1).astype(jnp.float32)
    x = x.astype(jnp.float32) + params["pos_emb"][:n][None]

    # Pre-split WO rows per head host-side: (L, d, d) -> (L, h, dk, d).
    wo_heads = params["wo"].reshape(L, h, dk, d)

    has_att = att_mas is not None
    kernel = partial(encoder_kernel, h=h, dk=dk, has_att=has_att)

    def a_spec(shape):  # per-batch-element blocks
        return pl.BlockSpec(shape, lambda b, l, nd=len(shape): (b,) + (0,) * (nd - 1))

    def w_spec(shape):  # per-layer blocks (stacked weights)
        return pl.BlockSpec(shape, lambda b, l, nd=len(shape): (l,) + (0,) * (nd - 1))

    in_specs = [a_spec((1, n, d)), a_spec((1, n, 1))]
    args = [x, seq_mas]
    if has_att:
        in_specs.append(a_spec((1, n, n)))
        args.append(att_mas.reshape(bs, n, n).astype(jnp.float32))

    in_specs += [
        w_spec((1, d, d)), w_spec((1, d, d)), w_spec((1, d, d)),   # WQ WK WV
        w_spec((1, h, dk, d)),                                      # WO (split)
        w_spec((1, 1, d)), w_spec((1, 1, d)),                       # LN1 g, b
        w_spec((1, d, dh)), w_spec((1, 1, dh)),                     # L1 w, b
        w_spec((1, dh, d)), w_spec((1, 1, d)),                      # L2 w, b
        w_spec((1, 1, d)), w_spec((1, 1, d)),                       # LN2 g, b
    ]
    args += [params["wq"], params["wk"], params["wv"], wo_heads,
             params["g1"], params["b1"],
             params["l1w"], params["l1b"], params["l2w"], params["l2b"],
             params["g2"], params["b2"]]

    # VMEM budget from the actual footprint (double-buffered blocks + rough
    # in-kernel intermediates), clamped to safe scoped limits.
    wbytes = jnp.dtype(params["wq"].dtype).itemsize
    f32 = 4
    est = (2 * (2 * n * d + n) * f32
           + (2 * n * n * f32 if has_att else 0)
           + 2 * (4 * d * d + 2 * d * dh) * wbytes
           + 2 * (5 * d + dh) * f32
           + (8 * n * d + 3 * h * n * n + 2 * n * dh) * f32)
    vmem_limit = int(min(100 * 2 ** 20, max(32 * 2 ** 20, 1.5 * est)))

    return pl.pallas_call(
        kernel,
        out_shape=jax.ShapeDtypeStruct((bs, n, d), jnp.float32),
        grid=(bs, L),
        in_specs=in_specs,
        out_specs=pl.BlockSpec((1, n, d), lambda b, l: (b, 0, 0)),
        compiler_params=pltpu.CompilerParams(
            dimension_semantics=("parallel", "arbitrary"),
            vmem_limit_bytes=vmem_limit),
    )(*args)


# ----------------------------- pure-JAX reference -----------------------------
def _mm_ref(a, w):
    return jnp.dot(a.astype(w.dtype), w, preferred_element_type=jnp.float32)


def _ln_ref(z, g, b, eps=1e-5):
    mu = z.mean(-1, keepdims=True)
    var = ((z - mu) ** 2).mean(-1, keepdims=True)
    return (z - mu) / jnp.sqrt(var + eps) * g + b


def _ref_layer(x, seq_mas, att_mas, p, li, h):
    bs, n, d = x.shape
    dk = d // h
    q_mas = seq_mas.reshape(bs, 1, n, 1)

    def proj(w):
        return _mm_ref(x, w).reshape(bs, n, h, dk).transpose(0, 2, 1, 3)

    Q = q_mas * proj(p["wq"][li])
    K = q_mas * proj(p["wk"][li])
    V = q_mas * proj(p["wv"][li])
    y = jnp.einsum('bhqd,bhkd->bhqk', Q, K)
    mas = q_mas * jnp.swapaxes(q_mas, -1, -2)
    if att_mas is not None:
        mas = mas * att_mas[:, None]
    y = y + (1.0 - mas) * -10000.0
    y = jax.nn.softmax(y / math.sqrt(dk), axis=-1) * mas
    y = jnp.einsum('bhqk,bhkd->bhqd', y, V) * q_mas
    y = y.transpose(0, 2, 1, 3).reshape(bs, n, d)
    y = _mm_ref(y, p["wo"][li]) * seq_mas

    x1 = _ln_ref(x + y, p["g1"][li, 0], p["b1"][li, 0]) * seq_mas
    hid = jax.nn.relu(_mm_ref(x1, p["l1w"][li]) + p["l1b"][li, 0])
    ff = (_mm_ref(hid, p["l2w"][li]) + p["l2b"][li, 0]) * seq_mas
    return _ln_ref(x1 + ff, p["g2"][li, 0], p["b2"][li, 0]) * seq_mas


def _ref_encoder(x, seq_mas, params, att_mas, h):
    bs, n, d = x.shape
    L = params["wq"].shape[0]
    seq_mas = seq_mas.reshape(bs, n, 1).astype(jnp.float32)
    if att_mas is not None:
        att_mas = att_mas.reshape(bs, n, n).astype(jnp.float32)
    x = x.astype(jnp.float32) + params["pos_emb"][:n][None]
    for li in range(L):
        x = _ref_layer(x, seq_mas, att_mas, params, li, h)
    return x


# ----------------------------- parameter init -----------------------------
def init_params(key, num_layers, d_model, d_hid, param_dtype=jnp.bfloat16):
    L = num_layers
    ks = jax.random.split(key, 9)
    s = 0.05

    def w(k, shape):
        return (s * jax.random.normal(k, shape, jnp.float32)).astype(param_dtype)

    return {
        "pos_emb": 0.01 * jax.random.normal(ks[0], (1024, d_model), jnp.float32),
        "wq": w(ks[1], (L, d_model, d_model)),
        "wk": w(ks[2], (L, d_model, d_model)),
        "wv": w(ks[3], (L, d_model, d_model)),
        "wo": w(ks[4], (L, d_model, d_model)),
        "g1": jnp.ones((L, 1, d_model), jnp.float32),
        "b1": jnp.zeros((L, 1, d_model), jnp.float32),
        "l1w": w(ks[5], (L, d_model, d_hid)),
        "l1b": s * jax.random.normal(ks[6], (L, 1, d_hid), jnp.float32),
        "l2w": w(ks[7], (L, d_hid, d_model)),
        "l2b": s * jax.random.normal(ks[8], (L, 1, d_model), jnp.float32),
        "g2": jnp.ones((L, 1, d_model), jnp.float32),
        "b2": jnp.zeros((L, 1, d_model), jnp.float32),
    }


if __name__ == "__main__":
    # Small, lane-friendly demo config (d and d_hid multiples of 128, dk mult. of 8).
    bs, n = 2, 16
    d_model, d_hid, h, num_layers = 128, 256, 4, 2

    key = jax.random.PRNGKey(0)
    kx, kp = jax.random.split(key)
    x = jax.random.normal(kx, (bs, n, d_model), jnp.float32)
    # batch 0: full length, batch 1: length 10 (padded)
    seq_mas = jnp.array([[1.0] * n, [1.0] * 10 + [0.0] * (n - 10)], jnp.float32)

    params = init_params(kp, num_layers, d_model, d_hid, param_dtype=jnp.bfloat16)

    # Default path: no attention mask is materialized or DMA'd.
    out = jax.block_until_ready(encoder_forward(x, seq_mas, params, att_mas=None, h=h))
    ref = _ref_encoder(x, seq_mas, params, None, h)
    assert out.shape == (bs, n, d_model)
    err = float(jnp.max(jnp.abs(out - ref)))
    assert jnp.allclose(out, ref, rtol=5e-3, atol=5e-3), f"mismatch (no att_mas): {err}"

    # Explicit attention-mask path (e.g. causal).
    causal = jnp.broadcast_to(jnp.tril(jnp.ones((n, n), jnp.float32)), (bs, n, n))
    out2 = jax.block_until_ready(encoder_forward(x, seq_mas, params, att_mas=causal, h=h))
    ref2 = _ref_encoder(x, seq_mas, params, causal, h)
    err2 = float(jnp.max(jnp.abs(out2 - ref2)))
    assert jnp.allclose(out2, ref2, rtol=5e-3, atol=5e-3), f"mismatch (att_mas): {err2}"

    print("KERNEL_OK")
</pallas_src>

<mosaic_0001>
module attributes {stable_mosaic.version = 11 : i64} {
  func.func @encoder_kernel(%arg0: i32, %arg1: i32, %arg2: memref<1x16x128xf32, #tpu.memory_space<vmem>>, %arg3: memref<1x16x1xf32, #tpu.memory_space<vmem>>, %arg4: memref<1x128x128xbf16, #tpu.memory_space<vmem>>, %arg5: memref<1x128x128xbf16, #tpu.memory_space<vmem>>, %arg6: memref<1x128x128xbf16, #tpu.memory_space<vmem>>, %arg7: memref<1x4x32x128xbf16, #tpu.memory_space<vmem>>, %arg8: memref<1x1x128xf32, #tpu.memory_space<vmem>>, %arg9: memref<1x1x128xf32, #tpu.memory_space<vmem>>, %arg10: memref<1x128x256xbf16, #tpu.memory_space<vmem>>, %arg11: memref<1x1x256xf32, #tpu.memory_space<vmem>>, %arg12: memref<1x256x128xbf16, #tpu.memory_space<vmem>>, %arg13: memref<1x1x128xf32, #tpu.memory_space<vmem>>, %arg14: memref<1x1x128xf32, #tpu.memory_space<vmem>>, %arg15: memref<1x1x128xf32, #tpu.memory_space<vmem>>, %arg16: memref<1x16x128xf32, #tpu.memory_space<vmem>>) attributes {dimension_semantics = [#tpu.dimension_semantics<parallel>, #tpu.dimension_semantics<arbitrary>], iteration_bounds = array<i64: 2, 2>, scalar_prefetch = 0 : i64, scratch_operands = 0 : i64, tpu.core_type = #tpu.core_type<tc>, window_params = [{transform_indices = @transform_0, window_bounds = array<i64: 1, 16, 128>}, {transform_indices = @transform_1, window_bounds = array<i64: 1, 16, 1>}, {transform_indices = @transform_2, window_bounds = array<i64: 1, 128, 128>}, {transform_indices = @transform_3, window_bounds = array<i64: 1, 128, 128>}, {transform_indices = @transform_4, window_bounds = array<i64: 1, 128, 128>}, {transform_indices = @transform_5, window_bounds = array<i64: 1, 4, 32, 128>}, {transform_indices = @transform_6, window_bounds = array<i64: 1, 1, 128>}, {transform_indices = @transform_7, window_bounds = array<i64: 1, 1, 128>}, {transform_indices = @transform_8, window_bounds = array<i64: 1, 128, 256>}, {transform_indices = @transform_9, window_bounds = array<i64: 1, 1, 256>}, {transform_indices = @transform_10, window_bounds = array<i64: 1, 256, 128>}, {transform_indices = @transform_11, window_bounds = array<i64: 1, 1, 128>}, {transform_indices = @transform_12, window_bounds = array<i64: 1, 1, 128>}, {transform_indices = @transform_13, window_bounds = array<i64: 1, 1, 128>}, {transform_indices = @transform_14, window_bounds = array<i64: 1, 16, 128>}]} {
    %c0_i32 = arith.constant 0 : i32
    %0 = arith.cmpi eq, %arg1, %c0_i32 : i32
    %1 = arith.extui %0 : i1 to i32
    %c0_i32_0 = arith.constant 0 : i32
    %2 = arith.cmpi ne, %1, %c0_i32_0 : i32
    scf.if %2 {
      %c0_72 = arith.constant 0 : index
      %c0_73 = arith.constant 0 : index
      %c0_74 = arith.constant 0 : index
      %186 = vector.load %arg2[%c0_72, %c0_73, %c0_74] : memref<1x16x128xf32, #tpu.memory_space<vmem>>, vector<1x16x128xf32>
      %c0_75 = arith.constant 0 : index
      %c0_76 = arith.constant 0 : index
      %c0_77 = arith.constant 0 : index
      %187 = vector.load %arg16[%c0_75, %c0_76, %c0_77] : memref<1x16x128xf32, #tpu.memory_space<vmem>>, vector<1x16x128xf32>
      tpu.vector_store %arg16[%c0_75, %c0_76, %c0_77], %186 {strides = array<i32>} : memref<1x16x128xf32, #tpu.memory_space<vmem>>, vector<1x16x128xf32>,
    } else {
    }
    %c0 = arith.constant 0 : index
    %c0_1 = arith.constant 0 : index
    %c0_2 = arith.constant 0 : index
    %3 = vector.load %arg16[%c0, %c0_1, %c0_2] : memref<1x16x128xf32, #tpu.memory_space<vmem>>, vector<1x16x128xf32>
    %4 = vector.shape_cast %3 : vector<1x16x128xf32> to vector<16x128xf32>
    %c0_3 = arith.constant 0 : index
    %c0_4 = arith.constant 0 : index
    %c0_5 = arith.constant 0 : index
    %5 = vector.load %arg3[%c0_3, %c0_4, %c0_5] : memref<1x16x1xf32, #tpu.memory_space<vmem>>, vector<1x16x1xf32>
    %6 = vector.shape_cast %5 : vector<1x16x1xf32> to vector<16x1xf32>
    %7 = tpu.transpose %6, [1, 0] : vector<16x1xf32> -> vector<1x16xf32>
    %8 = vector.broadcast %6 : vector<16x1xf32> to vector<16x16xf32>
    %9 = vector.broadcast %7 : vector<1x16xf32> to vector<16x16xf32>
    %10 = arith.mulf %8, %9 : vector<16x16xf32>
    %cst = arith.constant 1.000000e+00 : f32
    %11 = vector.broadcast %cst : f32 to vector<16x16xf32>
    %12 = arith.subf %11, %10 : vector<16x16xf32>
    %cst_6 = arith.constant -1767.76697 : f32
    %13 = vector.broadcast %cst_6 : f32 to vector<16x16xf32>
    %14 = arith.mulf %12, %13 : vector<16x16xf32>
    %c0_7 = arith.constant 0 : index
    %c0_8 = arith.constant 0 : index
    %c0_9 = arith.constant 0 : index
    %15 = vector.load %arg4[%c0_7, %c0_8, %c0_9] : memref<1x128x128xbf16, #tpu.memory_space<vmem>>, vector<1x128x128xbf16>
    %16 = vector.shape_cast %15 : vector<1x128x128xbf16> to vector<128x128xbf16>
    %17 = arith.truncf %4 : vector<16x128xf32> to vector<16x128xbf16>
    %cst_10 = arith.constant dense<0.000000e+00> : vector<16x128xf32>
    %18 = tpu.matmul %17, %16, %cst_10 {dimension_numbers = #tpu.dot_dimension_numbers<[1], [0], [0], [1], [0, 0, 1, 1], [], []>} : vector<16x128xbf16>, vector<128x128xbf16>, vector<16x128xf32> -> vector<16x128xf32>
    %cst_11 = arith.constant 0.176776692 : f32
    %19 = vector.broadcast %cst_11 : f32 to vector<16x128xf32>
    %20 = arith.mulf %18, %19 : vector<16x128xf32>
    %c0_12 = arith.constant 0 : index
    %c0_13 = arith.constant 0 : index
    %c0_14 = arith.constant 0 : index
    %21 = vector.load %arg5[%c0_12, %c0_13, %c0_14] : memref<1x128x128xbf16, #tpu.memory_space<vmem>>, vector<1x128x128xbf16>
    %22 = vector.shape_cast %21 : vector<1x128x128xbf16> to vector<128x128xbf16>
    %23 = arith.truncf %4 : vector<16x128xf32> to vector<16x128xbf16>
    %cst_15 = arith.constant dense<0.000000e+00> : vector<16x128xf32>
    %24 = tpu.matmul %23, %22, %cst_15 {dimension_numbers = #tpu.dot_dimension_numbers<[1], [0], [0], [1], [0, 0, 1, 1], [], []>} : vector<16x128xbf16>, vector<128x128xbf16>, vector<16x128xf32> -> vector<16x128xf32>
    %c0_16 = arith.constant 0 : index
    %c0_17 = arith.constant 0 : index
    %c0_18 = arith.constant 0 : index
    %25 = vector.load %arg6[%c0_16, %c0_17, %c0_18] : memref<1x128x128xbf16, #tpu.memory_space<vmem>>, vector<1x128x128xbf16>
    %26 = vector.shape_cast %25 : vector<1x128x128xbf16> to vector<128x128xbf16>
    %27 = arith.truncf %4 : vector<16x128xf32> to vector<16x128xbf16>
    %cst_19 = arith.constant dense<0.000000e+00> : vector<16x128xf32>
    %28 = tpu.matmul %27, %26, %cst_19 {dimension_numbers = #tpu.dot_dimension_numbers<[1], [0], [0], [1], [0, 0, 1, 1], [], []>} : vector<16x128xbf16>, vector<128x128xbf16>, vector<16x128xf32> -> vector<16x128xf32>
    %29 = vector.extract_strided_slice %20 {offsets = [0, 0], sizes = [16, 32], strides = [1, 1]} : vector<16x128xf32> to vector<16x32xf32>
    %30 = vector.shape_cast %29 : vector<16x32xf32> to vector<1x16x32xf32>
    %31 = vector.extract_strided_slice %20 {offsets = [0, 32], sizes = [16, 32], strides = [1, 1]} : vector<16x128xf32> to vector<16x32xf32>
    %32 = vector.shape_cast %31 : vector<16x32xf32> to vector<1x16x32xf32>
    %33 = vector.extract_strided_slice %20 {offsets = [0, 64], sizes = [16, 32], strides = [1, 1]} : vector<16x128xf32> to vector<16x32xf32>
    %34 = vector.shape_cast %33 : vector<16x32xf32> to vector<1x16x32xf32>
    %35 = vector.extract_strided_slice %20 {offsets = [0, 96], sizes = [16, 32], strides = [1, 1]} : vector<16x128xf32> to vector<16x32xf32>
    %36 = vector.shape_cast %35 : vector<16x32xf32> to vector<1x16x32xf32>
    %37 = tpu.concatenate %30, %32, %34, %36 in 0 : vector<1x16x32xf32>, vector<1x16x32xf32>, vector<1x16x32xf32>, vector<1x16x32xf32> -> vector<4x16x32xf32>
    %38 = vector.extract_strided_slice %24 {offsets = [0, 0], sizes = [16, 32], strides = [1, 1]} : vector<16x128xf32> to vector<16x32xf32>
    %39 = vector.shape_cast %38 : vector<16x32xf32> to vector<1x16x32xf32>
    %40 = vector.extract_strided_slice %24 {offsets = [0, 32], sizes = [16, 32], strides = [1, 1]} : vector<16x128xf32> to vector<16x32xf32>
    %41 = vector.shape_cast %40 : vector<16x32xf32> to vector<1x16x32xf32>
    %42 = vector.extract_strided_slice %24 {offsets = [0, 64], sizes = [16, 32], strides = [1, 1]} : vector<16x128xf32> to vector<16x32xf32>
    %43 = vector.shape_cast %42 : vector<16x32xf32> to vector<1x16x32xf32>
    %44 = vector.extract_strided_slice %24 {offsets = [0, 96], sizes = [16, 32], strides = [1, 1]} : vector<16x128xf32> to vector<16x32xf32>
    %45 = vector.shape_cast %44 : vector<16x32xf32> to vector<1x16x32xf32>
    %46 = tpu.concatenate %39, %41, %43, %45 in 0 : vector<1x16x32xf32>, vector<1x16x32xf32>, vector<1x16x32xf32>, vector<1x16x32xf32> -> vector<4x16x32xf32>
    %47 = vector.extract_strided_slice %28 {offsets = [0, 0], sizes = [16, 32], strides = [1, 1]} : vector<16x128xf32> to vector<16x32xf32>
    %48 = vector.shape_cast %47 : vector<16x32xf32> to vector<1x16x32xf32>
    %49 = vector.extract_strided_slice %28 {offsets = [0, 32], sizes = [16, 32], strides = [1, 1]} : vector<16x128xf32> to vector<16x32xf32>
    %50 = vector.shape_cast %49 : vector<16x32xf32> to vector<1x16x32xf32>
    %51 = vector.extract_strided_slice %28 {offsets = [0, 64], sizes = [16, 32], strides = [1, 1]} : vector<16x128xf32> to vector<16x32xf32>
    %52 = vector.shape_cast %51 : vector<16x32xf32> to vector<1x16x32xf32>
    %53 = vector.extract_strided_slice %28 {offsets = [0, 96], sizes = [16, 32], strides = [1, 1]} : vector<16x128xf32> to vector<16x32xf32>
    %54 = vector.shape_cast %53 : vector<16x32xf32> to vector<1x16x32xf32>
    %55 = tpu.concatenate %48, %50, %52, %54 in 0 : vector<1x16x32xf32>, vector<1x16x32xf32>, vector<1x16x32xf32>, vector<1x16x32xf32> -> vector<4x16x32xf32>
    "tpu.trace_start"() <{level = 10 : i32, message = "hqd,hkd->hqk"}> : () -> ()
    %cst_20 = arith.constant dense<0.000000e+00> : vector<4x16x16xf32>
    %56 = tpu.matmul %37, %46, %cst_20 {dimension_numbers = #tpu.dot_dimension_numbers<[2], [2], [1], [1], [0, 0, 0, 1, 1, 1], [0], [0]>} : vector<4x16x32xf32>, vector<4x16x32xf32>, vector<4x16x16xf32> -> vector<4x16x16xf32>
    "tpu.trace_stop"() : () -> ()
    %57 = vector.shape_cast %14 : vector<16x16xf32> to vector<1x16x16xf32>
    %58 = vector.broadcast %57 : vector<1x16x16xf32> to vector<4x16x16xf32>
    %59 = arith.addf %56, %58 : vector<4x16x16xf32>
    %cst_21 = arith.constant dense<0xFF800000> : vector<4x16xf32>
    %60 = vector.multi_reduction <maximumf>, %59, %cst_21 [2] : vector<4x16x16xf32> to vector<4x16xf32>
    %61 = vector.shape_cast %60 : vector<4x16xf32> to vector<4x16x1xf32>
    %62 = vector.broadcast %61 : vector<4x16x1xf32> to vector<4x16x16xf32>
    %63 = arith.subf %59, %62 : vector<4x16x16xf32>
    %64 = math.exp %63 : vector<4x16x16xf32>
    %cst_22 = arith.constant dense<0.000000e+00> : vector<4x16xf32>
    %65 = vector.multi_reduction <add>, %64, %cst_22 [2] : vector<4x16x16xf32> to vector<4x16xf32>
    %66 = vector.shape_cast %65 : vector<4x16xf32> to vector<4x16x1xf32>
    %67 = tpu.reciprocal %66 {approx = true} : vector<4x16x1xf32> -> vector<4x16x1xf32>
    %68 = vector.broadcast %67 : vector<4x16x1xf32> to vector<4x16x16xf32>
    %69 = arith.mulf %64, %68 : vector<4x16x16xf32>
    %70 = vector.shape_cast %10 : vector<16x16xf32> to vector<1x16x16xf32>
    %71 = vector.broadcast %70 : vector<1x16x16xf32> to vector<4x16x16xf32>
    %72 = arith.mulf %69, %71 : vector<4x16x16xf32>
    "tpu.trace_start"() <{level = 10 : i32, message = "hqk,hkd->hqd"}> : () -> ()
    %cst_23 = arith.constant dense<0.000000e+00> : vector<4x16x32xf32>
    %73 = tpu.matmul %72, %55, %cst_23 {dimension_numbers = #tpu.dot_dimension_numbers<[2], [1], [1], [2], [0, 0, 0, 1, 1, 2], [0], [0]>} : vector<4x16x16xf32>, vector<4x16x32xf32>, vector<4x16x32xf32> -> vector<4x16x32xf32>
    "tpu.trace_stop"() : () -> ()
    %c0_24 = arith.constant 0 : index
    %c0_25 = arith.constant 0 : index
    %c0_26 = arith.constant 0 : index
    %c0_27 = arith.constant 0 : index
    %74 = vector.load %arg7[%c0_24, %c0_25, %c0_26, %c0_27] : memref<1x4x32x128xbf16, #tpu.memory_space<vmem>>, vector<1x4x32x128xbf16>
    %75 = vector.shape_cast %74 : vector<1x4x32x128xbf16> to vector<4x32x128xbf16>
    %76 = vector.extract_strided_slice %73 {offsets = [0, 0, 0], sizes = [1, 16, 32], strides = [1, 1, 1]} : vector<4x16x32xf32> to vector<1x16x32xf32>
    %77 = vector.shape_cast %76 : vector<1x16x32xf32> to vector<16x32xf32>
    %78 = vector.extract_strided_slice %75 {offsets = [0, 0, 0], sizes = [1, 32, 128], strides = [1, 1, 1]} : vector<4x32x128xbf16> to vector<1x32x128xbf16>
    %79 = vector.shape_cast %78 : vector<1x32x128xbf16> to vector<32x128xbf16>
    %80 = arith.truncf %77 : vector<16x32xf32> to vector<16x32xbf16>
    %cst_28 = arith.constant dense<0.000000e+00> : vector<16x128xf32>
    %81 = tpu.matmul %80, %79, %cst_28 {dimension_numbers = #tpu.dot_dimension_numbers<[1], [0], [0], [1], [0, 0, 1, 1], [], []>} : vector<16x32xbf16>, vector<32x128xbf16>, vector<16x128xf32> -> vector<16x128xf32>
    %82 = vector.extract_strided_slice %73 {offsets = [1, 0, 0], sizes = [1, 16, 32], strides = [1, 1, 1]} : vector<4x16x32xf32> to vector<1x16x32xf32>
    %83 = vector.shape_cast %82 : vector<1x16x32xf32> to vector<16x32xf32>
    %84 = vector.extract_strided_slice %75 {offsets = [1, 0, 0], sizes = [1, 32, 128], strides = [1, 1, 1]} : vector<4x32x128xbf16> to vector<1x32x128xbf16>
    %85 = vector.shape_cast %84 : vector<1x32x128xbf16> to vector<32x128xbf16>
    %86 = arith.truncf %83 : vector<16x32xf32> to vector<16x32xbf16>
    %cst_29 = arith.constant dense<0.000000e+00> : vector<16x128xf32>
    %87 = tpu.matmul %86, %85, %cst_29 {dimension_numbers = #tpu.dot_dimension_numbers<[1], [0], [0], [1], [0, 0, 1, 1], [], []>} : vector<16x32xbf16>, vector<32x128xbf16>, vector<16x128xf32> -> vector<16x128xf32>
    %88 = arith.addf %81, %87 : vector<16x128xf32>
    %89 = vector.extract_strided_slice %73 {offsets = [2, 0, 0], sizes = [1, 16, 32], strides = [1, 1, 1]} : vector<4x16x32xf32> to vector<1x16x32xf32>
    %90 = vector.shape_cast %89 : vector<1x16x32xf32> to vector<16x32xf32>
    %91 = vector.extract_strided_slice %75 {offsets = [2, 0, 0], sizes = [1, 32, 128], strides = [1, 1, 1]} : vector<4x32x128xbf16> to vector<1x32x128xbf16>
    %92 = vector.shape_cast %91 : vector<1x32x128xbf16> to vector<32x128xbf16>
    %93 = arith.truncf %90 : vector<16x32xf32> to vector<16x32xbf16>
    %cst_30 = arith.constant dense<0.000000e+00> : vector<16x128xf32>
    %94 = tpu.matmul %93, %92, %cst_30 {dimension_numbers = #tpu.dot_dimension_numbers<[1], [0], [0], [1], [0, 0, 1, 1], [], []>} : vector<16x32xbf16>, vector<32x128xbf16>, vector<16x128xf32> -> vector<16x128xf32>
    %95 = arith.addf %88, %94 : vector<16x128xf32>
    %96 = vector.extract_strided_slice %73 {offsets = [3, 0, 0], sizes = [1, 16, 32], strides = [1, 1, 1]} : vector<4x16x32xf32> to vector<1x16x32xf32>
    %97 = vector.shape_cast %96 : vector<1x16x32xf32> to vector<16x32xf32>
    %98 = vector.extract_strided_slice %75 {offsets = [3, 0, 0], sizes = [1, 32, 128], strides = [1, 1, 1]} : vector<4x32x128xbf16> to vector<1x32x128xbf16>
    %99 = vector.shape_cast %98 : vector<1x32x128xbf16> to vector<32x128xbf16>
    %100 = arith.truncf %97 : vector<16x32xf32> to vector<16x32xbf16>
    %cst_31 = arith.constant dense<0.000000e+00> : vector<16x128xf32>
    %101 = tpu.matmul %100, %99, %cst_31 {dimension_numbers = #tpu.dot_dimension_numbers<[1], [0], [0], [1], [0, 0, 1, 1], [], []>} : vector<16x32xbf16>, vector<32x128xbf16>, vector<16x128xf32> -> vector<16x128xf32>
    %102 = arith.addf %95, %101 : vector<16x128xf32>
    %103 = vector.broadcast %6 : vector<16x1xf32> to vector<16x128xf32>
    %104 = arith.mulf %102, %103 : vector<16x128xf32>
    %105 = arith.addf %4, %104 : vector<16x128xf32>
    %c0_32 = arith.constant 0 : index
    %c0_33 = arith.constant 0 : index
    %c0_34 = arith.constant 0 : index
    %106 = vector.load %arg8[%c0_32, %c0_33, %c0_34] : memref<1x1x128xf32, #tpu.memory_space<vmem>>, vector<1x1x128xf32>
    %107 = vector.shape_cast %106 : vector<1x1x128xf32> to vector<1x128xf32>
    %c0_35 = arith.constant 0 : index
    %c0_36 = arith.constant 0 : index
    %c0_37 = arith.constant 0 : index
    %108 = vector.load %arg9[%c0_35, %c0_36, %c0_37] : memref<1x1x128xf32, #tpu.memory_space<vmem>>, vector<1x1x128xf32>
    %109 = vector.shape_cast %108 : vector<1x1x128xf32> to vector<1x128xf32>
    %cst_38 = arith.constant dense<0.000000e+00> : vector<16xf32>
    %110 = vector.multi_reduction <add>, %105, %cst_38 [1] : vector<16x128xf32> to vector<16xf32>
    %111 = vector.shape_cast %110 : vector<16xf32> to vector<16x1xf32>
    %cst_39 = arith.constant 1.280000e+02 : f32
    %112 = vector.broadcast %cst_39 : f32 to vector<16x1xf32>
    %113 = arith.divf %111, %112 : vector<16x1xf32>
    %114 = vector.broadcast %113 : vector<16x1xf32> to vector<16x128xf32>
    %115 = arith.subf %105, %114 : vector<16x128xf32>
    %116 = arith.mulf %115, %115 : vector<16x128xf32>
    %cst_40 = arith.constant dense<0.000000e+00> : vector<16xf32>
    %117 = vector.multi_reduction <add>, %116, %cst_40 [1] : vector<16x128xf32> to vector<16xf32>
    %118 = vector.shape_cast %117 : vector<16xf32> to vector<16x1xf32>
    %cst_41 = arith.constant 1.280000e+02 : f32
    %119 = vector.broadcast %cst_41 : f32 to vector<16x1xf32>
    %120 = arith.divf %118, %119 : vector<16x1xf32>
    %121 = vector.broadcast %113 : vector<16x1xf32> to vector<16x128xf32>
    %122 = arith.subf %105, %121 : vector<16x128xf32>
    %cst_42 = arith.constant 9.99999974E-6 : f32
    %123 = vector.broadcast %cst_42 : f32 to vector<16x1xf32>
    %124 = arith.addf %120, %123 : vector<16x1xf32>
    %125 = math.rsqrt %124 : vector<16x1xf32>
    %126 = vector.broadcast %125 : vector<16x1xf32> to vector<16x128xf32>
    %127 = arith.mulf %122, %126 : vector<16x128xf32>
    %128 = vector.broadcast %107 : vector<1x128xf32> to vector<16x128xf32>
    %129 = arith.mulf %127, %128 : vector<16x128xf32>
    %130 = vector.broadcast %109 : vector<1x128xf32> to vector<16x128xf32>
    %131 = arith.addf %129, %130 : vector<16x128xf32>
    %132 = vector.broadcast %6 : vector<16x1xf32> to vector<16x128xf32>
    %133 = arith.mulf %131, %132 : vector<16x128xf32>
    %c0_43 = arith.constant 0 : index
    %c0_44 = arith.constant 0 : index
    %c0_45 = arith.constant 0 : index
    %134 = vector.load %arg10[%c0_43, %c0_44, %c0_45] : memref<1x128x256xbf16, #tpu.memory_space<vmem>>, vector<1x128x256xbf16>
    %135 = vector.shape_cast %134 : vector<1x128x256xbf16> to vector<128x256xbf16>
    %136 = arith.truncf %133 : vector<16x128xf32> to vector<16x128xbf16>
    %cst_46 = arith.constant dense<0.000000e+00> : vector<16x256xf32>
    %137 = tpu.matmul %136, %135, %cst_46 {dimension_numbers = #tpu.dot_dimension_numbers<[1], [0], [0], [1], [0, 0, 1, 1], [], []>} : vector<16x128xbf16>, vector<128x256xbf16>, vector<16x256xf32> -> vector<16x256xf32>
    %c0_47 = arith.constant 0 : index
    %c0_48 = arith.constant 0 : index
    %c0_49 = arith.constant 0 : index
    %138 = vector.load %arg11[%c0_47, %c0_48, %c0_49] : memref<1x1x256xf32, #tpu.memory_space<vmem>>, vector<1x1x256xf32>
    %139 = vector.shape_cast %138 : vector<1x1x256xf32> to vector<1x256xf32>
    %140 = vector.broadcast %139 : vector<1x256xf32> to vector<16x256xf32>
    %141 = arith.addf %137, %140 : vector<16x256xf32>
    %cst_50 = arith.constant 0.000000e+00 : f32
    %142 = vector.broadcast %cst_50 : f32 to vector<16x256xf32>
    %143 = arith.maximumf %141, %142 : vector<16x256xf32>
    %c0_51 = arith.constant 0 : index
    %c0_52 = arith.constant 0 : index
    %c0_53 = arith.constant 0 : index
    %144 = vector.load %arg12[%c0_51, %c0_52, %c0_53] : memref<1x256x128xbf16, #tpu.memory_space<vmem>>, vector<1x256x128xbf16>
    %145 = vector.shape_cast %144 : vector<1x256x128xbf16> to vector<256x128xbf16>
    %146 = arith.truncf %143 : vector<16x256xf32> to vector<16x256xbf16>
    %cst_54 = arith.constant dense<0.000000e+00> : vector<16x128xf32>
    %147 = tpu.matmul %146, %145, %cst_54 {dimension_numbers = #tpu.dot_dimension_numbers<[1], [0], [0], [1], [0, 0, 1, 1], [], []>} : vector<16x256xbf16>, vector<256x128xbf16>, vector<16x128xf32> -> vector<16x128xf32>
    %c0_55 = arith.constant 0 : index
    %c0_56 = arith.constant 0 : index
    %c0_57 = arith.constant 0 : index
    %148 = vector.load %arg13[%c0_55, %c0_56, %c0_57] : memref<1x1x128xf32, #tpu.memory_space<vmem>>, vector<1x1x128xf32>
    %149 = vector.shape_cast %148 : vector<1x1x128xf32> to vector<1x128xf32>
    %150 = vector.broadcast %149 : vector<1x128xf32> to vector<16x128xf32>
    %151 = arith.addf %147, %150 : vector<16x128xf32>
    %152 = vector.broadcast %6 : vector<16x1xf32> to vector<16x128xf32>
    %153 = arith.mulf %151, %152 : vector<16x128xf32>
    %154 = arith.addf %133, %153 : vector<16x128xf32>
    %c0_58 = arith.constant 0 : index
    %c0_59 = arith.constant 0 : index
    %c0_60 = arith.constant 0 : index
    %155 = vector.load %arg14[%c0_58, %c0_59, %c0_60] : memref<1x1x128xf32, #tpu.memory_space<vmem>>, vector<1x1x128xf32>
    %156 = vector.shape_cast %155 : vector<1x1x128xf32> to vector<1x128xf32>
    %c0_61 = arith.constant 0 : index
    %c0_62 = arith.constant 0 : index
    %c0_63 = arith.constant 0 : index
    %157 = vector.load %arg15[%c0_61, %c0_62, %c0_63] : memref<1x1x128xf32, #tpu.memory_space<vmem>>, vector<1x1x128xf32>
    %158 = vector.shape_cast %157 : vector<1x1x128xf32> to vector<1x128xf32>
    %cst_64 = arith.constant dense<0.000000e+00> : vector<16xf32>
    %159 = vector.multi_reduction <add>, %154, %cst_64 [1] : vector<16x128xf32> to vector<16xf32>
    %160 = vector.shape_cast %159 : vector<16xf32> to vector<16x1xf32>
    %cst_65 = arith.constant 1.280000e+02 : f32
    %161 = vector.broadcast %cst_65 : f32 to vector<16x1xf32>
    %162 = arith.divf %160, %161 : vector<16x1xf32>
    %163 = vector.broadcast %162 : vector<16x1xf32> to vector<16x128xf32>
    %164 = arith.subf %154, %163 : vector<16x128xf32>
    %165 = arith.mulf %164, %164 : vector<16x128xf32>
    %cst_66 = arith.constant dense<0.000000e+00> : vector<16xf32>
    %166 = vector.multi_reduction <add>, %165, %cst_66 [1] : vector<16x128xf32> to vector<16xf32>
    %167 = vector.shape_cast %166 : vector<16xf32> to vector<16x1xf32>
    %cst_67 = arith.constant 1.280000e+02 : f32
    %168 = vector.broadcast %cst_67 : f32 to vector<16x1xf32>
    %169 = arith.divf %167, %168 : vector<16x1xf32>
    %170 = vector.broadcast %162 : vector<16x1xf32> to vector<16x128xf32>
    %171 = arith.subf %154, %170 : vector<16x128xf32>
    %cst_68 = arith.constant 9.99999974E-6 : f32
    %172 = vector.broadcast %cst_68 : f32 to vector<16x1xf32>
    %173 = arith.addf %169, %172 : vector<16x1xf32>
    %174 = math.rsqrt %173 : vector<16x1xf32>
    %175 = vector.broadcast %174 : vector<16x1xf32> to vector<16x128xf32>
    %176 = arith.mulf %171, %175 : vector<16x128xf32>
    %177 = vector.broadcast %156 : vector<1x128xf32> to vector<16x128xf32>
    %178 = arith.mulf %176, %177 : vector<16x128xf32>
    %179 = vector.broadcast %158 : vector<1x128xf32> to vector<16x128xf32>
    %180 = arith.addf %178, %179 : vector<16x128xf32>
    %181 = vector.broadcast %6 : vector<16x1xf32> to vector<16x128xf32>
    %182 = arith.mulf %180, %181 : vector<16x128xf32>
    %c0_69 = arith.constant 0 : index
    %c0_70 = arith.constant 0 : index
    %c0_71 = arith.constant 0 : index
    %183 = vector.load %arg16[%c0_69, %c0_70, %c0_71] : memref<1x16x128xf32, #tpu.memory_space<vmem>>, vector<1x16x128xf32>
    %184 = vector.shape_cast %183 : vector<1x16x128xf32> to vector<16x128xf32>
    %185 = vector.shape_cast %182 : vector<16x128xf32> to vector<1x16x128xf32>
    tpu.vector_store %arg16[%c0_69, %c0_70, %c0_71], %185 {strides = array<i32>} : memref<1x16x128xf32, #tpu.memory_space<vmem>>, vector<1x16x128xf32>,
    return
  }
  func.func @transform_0(%arg0: i32, %arg1: i32) -> (i32, i32, i32) {
    %c0_i32 = arith.constant 0 : i32
    %c0_i32_0 = arith.constant 0 : i32
    %c0_i32_1 = arith.constant 0 : i32
    return %arg0, %c0_i32, %c0_i32_0 : i32, i32, i32
  }
  func.func @transform_1(%arg0: i32, %arg1: i32) -> (i32, i32, i32) {
    %c0_i32 = arith.constant 0 : i32
    %c0_i32_0 = arith.constant 0 : i32
    %c0_i32_1 = arith.constant 0 : i32
    return %arg0, %c0_i32, %c0_i32_0 : i32, i32, i32
  }
  func.func @transform_2(%arg0: i32, %arg1: i32) -> (i32, i32, i32) {
    %c0_i32 = arith.constant 0 : i32
    %c0_i32_0 = arith.constant 0 : i32
    %c0_i32_1 = arith.constant 0 : i32
    return %arg1, %c0_i32, %c0_i32_0 : i32, i32, i32
  }
  func.func @transform_3(%arg0: i32, %arg1: i32) -> (i32, i32, i32) {
    %c0_i32 = arith.constant 0 : i32
    %c0_i32_0 = arith.constant 0 : i32
    %c0_i32_1 = arith.constant 0 : i32
    return %arg1, %c0_i32, %c0_i32_0 : i32, i32, i32
  }
  func.func @transform_4(%arg0: i32, %arg1: i32) -> (i32, i32, i32) {
    %c0_i32 = arith.constant 0 : i32
    %c0_i32_0 = arith.constant 0 : i32
    %c0_i32_1 = arith.constant 0 : i32
    return %arg1, %c0_i32, %c0_i32_0 : i32, i32, i32
  }
  func.func @transform_5(%arg0: i32, %arg1: i32) -> (i32, i32, i32, i32) {
    %c0_i32 = arith.constant 0 : i32
    %c0_i32_0 = arith.constant 0 : i32
    %c0_i32_1 = arith.constant 0 : i32
    %c0_i32_2 = arith.constant 0 : i32
    return %arg1, %c0_i32, %c0_i32_0, %c0_i32_1 : i32, i32, i32, i32
  }
  func.func @transform_6(%arg0: i32, %arg1: i32) -> (i32, i32, i32) {
    %c0_i32 = arith.constant 0 : i32
    %c0_i32_0 = arith.constant 0 : i32
    %c0_i32_1 = arith.constant 0 : i32
    return %arg1, %c0_i32, %c0_i32_0 : i32, i32, i32
  }
  func.func @transform_7(%arg0: i32, %arg1: i32) -> (i32, i32, i32) {
    %c0_i32 = arith.constant 0 : i32
    %c0_i32_0 = arith.constant 0 : i32
    %c0_i32_1 = arith.constant 0 : i32
    return %arg1, %c0_i32, %c0_i32_0 : i32, i32, i32
  }
  func.func @transform_8(%arg0: i32, %arg1: i32) -> (i32, i32, i32) {
    %c0_i32 = arith.constant 0 : i32
    %c0_i32_0 = arith.constant 0 : i32
    %c0_i32_1 = arith.constant 0 : i32
    return %arg1, %c0_i32, %c0_i32_0 : i32, i32, i32
  }
  func.func @transform_9(%arg0: i32, %arg1: i32) -> (i32, i32, i32) {
    %c0_i32 = arith.constant 0 : i32
    %c0_i32_0 = arith.constant 0 : i32
    %c0_i32_1 = arith.constant 0 : i32
    return %arg1, %c0_i32, %c0_i32_0 : i32, i32, i32
  }
  func.func @transform_10(%arg0: i32, %arg1: i32) -> (i32, i32, i32) {
    %c0_i32 = arith.constant 0 : i32
    %c0_i32_0 = arith.constant 0 : i32
    %c0_i32_1 = arith.constant 0 : i32
    return %arg1, %c0_i32, %c0_i32_0 : i32, i32, i32
  }
  func.func @transform_11(%arg0: i32, %arg1: i32) -> (i32, i32, i32) {
    %c0_i32 = arith.constant 0 : i32
    %c0_i32_0 = arith.constant 0 : i32
    %c0_i32_1 = arith.constant 0 : i32
    return %arg1, %c0_i32, %c0_i32_0 : i32, i32, i32
  }
  func.func @transform_12(%arg0: i32, %arg1: i32) -> (i32, i32, i32) {
    %c0_i32 = arith.constant 0 : i32
    %c0_i32_0 = arith.constant 0 : i32
    %c0_i32_1 = arith.constant 0 : i32
    return %arg1, %c0_i32, %c0_i32_0 : i32, i32, i32
  }
  func.func @transform_13(%arg0: i32, %arg1: i32) -> (i32, i32, i32) {
    %c0_i32 = arith.constant 0 : i32
    %c0_i32_0 = arith.constant 0 : i32
    %c0_i32_1 = arith.constant 0 : i32
    return %arg1, %c0_i32, %c0_i32_0 : i32, i32, i32
  }
  func.func @transform_14(%arg0: i32, %arg1: i32) -> (i32, i32, i32) {
    %c0_i32 = arith.constant 0 : i32
    %c0_i32_0 = arith.constant 0 : i32
    %c0_i32_1 = arith.constant 0 : i32
    return %arg0, %c0_i32, %c0_i32_0 : i32, i32, i32
  }
}

</mosaic_0001>

<llo_original>
// kernel: tpu_custom_call.1
$region0: #{tpu_custom_call.1}
  #allocation0 [shape = 'u32[]', space=smem, size = 0x4, offset = 0x4, fixed_abs, tag = 'smem constant byte address 0x4 - core index']
  #allocation1 [shape = 'u32[144,128]{1,0:T(1,128)}', space=vmem, size = 0x12000, scoped, tag = 'internal scratch']
  %s0 = inlined_call_operand.vmem [shape: f32[2,16,128], index: 0, kind: input, shape index: {}]
  %s1 = inlined_call_operand.vmem [shape: f32[2,16,1], index: 1, kind: input, shape index: {}]
  %s2 = inlined_call_operand.hbm [shape: bf16[2,128,128], index: 2, kind: input, shape index: {}]
  %s3 = inlined_call_operand.hbm [shape: bf16[2,128,128], index: 3, kind: input, shape index: {}]
  %s4 = inlined_call_operand.hbm [shape: bf16[2,128,128], index: 4, kind: input, shape index: {}]
  %s5 = inlined_call_operand.hbm [shape: bf16[2,4,32,128], index: 5, kind: input, shape index: {}]
  %s6 = inlined_call_operand.vmem [shape: f32[2,1,128], index: 6, kind: input, shape index: {}]
  %s7 = inlined_call_operand.vmem [shape: f32[2,1,128], index: 7, kind: input, shape index: {}]
  %s8 = inlined_call_operand.hbm [shape: bf16[2,128,256], index: 8, kind: input, shape index: {}]
  %s9 = inlined_call_operand.vmem [shape: f32[2,1,256], index: 9, kind: input, shape index: {}]
  %s10 = inlined_call_operand.hbm [shape: bf16[2,256,128], index: 10, kind: input, shape index: {}]
  %s11 = inlined_call_operand.vmem [shape: f32[2,1,128], index: 11, kind: input, shape index: {}]
  %s12 = inlined_call_operand.vmem [shape: f32[2,1,128], index: 12, kind: input, shape index: {}]
  %s13 = inlined_call_operand.vmem [shape: f32[2,1,128], index: 13, kind: input, shape index: {}]
  %s14 = inlined_call_operand.hbm [shape: f32[2,16,128], index: 14, kind: output, shape index: {}]
  %s15 = sld [smem:[#allocation0]]
  $region117: #{tpu_custom_call.1} parent=0
    _
  %s17 = ssub.s32 1, %s15
  %s18 = scalar_select 0, %s17, %s15
  $region1: #{tpu_custom_call.1} parent=0
    #allocation2 [shape = 'u8[65536]{0}', space=vmem, size = 0x10000, scoped, tag = 'input window, operand 2']
    #allocation3 [shape = 's32[2]{0}', space=sflag, size = 0x8, scoped, tag = 'scoped memory for tpu_custom_call.1']
    #allocation4 [shape = 's32[2]{0}', space=sflag, size = 0x8, scoped, tag = 'scoped memory for tpu_custom_call.1']
    #allocation5 [shape = 'u8[65536]{0}', space=vmem, size = 0x10000, scoped, tag = 'input window, operand 3']
    #allocation6 [shape = 's32[2]{0}', space=sflag, size = 0x8, scoped, tag = 'scoped memory for tpu_custom_call.1']
    #allocation7 [shape = 'u8[65536]{0}', space=vmem, size = 0x10000, scoped, tag = 'input window, operand 4']
    #allocation8 [shape = 'u8[65536]{0}', space=vmem, size = 0x10000, scoped, tag = 'input window, operand 5']
    #allocation9 [shape = 's32[2]{0}', space=sflag, size = 0x8, scoped, tag = 'scoped memory for tpu_custom_call.1']
    #allocation10 [shape = 'u8[131072]{0}', space=vmem, size = 0x20000, scoped, tag = 'input window, operand 8']
    #allocation11 [shape = 'u8[131072]{0}', space=vmem, size = 0x20000, scoped, tag = 'input window, operand 10']
    #allocation12 [shape = 's32[2]{0}', space=sflag, size = 0x8, scoped, tag = 'scoped memory for tpu_custom_call.1']
    #allocation13 [shape = 'u8[16384]{0}', space=vmem, size = 0x4000, scoped, tag = 'output window, operand 0']
    %19 = vsyncpa [#allocation3], 0
    %s20 = scalar_lea.sflag [#allocation3], 1
    %21 = vsyncpa %s20, 0
    %22 = vsyncpa [#allocation6], 0
    %s23 = scalar_lea.sflag [#allocation6], 1
    %24 = vsyncpa %s23, 0
    %25 = vsyncpa [#allocation9], 0
    %s26 = scalar_lea.sflag [#allocation9], 1
    %27 = vsyncpa %s26, 0
    %28 = vsyncpa [#allocation12], 0
    %s29 = scalar_lea.sflag [#allocation12], 1
    %30 = vsyncpa %s29, 0
    %31 = vsyncpa [#allocation4], 0
    %s32 = scalar_lea.sflag [#allocation4], 1
    %33 = vsyncpa %s32, 0
    loop: start=0, step=1, limit=6
    $region2: #{tpu_custom_call.1} parent=1 // loop_pre_header
      _
    $region3: #{tpu_custom_call.1} parent=1 // loop_header
      %s35 = sphi 0, %s39
      %p36 = scmp.ge.s32.totalorder %s35, 6
      %s42 = sphi 0, %s54
      %s43 = sphi 0, %s50
      %s44 = sphi 0, %s42
      %s45 = sphi 0, %s43
      %s46 = sphi 0, %s44
      %s47 = sphi 0, %s45
      %s57 = sphi 0, %s59
      %s60 = sphi 0, %s57
      %s61 = sphi 0, %s60
      %s77 = sphi 0, %s61
      %s83 = sphi 0, %s85
      %s86 = sphi 0, %s83
      %s87 = sphi 0, %s86
      %s103 = sphi 0, %s87
      %s109 = sphi 0, %s111
      %s112 = sphi 0, %s109
      %s113 = sphi 0, %s112
      %s129 = sphi 0, %s113
      %s135 = sphi 0, %s137
      %s138 = sphi 0, %s135
      %s139 = sphi 0, %s138
      %s155 = sphi 0, %s139
      %s161 = sphi 0, %s163
      %s164 = sphi 0, %s161
      %s165 = sphi 0, %s164
      %s181 = sphi 0, %s165
      %s187 = sphi 0, %s189
      %s190 = sphi 0, %s187
      %s191 = sphi 0, %s190
      %s207 = sphi 0, %s191
      %s213 = sphi 0, %s215
      %s216 = sphi 0, %s213
      %s217 = sphi 0, %s216
      %s233 = sphi 0, %s217
      %s239 = sphi 0, %s241
      %s242 = sphi 0, %s239
      %s243 = sphi 0, %s242
      %s259 = sphi 0, %s243
      %s265 = sphi 0, %s267
      %s268 = sphi 0, %s265
      %s269 = sphi 0, %s268
      %s285 = sphi 0, %s269
      %s291 = sphi 0, %s293
      %s294 = sphi 0, %s291
      %s295 = sphi 0, %s294
      %s311 = sphi 0, %s295
      %s317 = sphi 0, %s319
      %s320 = sphi 0, %s317
      %s321 = sphi 0, %s320
      %s337 = sphi 0, %s321
      %s343 = sphi 0, %s345
      %s346 = sphi 0, %s343
      %s347 = sphi 0, %s346
      %s363 = sphi 0, %s347
      %s369 = sphi 0, %s371
      %s372 = sphi 0, %s369
      %s373 = sphi 0, %s372
      %s389 = sphi 0, %s373
      %s395 = sphi 0, %s397
      %s398 = sphi 0, %s395
      %s399 = sphi 0, %s398
      %s415 = sphi 0, %s399
      %s421 = sphi 0, %s423
      %s424 = sphi 0, %s421
      %s425 = sphi 0, %s424
      %s441 = sphi 0, %s425
    $region4: #{tpu_custom_call.1} parent=1 // loop_header_branch
      %38 = sbr.rel (%p36) target = $region8
    $region5: #{tpu_custom_call.1} parent=1 // loop_body
      %s40 = ssub.s32 %s35, 1
      %s41 = ssub.s32 %s35, 2
      %s48 = sadd.s32 1, %s43
      %p49 = scmp.ge.s32.totalorder %s48, 2
      %s50 = scalar_select %p49, 0, %s48
      %s51 = sadd.s32 1, %s42
      %s52 = scalar_select %p49, %s51, %s42
      %p53 = scmp.ge.s32.totalorder %s52, 2
      %s54 = scalar_select %p53, 0, %s52
      %s55 = ssub.s32 %s42, %s54
      %p56 = scmp.eq.s32.totalorder %s55, 0
      %s58 = sadd.s32 %s57, 1
      %s59 = scalar_select %p56, %s57, %s58
      %p62 = pneg %p56
      %p63 = scmp.eq.s32.totalorder %s35, 3
      %p64 = por %p62, %p63
      %p65 = scmp.ne.s32.totalorder %s57, %s60
      %p66 = scmp.eq.s32.totalorder %s35, 0
      %p67 = por %p65, %p66
      %p68 = scmp.ne.s32.totalorder %s57, %s60
      %p69 = scmp.eq.s32.totalorder %s40, 3
      %p70 = por %p68, %p69
      %p71 = scmp.ne.s32.totalorder %s60, %s61
      %p72 = scmp.eq.s32.totalorder %s40, 0
      %p73 = por %p71, %p72
      %p74 = scmp.ne.s32.totalorder %s60, %s61
      %p75 = scmp.eq.s32.totalorder %s41, 3
      %p76 = por %p74, %p75
      %p78 = scmp.ne.s32.totalorder %s61, %s77
      %p79 = scmp.eq.s32.totalorder %s41, 0
      %p80 = por %p78, %p79
      %s81 = ssub.s32 %s42, %s54
      %p82 = scmp.eq.s32.totalorder %s81, 0
      %s84 = sadd.s32 %s83, 1
      %s85 = scalar_select %p82, %s83, %s84
      %p88 = pneg %p82
      %p89 = scmp.eq.s32.totalorder %s35, 3
      %p90 = por %p88, %p89
      %p91 = scmp.ne.s32.totalorder %s83, %s86
      %p92 = scmp.eq.s32.totalorder %s35, 0
      %p93 = por %p91, %p92
      %p94 = scmp.ne.s32.totalorder %s83, %s86
      %p95 = scmp.eq.s32.totalorder %s40, 3
      %p96 = por %p94, %p95
      %p97 = scmp.ne.s32.totalorder %s86, %s87
      %p98 = scmp.eq.s32.totalorder %s40, 0
      %p99 = por %p97, %p98
      %p100 = scmp.ne.s32.totalorder %s86, %s87
      %p101 = scmp.eq.s32.totalorder %s41, 3
      %p102 = por %p100, %p101
      %p104 = scmp.ne.s32.totalorder %s87, %s103
      %p105 = scmp.eq.s32.totalorder %s41, 0
      %p106 = por %p104, %p105
      %s107 = ssub.s32 %s43, %s50
      %p108 = scmp.eq.s32.totalorder %s107, 0
      %s110 = sadd.s32 %s109, 1
      %s111 = scalar_select %p108, %s109, %s110
      %p114 = pneg %p108
      %p115 = scmp.eq.s32.totalorder %s35, 3
      %p116 = por %p114, %p115
      %p117 = scmp.ne.s32.totalorder %s109, %s112
      %p118 = scmp.eq.s32.totalorder %s35, 0
      %p119 = por %p117, %p118
      %p120 = scmp.ne.s32.totalorder %s109, %s112
      %p121 = scmp.eq.s32.totalorder %s40, 3
      %p122 = por %p120, %p121
      %p123 = scmp.ne.s32.totalorder %s112, %s113
      %p124 = scmp.eq.s32.totalorder %s40, 0
      %p125 = por %p123, %p124
      %p126 = scmp.ne.s32.totalorder %s112, %s113
      %p127 = scmp.eq.s32.totalorder %s41, 3
      %p128 = por %p126, %p127
      %p130 = scmp.ne.s32.totalorder %s113, %s129
      %p131 = scmp.eq.s32.totalorder %s41, 0
      %p132 = por %p130, %p131
      %s133 = ssub.s32 %s43, %s50
      %p134 = scmp.eq.s32.totalorder %s133, 0
      %s136 = sadd.s32 %s135, 1
      %s137 = scalar_select %p134, %s135, %s136
      %p140 = pneg %p134
      %p141 = scmp.eq.s32.totalorder %s35, 3
      %p142 = por %p140, %p141
      %p143 = scmp.ne.s32.totalorder %s135, %s138
      %p144 = scmp.eq.s32.totalorder %s35, 0
      %p145 = por %p143, %p144
      %p146 = scmp.ne.s32.totalorder %s135, %s138
      %p147 = scmp.eq.s32.totalorder %s40, 3
      %p148 = por %p146, %p147
      %p149 = scmp.ne.s32.totalorder %s138, %s139
      %p150 = scmp.eq.s32.totalorder %s40, 0
      %p151 = por %p149, %p150
      %p152 = scmp.ne.s32.totalorder %s138, %s139
      %p153 = scmp.eq.s32.totalorder %s41, 3
      %p154 = por %p152, %p153
      %p156 = scmp.ne.s32.totalorder %s139, %s155
      %p157 = scmp.eq.s32.totalorder %s41, 0
      %p158 = por %p156, %p157
      %s159 = ssub.s32 %s43, %s50
      %p160 = scmp.eq.s32.totalorder %s159, 0
      %s162 = sadd.s32 %s161, 1
      %s163 = scalar_select %p160, %s161, %s162
      %p166 = pneg %p160
      %p167 = scmp.eq.s32.totalorder %s35, 3
      %p168 = por %p166, %p167
      %p169 = scmp.ne.s32.totalorder %s161, %s164
      %p170 = scmp.eq.s32.totalorder %s35, 0
      %p171 = por %p169, %p170
      %p172 = scmp.ne.s32.totalorder %s161, %s164
      %p173 = scmp.eq.s32.totalorder %s40, 3
      %p174 = por %p172, %p173
      %p175 = scmp.ne.s32.totalorder %s164, %s165
      %p176 = scmp.eq.s32.totalorder %s40, 0
      %p177 = por %p175, %p176
      %p178 = scmp.ne.s32.totalorder %s164, %s165
      %p179 = scmp.eq.s32.totalorder %s41, 3
      %p180 = por %p178, %p179
      %p182 = scmp.ne.s32.totalorder %s165, %s181
      %p183 = scmp.eq.s32.totalorder %s41, 0
      %p184 = por %p182, %p183
      %s185 = ssub.s32 %s43, %s50
      %p186 = scmp.eq.s32.totalorder %s185, 0
      %s188 = sadd.s32 %s187, 1
      %s189 = scalar_select %p186, %s187, %s188
      %p192 = pneg %p186
      %p193 = scmp.eq.s32.totalorder %s35, 3
      %p194 = por %p192, %p193
      %p195 = scmp.ne.s32.totalorder %s187, %s190
      %p196 = scmp.eq.s32.totalorder %s35, 0
      %p197 = por %p195, %p196
      %p198 = scmp.ne.s32.totalorder %s187, %s190
      %p199 = scmp.eq.s32.totalorder %s40, 3
      %p200 = por %p198, %p199
      %p201 = scmp.ne.s32.totalorder %s190, %s191
      %p202 = scmp.eq.s32.totalorder %s40, 0
      %p203 = por %p201, %p202
      %p204 = scmp.ne.s32.totalorder %s190, %s191
      %p205 = scmp.eq.s32.totalorder %s41, 3
      %p206 = por %p204, %p205
      %p208 = scmp.ne.s32.totalorder %s191, %s207
      %p209 = scmp.eq.s32.totalorder %s41, 0
      %p210 = por %p208, %p209
      %s211 = ssub.s32 %s43, %s50
      %p212 = scmp.eq.s32.totalorder %s211, 0
      %s214 = sadd.s32 %s213, 1
      %s215 = scalar_select %p212, %s213, %s214
      %p218 = pneg %p212
      %p219 = scmp.eq.s32.totalorder %s35, 3
      %p220 = por %p218, %p219
      %p221 = scmp.ne.s32.totalorder %s213, %s216
      %p222 = scmp.eq.s32.totalorder %s35, 0
      %p223 = por %p221, %p222
      %p224 = scmp.ne.s32.totalorder %s213, %s216
      %p225 = scmp.eq.s32.totalorder %s40, 3
      %p226 = por %p224, %p225
      %p227 = scmp.ne.s32.totalorder %s216, %s217
      %p228 = scmp.eq.s32.totalorder %s40, 0
      %p229 = por %p227, %p228
      %p230 = scmp.ne.s32.totalorder %s216, %s217
      %p231 = scmp.eq.s32.totalorder %s41, 3
      %p232 = por %p230, %p231
      %p234 = scmp.ne.s32.totalorder %s217, %s233
      %p235 = scmp.eq.s32.totalorder %s41, 0
      %p236 = por %p234, %p235
      %s237 = ssub.s32 %s43, %s50
      %p238 = scmp.eq.s32.totalorder %s237, 0
      %s240 = sadd.s32 %s239, 1
      %s241 = scalar_select %p238, %s239, %s240
      %p244 = pneg %p238
      %p245 = scmp.eq.s32.totalorder %s35, 3
      %p246 = por %p244, %p245
      %p247 = scmp.ne.s32.totalorder %s239, %s242
      %p248 = scmp.eq.s32.totalorder %s35, 0
      %p249 = por %p247, %p248
      %p250 = scmp.ne.s32.totalorder %s239, %s242
      %p251 = scmp.eq.s32.totalorder %s40, 3
      %p252 = por %p250, %p251
      %p253 = scmp.ne.s32.totalorder %s242, %s243
      %p254 = scmp.eq.s32.totalorder %s40, 0
      %p255 = por %p253, %p254
      %p256 = scmp.ne.s32.totalorder %s242, %s243
      %p257 = scmp.eq.s32.totalorder %s41, 3
      %p258 = por %p256, %p257
      %p260 = scmp.ne.s32.totalorder %s243, %s259
      %p261 = scmp.eq.s32.totalorder %s41, 0
      %p262 = por %p260, %p261
      %s263 = ssub.s32 %s43, %s50
      %p264 = scmp.eq.s32.totalorder %s263, 0
      %s266 = sadd.s32 %s265, 1
      %s267 = scalar_select %p264, %s265, %s266
      %p270 = pneg %p264
      %p271 = scmp.eq.s32.totalorder %s35, 3
      %p272 = por %p270, %p271
      %p273 = scmp.ne.s32.totalorder %s265, %s268
      %p274 = scmp.eq.s32.totalorder %s35, 0
      %p275 = por %p273, %p274
      %p276 = scmp.ne.s32.totalorder %s265, %s268
      %p277 = scmp.eq.s32.totalorder %s40, 3
      %p278 = por %p276, %p277
      %p279 = scmp.ne.s32.totalorder %s268, %s269
      %p280 = scmp.eq.s32.totalorder %s40, 0
      %p281 = por %p279, %p280
      %p282 = scmp.ne.s32.totalorder %s268, %s269
      %p283 = scmp.eq.s32.totalorder %s41, 3
      %p284 = por %p282, %p283
      %p286 = scmp.ne.s32.totalorder %s269, %s285
      %p287 = scmp.eq.s32.totalorder %s41, 0
      %p288 = por %p286, %p287
      %s289 = ssub.s32 %s43, %s50
      %p290 = scmp.eq.s32.totalorder %s289, 0
      %s292 = sadd.s32 %s291, 1
      %s293 = scalar_select %p290, %s291, %s292
      %p296 = pneg %p290
      %p297 = scmp.eq.s32.totalorder %s35, 3
      %p298 = por %p296, %p297
      %p299 = scmp.ne.s32.totalorder %s291, %s294
      %p300 = scmp.eq.s32.totalorder %s35, 0
      %p301 = por %p299, %p300
      %p302 = scmp.ne.s32.totalorder %s291, %s294
      %p303 = scmp.eq.s32.totalorder %s40, 3
      %p304 = por %p302, %p303
      %p305 = scmp.ne.s32.totalorder %s294, %s295
      %p306 = scmp.eq.s32.totalorder %s40, 0
      %p307 = por %p305, %p306
      %p308 = scmp.ne.s32.totalorder %s294, %s295
      %p309 = scmp.eq.s32.totalorder %s41, 3
      %p310 = por %p308, %p309
      %p312 = scmp.ne.s32.totalorder %s295, %s311
      %p313 = scmp.eq.s32.totalorder %s41, 0
      %p314 = por %p312, %p313
      %s315 = ssub.s32 %s43, %s50
      %p316 = scmp.eq.s32.totalorder %s315, 0
      %s318 = sadd.s32 %s317, 1
      %s319 = scalar_select %p316, %s317, %s318
      %p322 = pneg %p316
      %p323 = scmp.eq.s32.totalorder %s35, 3
      %p324 = por %p322, %p323
      %p325 = scmp.ne.s32.totalorder %s317, %s320
      %p326 = scmp.eq.s32.totalorder %s35, 0
      %p327 = por %p325, %p326
      %p328 = scmp.ne.s32.totalorder %s317, %s320
      %p329 = scmp.eq.s32.totalorder %s40, 3
      %p330 = por %p328, %p329
      %p331 = scmp.ne.s32.totalorder %s320, %s321
      %p332 = scmp.eq.s32.totalorder %s40, 0
      %p333 = por %p331, %p332
      %p334 = scmp.ne.s32.totalorder %s320, %s321
      %p335 = scmp.eq.s32.totalorder %s41, 3
      %p336 = por %p334, %p335
      %p338 = scmp.ne.s32.totalorder %s321, %s337
      %p339 = scmp.eq.s32.totalorder %s41, 0
      %p340 = por %p338, %p339
      %s341 = ssub.s32 %s43, %s50
      %p342 = scmp.eq.s32.totalorder %s341, 0
      %s344 = sadd.s32 %s343, 1
      %s345 = scalar_select %p342, %s343, %s344
      %p348 = pneg %p342
      %p349 = scmp.eq.s32.totalorder %s35, 3
      %p350 = por %p348, %p349
      %p351 = scmp.ne.s32.totalorder %s343, %s346
      %p352 = scmp.eq.s32.totalorder %s35, 0
      %p353 = por %p351, %p352
      %p354 = scmp.ne.s32.totalorder %s343, %s346
      %p355 = scmp.eq.s32.totalorder %s40, 3
      %p356 = por %p354, %p355
      %p357 = scmp.ne.s32.totalorder %s346, %s347
      %p358 = scmp.eq.s32.totalorder %s40, 0
      %p359 = por %p357, %p358
      %p360 = scmp.ne.s32.totalorder %s346, %s347
      %p361 = scmp.eq.s32.totalorder %s41, 3
      %p362 = por %p360, %p361
      %p364 = scmp.ne.s32.totalorder %s347, %s363
      %p365 = scmp.eq.s32.totalorder %s41, 0
      %p366 = por %p364, %p365
      %s367 = ssub.s32 %s43, %s50
      %p368 = scmp.eq.s32.totalorder %s367, 0
      %s370 = sadd.s32 %s369, 1
      %s371 = scalar_select %p368, %s369, %s370
      %p374 = pneg %p368
      %p375 = scmp.eq.s32.totalorder %s35, 3
      %p376 = por %p374, %p375
      %p377 = scmp.ne.s32.totalorder %s369, %s372
      %p378 = scmp.eq.s32.totalorder %s35, 0
      %p379 = por %p377, %p378
      %p380 = scmp.ne.s32.totalorder %s369, %s372
      %p381 = scmp.eq.s32.totalorder %s40, 3
      %p382 = por %p380, %p381
      %p383 = scmp.ne.s32.totalorder %s372, %s373
      %p384 = scmp.eq.s32.totalorder %s40, 0
      %p385 = por %p383, %p384
      %p386 = scmp.ne.s32.totalorder %s372, %s373
      %p387 = scmp.eq.s32.totalorder %s41, 3
      %p388 = por %p386, %p387
      %p390 = scmp.ne.s32.totalorder %s373, %s389
      %p391 = scmp.eq.s32.totalorder %s41, 0
      %p392 = por %p390, %p391
      %s393 = ssub.s32 %s43, %s50
      %p394 = scmp.eq.s32.totalorder %s393, 0
      %s396 = sadd.s32 %s395, 1
      %s397 = scalar_select %p394, %s395, %s396
      %p400 = pneg %p394
      %p401 = scmp.eq.s32.totalorder %s35, 3
      %p402 = por %p400, %p401
      %p403 = scmp.ne.s32.totalorder %s395, %s398
      %p404 = scmp.eq.s32.totalorder %s35, 0
      %p405 = por %p403, %p404
      %p406 = scmp.ne.s32.totalorder %s395, %s398
      %p407 = scmp.eq.s32.totalorder %s40, 3
      %p408 = por %p406, %p407
      %p409 = scmp.ne.s32.totalorder %s398, %s399
      %p410 = scmp.eq.s32.totalorder %s40, 0
      %p411 = por %p409, %p410
      %p412 = scmp.ne.s32.totalorder %s398, %s399
      %p413 = scmp.eq.s32.totalorder %s41, 3
      %p414 = por %p412, %p413
      %p416 = scmp.ne.s32.totalorder %s399, %s415
      %p417 = scmp.eq.s32.totalorder %s41, 0
      %p418 = por %p416, %p417
      %s419 = ssub.s32 %s42, %s54
      %p420 = scmp.eq.s32.totalorder %s419, 0
      %s422 = sadd.s32 %s421, 1
      %s423 = scalar_select %p420, %s421, %s422
      %p426 = pneg %p420
      %p427 = scmp.eq.s32.totalorder %s35, 3
      %p428 = por %p426, %p427
      %p429 = scmp.ne.s32.totalorder %s421, %s424
      %p430 = scmp.eq.s32.totalorder %s35, 0
      %p431 = por %p429, %p430
      %p432 = scmp.ne.s32.totalorder %s421, %s424
      %p433 = scmp.eq.s32.totalorder %s40, 3
      %p434 = por %p432, %p433
      %p435 = scmp.ne.s32.totalorder %s424, %s425
      %p436 = scmp.eq.s32.totalorder %s40, 0
      %p437 = por %p435, %p436
      %p438 = scmp.ne.s32.totalorder %s424, %s425
      %p439 = scmp.eq.s32.totalorder %s41, 3
      %p440 = por %p438, %p439
      %p442 = scmp.ne.s32.totalorder %s425, %s441
      %p443 = scmp.eq.s32.totalorder %s41, 0
      %p444 = por %p442, %p443
      %p445 = scmp.le.s32.totalorder 1, %s35
      %p446 = scmp.lt.s32.totalorder %s35, 5
      %p447 = pnand %p445, %p446
      %p448 = pneg %p447
      // Predicated region
      $region9: #{tpu_custom_call.1} parent=5 // pred_check
        _
      $region10: #{tpu_custom_call.1} parent=5 // pred_check_branch
        %450 = sbr.rel (%p447) target = $region12
      $region11: #{tpu_custom_call.1} parent=5 // pred_region
        %s451 = ssub.s32 %s35, 1
      $region12: #{tpu_custom_call.1} parent=5 // pred_fallthru
        _
      %p452 = scmp.lt.s32.totalorder %s35, 4
      // Predicated region
      $region13: #{tpu_custom_call.1} parent=5 // pred_check
        %p453 = pneg %p452
      $region14: #{tpu_custom_call.1} parent=5 // pred_check_branch
        %455 = sbr.rel (%p453) target = $region16
      $region15: #{tpu_custom_call.1} parent=5 // pred_region
        // Predicated region
        $region17: #{tpu_custom_call.1} parent=15 // pred_check
          %p456 = pneg %p67
        $region18: #{tpu_custom_call.1} parent=15 // pred_check_branch
          %458 = sbr.rel (%p456) target = $region20
        $region19: #{tpu_custom_call.1} parent=15 // pred_region
          %p459 = scmp.lt.s32.totalorder %s42, 1
          %s460 = scalar_select %p459, %s42, 1
          %s461 = smul.addr %s460, 2
          %s462 = smul.addr %s461, 8
          %s463 = scalar_lea.vmem %s0, %s462
        $region20: #{tpu_custom_call.1} parent=15 // pred_fallthru
          _
        // Predicated region
        $region21: #{tpu_custom_call.1} parent=15 // pred_check
          %p464 = pneg %p93
        $region22: #{tpu_custom_call.1} parent=15 // pred_check_branch
          %466 = sbr.rel (%p464) target = $region24
        $region23: #{tpu_custom_call.1} parent=15 // pred_region
          %p467 = scmp.lt.s32.totalorder %s42, 1
          %s468 = scalar_select %p467, %s42, 1
          %s469 = smul.addr %s468, 2
          %s470 = smul.addr %s469, 8
          %s471 = scalar_lea.vmem %s1, %s470
        $region24: #{tpu_custom_call.1} parent=15 // pred_fallthru
          _
        // Predicated region
        $region25: #{tpu_custom_call.1} parent=15 // pred_check
          %p472 = pneg %p119
        $region26: #{tpu_custom_call.1} parent=15 // pred_check_branch
          %474 = sbr.rel (%p472) target = $region28
        $region27: #{tpu_custom_call.1} parent=15 // pred_region
          %s475 = sand.u32 %s109, 1
          %s476 = scalar_lea.sflag [#allocation3], %s475
          %s477 = sand.u32 %s109, 1
          %s478 = smul.addr %s477, 64
          %s479 = scalar_lea.vmem [#allocation2], %s478
          %s481 = ssub.s32 1024, 1024
          %482 = vsyncadd %s476, %s481
          %s483 = smul.addr %s43, 16
          %s484 = smul.addr %s483, 64
          %s485 = scalar_lea.hbm %s2, %s484
          %s486 = sshll.u32 %s479, 4
          %s487 = int_to_ptr.vmem [resolvable:$true] %s486
          %492 = dma.hbm_to_vmem [thread:$0]  %s485, 1024, %s487, %s476, 64, 64, 4
        $region28: #{tpu_custom_call.1} parent=15 // pred_fallthru
          _
        // Predicated region
        $region29: #{tpu_custom_call.1} parent=15 // pred_check
          %p493 = pneg %p145
        $region30: #{tpu_custom_call.1} parent=15 // pred_check_branch
          %495 = sbr.rel (%p493) target = $region32
        $region31: #{tpu_custom_call.1} parent=15 // pred_region
          %s496 = sand.u32 %s35, 1
          %s497 = scalar_lea.sflag [#allocation6], %s496
          %s498 = sand.u32 %s135, 1
          %s499 = smul.addr %s498, 64
          %s500 = scalar_lea.vmem [#allocation5], %s499
          %s502 = ssub.s32 1024, 1024
          %503 = vsyncadd %s497, %s502
          %s504 = smul.addr %s43, 16
          %s505 = smul.addr %s504, 64
          %s506 = scalar_lea.hbm %s3, %s505
          %s507 = sshll.u32 %s500, 4
          %s508 = int_to_ptr.vmem [resolvable:$true] %s507
          %513 = dma.hbm_to_vmem [thread:$0]  %s506, 1024, %s508, %s497, 64, 64, 4
        $region32: #{tpu_custom_call.1} parent=15 // pred_fallthru
          _
        // Predicated region
        $region33: #{tpu_custom_call.1} parent=15 // pred_check
          %p514 = pneg %p171
        $region34: #{tpu_custom_call.1} parent=15 // pred_check_branch
          %516 = sbr.rel (%p514) target = $region36
        $region35: #{tpu_custom_call.1} parent=15 // pred_region
          %s517 = sand.u32 %s35, 1
          %s518 = scalar_lea.sflag [#allocation6], %s517
          %s519 = sand.u32 %s161, 1
          %s520 = smul.addr %s519, 64
          %s521 = scalar_lea.vmem [#allocation7], %s520
          %s523 = ssub.s32 1024, 1024
          %524 = vsyncadd %s518, %s523
          %s525 = smul.addr %s43, 16
          %s526 = smul.addr %s525, 64
          %s527 = scalar_lea.hbm %s4, %s526
          %s528 = sshll.u32 %s521, 4
          %s529 = int_to_ptr.vmem [resolvable:$true] %s528
          %534 = dma.hbm_to_vmem [thread:$0]  %s527, 1024, %s529, %s518, 64, 64, 4
        $region36: #{tpu_custom_call.1} parent=15 // pred_fallthru
          _
        // Predicated region
        $region37: #{tpu_custom_call.1} parent=15 // pred_check
          %p535 = pneg %p197
        $region38: #{tpu_custom_call.1} parent=15 // pred_check_branch
          %537 = sbr.rel (%p535) target = $region40
        $region39: #{tpu_custom_call.1} parent=15 // pred_region
          %s538 = sand.u32 %s35, 1
          %s539 = scalar_lea.sflag [#allocation9], %s538
          %s540 = sand.u32 %s187, 1
          %s541 = smul.addr %s540, 64
          %s542 = scalar_lea.vmem [#allocation8], %s541
          %s544 = ssub.s32 1024, 1024
          %545 = vsyncadd %s539, %s544
          %s546 = smul.addr %s43, 16
          %s547 = smul.addr %s546, 64
          %s548 = scalar_lea.hbm %s5, %s547
          %s549 = sshll.u32 %s542, 4
          %s550 = int_to_ptr.vmem [resolvable:$true] %s549
          %555 = dma.hbm_to_vmem [thread:$0]  %s548, 1024, %s550, %s539, 64, 64, 4
        $region40: #{tpu_custom_call.1} parent=15 // pred_fallthru
          _
        // Predicated region
        $region41: #{tpu_custom_call.1} parent=15 // pred_check
          %p556 = pneg %p223
        $region42: #{tpu_custom_call.1} parent=15 // pred_check_branch
          %558 = sbr.rel (%p556) target = $region44
        $region43: #{tpu_custom_call.1} parent=15 // pred_region
          %p559 = scmp.lt.s32.totalorder %s43, 1
          %s560 = scalar_select %p559, %s43, 1
          %s561 = scalar_lea.vmem %s6, %s560
        $region44: #{tpu_custom_call.1} parent=15 // pred_fallthru
          _
        // Predicated region
        $region45: #{tpu_custom_call.1} parent=15 // pred_check
          %p562 = pneg %p249
        $region46: #{tpu_custom_call.1} parent=15 // pred_check_branch
          %564 = sbr.rel (%p562) target = $region48
        $region47: #{tpu_custom_call.1} parent=15 // pred_region
          %p565 = scmp.lt.s32.totalorder %s43, 1
          %s566 = scalar_select %p565, %s43, 1
          %s567 = scalar_lea.vmem %s7, %s566
        $region48: #{tpu_custom_call.1} parent=15 // pred_fallthru
          _
        // Predicated region
        $region49: #{tpu_custom_call.1} parent=15 // pred_check
          %p568 = pneg %p275
        $region50: #{tpu_custom_call.1} parent=15 // pred_check_branch
          %570 = sbr.rel (%p568) target = $region52
        $region51: #{tpu_custom_call.1} parent=15 // pred_region
          %s571 = sand.u32 %s35, 1
          %s572 = scalar_lea.sflag [#allocation9], %s571
          %s573 = sand.u32 %s265, 1
          %s574 = smul.addr %s573, 128
          %s575 = scalar_lea.vmem [#allocation10], %s574
          %s577 = ssub.s32 2048, 2048
          %578 = vsyncadd %s572, %s577
          %s579 = smul.addr %s43, 32
          %s580 = smul.addr %s579, 64
          %s581 = scalar_lea.hbm %s8, %s580
          %s582 = sshll.u32 %s575, 4
          %s583 = int_to_ptr.vmem [resolvable:$true] %s582
          %588 = dma.hbm_to_vmem [thread:$0]  %s581, 2048, %s583, %s572, 128, 128, 8
        $region52: #{tpu_custom_call.1} parent=15 // pred_fallthru
          _
        // Predicated region
        $region53: #{tpu_custom_call.1} parent=15 // pred_check
          %p589 = pneg %p301
        $region54: #{tpu_custom_call.1} parent=15 // pred_check_branch
          %591 = sbr.rel (%p589) target = $region56
        $region55: #{tpu_custom_call.1} parent=15 // pred_region
          %p592 = scmp.lt.s32.totalorder %s43, 1
          %s593 = scalar_select %p592, %s43, 1
          %s594 = smul.addr %s593, 2
          %s595 = scalar_lea.vmem %s9, %s594
        $region56: #{tpu_custom_call.1} parent=15 // pred_fallthru
          _
        // Predicated region
        $region57: #{tpu_custom_call.1} parent=15 // pred_check
          %p596 = pneg %p327
        $region58: #{tpu_custom_call.1} parent=15 // pred_check_branch
          %598 = sbr.rel (%p596) target = $region60
        $region59: #{tpu_custom_call.1} parent=15 // pred_region
          %s599 = sand.u32 %s317, 1
          %s600 = scalar_lea.sflag [#allocation12], %s599
          %s601 = sand.u32 %s317, 1
          %s602 = smul.addr %s601, 128
          %s603 = scalar_lea.vmem [#allocation11], %s602
          %s605 = ssub.s32 2048, 2048
          %606 = vsyncadd %s600, %s605
          %s607 = smul.addr %s43, 32
          %s608 = smul.addr %s607, 64
          %s609 = scalar_lea.hbm %s10, %s608
          %s610 = sshll.u32 %s603, 4
          %s611 = int_to_ptr.vmem [resolvable:$true] %s610
          %616 = dma.hbm_to_vmem [thread:$0]  %s609, 2048, %s611, %s600, 64, 64, 4
        $region60: #{tpu_custom_call.1} parent=15 // pred_fallthru
          _
        // Predicated region
        $region61: #{tpu_custom_call.1} parent=15 // pred_check
          %p617 = pneg %p353
        $region62: #{tpu_custom_call.1} parent=15 // pred_check_branch
          %619 = sbr.rel (%p617) target = $region64
        $region63: #{tpu_custom_call.1} parent=15 // pred_region
          %p620 = scmp.lt.s32.totalorder %s43, 1
          %s621 = scalar_select %p620, %s43, 1
          %s622 = scalar_lea.vmem %s11, %s621
        $region64: #{tpu_custom_call.1} parent=15 // pred_fallthru
          _
        // Predicated region
        $region65: #{tpu_custom_call.1} parent=15 // pred_check
          %p623 = pneg %p379
        $region66: #{tpu_custom_call.1} parent=15 // pred_check_branch
          %625 = sbr.rel (%p623) target = $region68
        $region67: #{tpu_custom_call.1} parent=15 // pred_region
          %p626 = scmp.lt.s32.totalorder %s43, 1
          %s627 = scalar_select %p626, %s43, 1
          %s628 = scalar_lea.vmem %s12, %s627
        $region68: #{tpu_custom_call.1} parent=15 // pred_fallthru
          _
        // Predicated region
        $region69: #{tpu_custom_call.1} parent=15 // pred_check
          %p629 = pneg %p405
        $region70: #{tpu_custom_call.1} parent=15 // pred_check_branch
          %631 = sbr.rel (%p629) target = $region72
        $region71: #{tpu_custom_call.1} parent=15 // pred_region
          %p632 = scmp.lt.s32.totalorder %s43, 1
          %s633 = scalar_select %p632, %s43, 1
          %s634 = scalar_lea.vmem %s13, %s633
        $region72: #{tpu_custom_call.1} parent=15 // pred_fallthru
          _
      $region16: #{tpu_custom_call.1} parent=5 // pred_fallthru
        _
      %p635 = scmp.le.s32.totalorder 1, %s35
      %p636 = scmp.lt.s32.totalorder %s35, 5
      %p637 = pnand %p635, %p636
      %p638 = pneg %p637
      // Predicated region
      $region73: #{tpu_custom_call.1} parent=5 // pred_check
        _
      $region74: #{tpu_custom_call.1} parent=5 // pred_check_branch
        %640 = sbr.rel (%p637) target = $region76
      $region75: #{tpu_custom_call.1} parent=5 // pred_region
        %s641 = ssub.s32 %s35, 1
        %s642 = sand.u32 %s112, 1
        %s643 = scalar_lea.sflag [#allocation3], %s642
        %s644 = sand.u32 %s112, 1
        %s645 = smul.addr %s644, 64
        %s646 = scalar_lea.vmem [#allocation2], %s645
        // Predicated region
        $region77: #{tpu_custom_call.1} parent=75 // pred_check
          %p647 = pneg %p125
        $region78: #{tpu_custom_call.1} parent=75 // pred_check_branch
          %649 = sbr.rel (%p647) target = $region80
        $region79: #{tpu_custom_call.1} parent=75 // pred_region
          %650 = dma.done %s643, 1024
        $region80: #{tpu_custom_call.1} parent=75 // pred_fallthru
          _
        %s651 = sand.u32 %s40, 1
        %s652 = scalar_lea.sflag [#allocation6], %s651
        %s653 = sand.u32 %s138, 1
        %s654 = smul.addr %s653, 64
        %s655 = scalar_lea.vmem [#allocation5], %s654
        // Predicated region
        $region81: #{tpu_custom_call.1} parent=75 // pred_check
          %p656 = pneg %p151
        $region82: #{tpu_custom_call.1} parent=75 // pred_check_branch
          %658 = sbr.rel (%p656) target = $region84
        $region83: #{tpu_custom_call.1} parent=75 // pred_region
          %659 = dma.done %s652, 1024
        $region84: #{tpu_custom_call.1} parent=75 // pred_fallthru
          _
        %s660 = sand.u32 %s40, 1
        %s661 = scalar_lea.sflag [#allocation6], %s660
        %s662 = sand.u32 %s164, 1
        %s663 = smul.addr %s662, 64
        %s664 = scalar_lea.vmem [#allocation7], %s663
        // Predicated region
        $region85: #{tpu_custom_call.1} parent=75 // pred_check
          %p665 = pneg %p177
        $region86: #{tpu_custom_call.1} parent=75 // pred_check_branch
          %667 = sbr.rel (%p665) target = $region88
        $region87: #{tpu_custom_call.1} parent=75 // pred_region
          %668 = dma.done %s661, 1024
        $region88: #{tpu_custom_call.1} parent=75 // pred_fallthru
          _
        %s669 = sand.u32 %s40, 1
        %s670 = scalar_lea.sflag [#allocation9], %s669
        %s671 = sand.u32 %s190, 1
        %s672 = smul.addr %s671, 64
        %s673 = scalar_lea.vmem [#allocation8], %s672
        // Predicated region
        $region89: #{tpu_custom_call.1} parent=75 // pred_check
          %p674 = pneg %p203
        $region90: #{tpu_custom_call.1} parent=75 // pred_check_branch
          %676 = sbr.rel (%p674) target = $region92
        $region91: #{tpu_custom_call.1} parent=75 // pred_region
          %677 = dma.done %s670, 1024
        $region92: #{tpu_custom_call.1} parent=75 // pred_fallthru
          _
        %s678 = sand.u32 %s40, 1
        %s679 = scalar_lea.sflag [#allocation9], %s678
        %s680 = sand.u32 %s268, 1
        %s681 = smul.addr %s680, 128
        %s682 = scalar_lea.vmem [#allocation10], %s681
        // Predicated region
        $region93: #{tpu_custom_call.1} parent=75 // pred_check
          %p683 = pneg %p281
        $region94: #{tpu_custom_call.1} parent=75 // pred_check_branch
          %685 = sbr.rel (%p683) target = $region96
        $region95: #{tpu_custom_call.1} parent=75 // pred_region
          %686 = dma.done %s679, 2048
        $region96: #{tpu_custom_call.1} parent=75 // pred_fallthru
          _
        %s687 = sand.u32 %s320, 1
        %s688 = scalar_lea.sflag [#allocation12], %s687
        %s689 = sand.u32 %s320, 1
        %s690 = smul.addr %s689, 128
        %s691 = scalar_lea.vmem [#allocation11], %s690
        // Predicated region
        $region97: #{tpu_custom_call.1} parent=75 // pred_check
          %p692 = pneg %p333
        $region98: #{tpu_custom_call.1} parent=75 // pred_check_branch
          %694 = sbr.rel (%p692) target = $region100
        $region99: #{tpu_custom_call.1} parent=75 // pred_region
          %695 = dma.done %s688, 2048
        $region100: #{tpu_custom_call.1} parent=75 // pred_fallthru
          _
        %p696 = scmp.lt.s32.totalorder %s44, 1
        %s697 = scalar_select %p696, %s44, 1
        %s698 = smul.addr %s697, 2
        %s699 = smul.addr %s698, 8
        %s700 = scalar_lea.vmem %s0, %s699
        %p701 = pneg %p73
        %p702 = pneg %p70
        %p703 = scmp.lt.s32.totalorder %s44, 1
        %s704 = scalar_select %p703, %s44, 1
        %s705 = smul.addr %s704, 2
        %s706 = smul.addr %s705, 8
        %s707 = scalar_lea.vmem %s1, %s706
        %p708 = pneg %p99
        %p709 = pneg %p96
        %s710 = sand.u32 %s112, 1
        %s711 = scalar_lea.sflag [#allocation3], %s710
        %s712 = sand.u32 %s112, 1
        %s713 = smul.addr %s712, 64
        %s714 = scalar_lea.vmem [#allocation2], %s713
        %p715 = pneg %p125
        %p716 = pneg %p122
        %s717 = sand.u32 %s40, 1
        %s718 = scalar_lea.sflag [#allocation6], %s717
        %s719 = sand.u32 %s138, 1
        %s720 = smul.addr %s719, 64
        %s721 = scalar_lea.vmem [#allocation5], %s720
        %p722 = pneg %p151
        %p723 = pneg %p148
        %s724 = sand.u32 %s40, 1
        %s725 = scalar_lea.sflag [#allocation6], %s724
        %s726 = sand.u32 %s164, 1
        %s727 = smul.addr %s726, 64
        %s728 = scalar_lea.vmem [#allocation7], %s727
        %p729 = pneg %p177
        %p730 = pneg %p174
        %s731 = sand.u32 %s40, 1
        %s732 = scalar_lea.sflag [#allocation9], %s731
        %s733 = sand.u32 %s190, 1
        %s734 = smul.addr %s733, 64
        %s735 = scalar_lea.vmem [#allocation8], %s734
        %p736 = pneg %p203
        %p737 = pneg %p200
        %p738 = scmp.lt.s32.totalorder %s45, 1
        %s739 = scalar_select %p738, %s45, 1
        %s740 = scalar_lea.vmem %s6, %s739
        %p741 = pneg %p229
        %p742 = pneg %p226
        %p743 = scmp.lt.s32.totalorder %s45, 1
        %s744 = scalar_select %p743, %s45, 1
        %s745 = scalar_lea.vmem %s7, %s744
        %p746 = pneg %p255
        %p747 = pneg %p252
        %s748 = sand.u32 %s40, 1
        %s749 = scalar_lea.sflag [#allocation9], %s748
        %s750 = sand.u32 %s268, 1
        %s751 = smul.addr %s750, 128
        %s752 = scalar_lea.vmem [#allocation10], %s751
        %p753 = pneg %p281
        %p754 = pneg %p278
        %p755 = scmp.lt.s32.totalorder %s45, 1
        %s756 = scalar_select %p755, %s45, 1
        %s757 = smul.addr %s756, 2
        %s758 = scalar_lea.vmem %s9, %s757
        %p759 = pneg %p307
        %p760 = pneg %p304
        %s761 = sand.u32 %s320, 1
        %s762 = scalar_lea.sflag [#allocation12], %s761
        %s763 = sand.u32 %s320, 1
        %s764 = smul.addr %s763, 128
        %s765 = scalar_lea.vmem [#allocation11], %s764
        %p766 = pneg %p333
        %p767 = pneg %p330
        %p768 = scmp.lt.s32.totalorder %s45, 1
        %s769 = scalar_select %p768, %s45, 1
        %s770 = scalar_lea.vmem %s11, %s769
        %p771 = pneg %p359
        %p772 = pneg %p356
        %p773 = scmp.lt.s32.totalorder %s45, 1
        %s774 = scalar_select %p773, %s45, 1
        %s775 = scalar_lea.vmem %s12, %s774
        %p776 = pneg %p385
        %p777 = pneg %p382
        %p778 = scmp.lt.s32.totalorder %s45, 1
        %s779 = scalar_select %p778, %s45, 1
        %s780 = scalar_lea.vmem %s13, %s779
        %p781 = pneg %p411
        %p782 = pneg %p408
        %p783 = pneg %p437
        %p784 = pneg %p434
        %s785 = sand.u32 %s424, 1
        %s786 = scalar_lea.sflag [#allocation4], %s785
        %s787 = sand.u32 %s424, 1
        %s788 = smul.addr %s787, 16
        %s789 = scalar_lea.vmem [#allocation13], %s788
        %p790 = scmp.lt.s32.totalorder %s44, 1
        %s791 = scalar_select %p790, %s44, 1
        %s792 = smul.addr %s791, 2
        %s793 = smul.addr %s792, 8
        %s794 = scalar_lea.vmem %s0, %s793
        %p795 = scmp.lt.s32.totalorder %s44, 1
        %s796 = scalar_select %p795, %s44, 1
        %s797 = smul.addr %s796, 2
        %s798 = smul.addr %s797, 8
        %s799 = scalar_lea.vmem %s1, %s798
        %p800 = scmp.lt.s32.totalorder %s45, 1
        %s801 = scalar_select %p800, %s45, 1
        %s802 = scalar_lea.vmem %s6, %s801
        %p803 = scmp.lt.s32.totalorder %s45, 1
        %s804 = scalar_select %p803, %s45, 1
        %s805 = scalar_lea.vmem %s7, %s804
        %p806 = scmp.lt.s32.totalorder %s45, 1
        %s807 = scalar_select %p806, %s45, 1
        %s808 = smul.addr %s807, 2
        %s809 = scalar_lea.vmem %s9, %s808
        %p810 = scmp.lt.s32.totalorder %s45, 1
        %s811 = scalar_select %p810, %s45, 1
        %s812 = scalar_lea.vmem %s11, %s811
        %p813 = scmp.lt.s32.totalorder %s45, 1
        %s814 = scalar_select %p813, %s45, 1
        %s815 = scalar_lea.vmem %s12, %s814
        %p816 = scmp.lt.s32.totalorder %s45, 1
        %s817 = scalar_select %p816, %s45, 1
        %s818 = scalar_lea.vmem %s13, %s817
        %p820 = scmp.eq.s32.totalorder %s45, 0
        // Predicated region
        $region101: #{tpu_custom_call.1} parent=75 // pred_check
          %p821 = pneg %p820
        $region102: #{tpu_custom_call.1} parent=75 // pred_check_branch
          %823 = sbr.rel (%p821) target = $region104
        $region103: #{tpu_custom_call.1} parent=75 // pred_region
          %v824 = vld [vmem:[%s794] sm:$0xff]
          %v825 = vld [vmem:[%s794 + $0x8] sm:$0xff]
          %826 = vst [vmem:[%s789] sm:$0xff] %v824
          %827 = vst [vmem:[%s789 + $0x8] sm:$0xff] %v825
        $region104: #{tpu_custom_call.1} parent=75 // pred_fallthru
          _
        %v828 = vld [vmem:[%s789] sm:$0xff]
        %v829 = vld [vmem:[%s789 + $0x8] sm:$0xff]
        %v830 = vld [vmem:[%s799] sm:$0xff]
        %v831 = vld [vmem:[%s799 + $0x8] sm:$0xff]
        %832 = vxpose.xlu0.b32.start [1/16] %v830, 128
        %833 = vxpose.xlu0.b32.cont [2/16] %v831, 128
        %834 = vxpose.xlu0.b32.cont [3/16] 0.0, 128
        %835 = vxpose.xlu0.b32.cont [4/16] 0.0, 128
        %836 = vxpose.xlu0.b32.cont [5/16] 0.0, 128
        %837 = vxpose.xlu0.b32.cont [6/16] 0.0, 128
        %838 = vxpose.xlu0.b32.cont [7/16] 0.0, 128
        %839 = vxpose.xlu0.b32.cont [8/16] 0.0, 128
        %840 = vxpose.xlu0.b32.cont [9/16] 0.0, 128
        %841 = vxpose.xlu0.b32.cont [10/16] 0.0, 128
        %842 = vxpose.xlu0.b32.cont [11/16] 0.0, 128
        %843 = vxpose.xlu0.b32.cont [12/16] 0.0, 128
        %844 = vxpose.xlu0.b32.cont [13/16] 0.0, 128
        %845 = vxpose.xlu0.b32.cont [14/16] 0.0, 128
        %846 = vxpose.xlu0.b32.cont [15/16] 0.0, 128
        %847 = vxpose.xlu0.b32.end [16/16] 0.0, 128
        %v848 = vpop.trf.xlu0
        %v849 = vpop.trf.xlu0
        %v850 = vpop.trf.xlu0
        %v851 = vpop.trf.xlu0
        %v852 = vpop.trf.xlu0
        %v853 = vpop.trf.xlu0
        %v854 = vpop.trf.xlu0
        %v855 = vpop.trf.xlu0
        %v856 = vpop.trf.xlu0
        %v857 = vpop.trf.xlu0
        %v858 = vpop.trf.xlu0
        %v859 = vpop.trf.xlu0
        %v860 = vpop.trf.xlu0
        %v861 = vpop.trf.xlu0
        %v862 = vpop.trf.xlu0
        %v863 = vpop.trf.xlu0
        %865 = vset.pattern.permute.xlu0 0
        %866 = vperm.xlu0 %865, %v830
        %v867 = vpop.permute.xlu0 %866
        %870 = vset.pattern.permute.xlu0 0
        %871 = vperm.xlu0 %870, %v831
        %v872 = vpop.permute.xlu0 %871
        %v874 = vlaneseq
        %v875 = vshrl.u32 %v874, 7
        %v876 = vsub.s32 0, %v875
        %v877 = vrot.slane %v848, %v876
        %v878 = vmul.f32 %v867, %v877
        %v879 = vmul.f32 %v872, %v877
        %v880 = vsub.f32 1.0, %v878
        %v881 = vsub.f32 1.0, %v879
        %v882 = vmul.f32 %v880, -1767.767
        %v883 = vmul.f32 %v881, -1767.767
        %v884 = vld [vmem:[%s646] sm:$0xf]
        %v885 = vld [vmem:[%s646 + $0x4] sm:$0xf]
        %v886 = vld [vmem:[%s646 + $0x8] sm:$0xf]
        %v887 = vld [vmem:[%s646 + $0xc] sm:$0xf]
        %v888 = vld [vmem:[%s646 + $0x10] sm:$0xf]
        %v889 = vld [vmem:[%s646 + $0x14] sm:$0xf]
        %v890 = vld [vmem:[%s646 + $0x18] sm:$0xf]
        %v891 = vld [vmem:[%s646 + $0x1c] sm:$0xf]
        %v892 = vld [vmem:[%s646 + $0x20] sm:$0xf]
        %v893 = vld [vmem:[%s646 + $0x24] sm:$0xf]
        %v894 = vld [vmem:[%s646 + $0x28] sm:$0xf]
        %v895 = vld [vmem:[%s646 + $0x2c] sm:$0xf]
        %v896 = vld [vmem:[%s646 + $0x30] sm:$0xf]
        %v897 = vld [vmem:[%s646 + $0x34] sm:$0xf]
        %v898 = vld [vmem:[%s646 + $0x38] sm:$0xf]
        %v899 = vld [vmem:[%s646 + $0x3c] sm:$0xf]
        %v900 = vpack.c.bf16 %v829, %v828
        %v917 = vunpack.c.l.b16 %v884
        %v918 = vunpack.c.l.b16 %v885
        %v919 = vunpack.c.l.b16 %v886
        %v920 = vunpack.c.l.b16 %v887
        %v921 = vunpack.c.l.b16 %v888
        %v922 = vunpack.c.l.b16 %v889
        %v923 = vunpack.c.l.b16 %v890
        %v924 = vunpack.c.l.b16 %v891
        %v925 = vunpack.c.l.b16 %v892
        %v926 = vunpack.c.l.b16 %v893
        %v927 = vunpack.c.l.b16 %v894
        %v928 = vunpack.c.l.b16 %v895
        %v929 = vunpack.c.l.b16 %v896
        %v930 = vunpack.c.l.b16 %v897
        %v931 = vunpack.c.l.b16 %v898
        %v932 = vunpack.c.l.b16 %v899
        %v933 = vpack.c.b16 %v918, %v917
        %v934 = vpack.c.b16 %v920, %v919
        %v935 = vpack.c.b16 %v922, %v921
        %v936 = vpack.c.b16 %v924, %v923
        %v937 = vpack.c.b16 %v926, %v925
        %v938 = vpack.c.b16 %v928, %v927
        %v939 = vpack.c.b16 %v930, %v929
        %v940 = vpack.c.b16 %v932, %v931
        %949 = vmatprep.subr.bf16.mxu0 0
        %950 = vmatpush1.bf16.msra.mxu0 %v933
        %951 = vmatprep.subr.bf16.mxu0 0
        %952 = vmatpush1.bf16.msra.mxu0 %v934
        %953 = vmatprep.subr.bf16.mxu0 0
        %954 = vmatpush1.bf16.msra.mxu0 %v935
        %955 = vmatprep.subr.bf16.mxu0 0
        %956 = vmatpush1.bf16.msra.mxu0 %v936
        %957 = vmatprep.subr.bf16.mxu0 0
        %958 = vmatpush1.bf16.msra.mxu0 %v937
        %959 = vmatprep.subr.bf16.mxu0 0
        %960 = vmatpush1.bf16.msra.mxu0 %v938
        %961 = vmatprep.subr.bf16.mxu0 0
        %962 = vmatpush1.bf16.msra.mxu0 %v939
        %963 = vmatprep.subr.bf16.mxu0 0
        %964 = vmatpush1.bf16.msra.mxu0 %v940
        %965 = vmatprep.subr.bf16.mxu0 0
        %966 = vmatpush1.bf16.msra.mxu0 0
        %967 = vmatprep.subr.bf16.mxu0 0
        %968 = vmatpush1.bf16.msra.mxu0 0
        %969 = vmatprep.subr.bf16.mxu0 0
        %970 = vmatpush1.bf16.msra.mxu0 0
        %971 = vmatprep.subr.bf16.mxu0 0
        %972 = vmatpush1.bf16.msra.mxu0 0
        %973 = vmatprep.subr.bf16.mxu0 0
        %974 = vmatpush1.bf16.msra.mxu0 0
        %975 = vmatprep.subr.bf16.mxu0 0
        %976 = vmatpush1.bf16.msra.mxu0 0
        %977 = vmatprep.subr.bf16.mxu0 0
        %978 = vmatpush1.bf16.msra.mxu0 0
        %979 = vmatprep.subr.bf16.mxu0 0
        %980 = vmatpush1.bf16.msra.mxu0 0
        %981 = vmatprep.mubr.bf16.mxu0 0
        %982 = vmatmul.mubr.bf16.gmra.mrb[0].mxu0 %v900
        %v983 = vpop.f32.mrb[0].mxu0
        %v984 = vadd.f32 0.0, %v983
        %v985 = vpop.f32.mrb[0].mxu0
        %v986 = vpop.f32.mrb[0].mxu0
        %v987 = vadd.f32 0.0, %v986
        %v988 = vpop.f32.mrb[0].mxu0
        %989 = vdwg.mxu0
        %v990 = vmul.f32 %v984, 0.17677669
        %v991 = vmul.f32 %v987, 0.17677669
        %v992 = vld [vmem:[%s655] sm:$0xf]
        %v993 = vld [vmem:[%s655 + $0x4] sm:$0xf]
        %v994 = vld [vmem:[%s655 + $0x8] sm:$0xf]
        %v995 = vld [vmem:[%s655 + $0xc] sm:$0xf]
        %v996 = vld [vmem:[%s655 + $0x10] sm:$0xf]
        %v997 = vld [vmem:[%s655 + $0x14] sm:$0xf]
        %v998 = vld [vmem:[%s655 + $0x18] sm:$0xf]
        %v999 = vld [vmem:[%s655 + $0x1c] sm:$0xf]
        %v1000 = vld [vmem:[%s655 + $0x20] sm:$0xf]
        %v1001 = vld [vmem:[%s655 + $0x24] sm:$0xf]
        %v1002 = vld [vmem:[%s655 + $0x28] sm:$0xf]
        %v1003 = vld [vmem:[%s655 + $0x2c] sm:$0xf]
        %v1004 = vld [vmem:[%s655 + $0x30] sm:$0xf]
        %v1005 = vld [vmem:[%s655 + $0x34] sm:$0xf]
        %v1006 = vld [vmem:[%s655 + $0x38] sm:$0xf]
        %v1007 = vld [vmem:[%s655 + $0x3c] sm:$0xf]
        %v1024 = vunpack.c.l.b16 %v992
        %v1025 = vunpack.c.l.b16 %v993
        %v1026 = vunpack.c.l.b16 %v994
        %v1027 = vunpack.c.l.b16 %v995
        %v1028 = vunpack.c.l.b16 %v996
        %v1029 = vunpack.c.l.b16 %v997
        %v1030 = vunpack.c.l.b16 %v998
        %v1031 = vunpack.c.l.b16 %v999
        %v1032 = vunpack.c.l.b16 %v1000
        %v1033 = vunpack.c.l.b16 %v1001
        %v1034 = vunpack.c.l.b16 %v1002
        %v1035 = vunpack.c.l.b16 %v1003
        %v1036 = vunpack.c.l.b16 %v1004
        %v1037 = vunpack.c.l.b16 %v1005
        %v1038 = vunpack.c.l.b16 %v1006
        %v1039 = vunpack.c.l.b16 %v1007
        %v1040 = vpack.c.b16 %v1025, %v1024
        %v1041 = vpack.c.b16 %v1027, %v1026
        %v1042 = vpack.c.b16 %v1029, %v1028
        %v1043 = vpack.c.b16 %v1031, %v1030
        %v1044 = vpack.c.b16 %v1033, %v1032
        %v1045 = vpack.c.b16 %v1035, %v1034
        %v1046 = vpack.c.b16 %v1037, %v1036
        %v1047 = vpack.c.b16 %v1039, %v1038
        %1056 = vmatprep.subr.bf16.mxu0 0
        %1057 = vmatpush1.bf16.msra.mxu0 %v1040
        %1058 = vmatprep.subr.bf16.mxu0 0
        %1059 = vmatpush1.bf16.msra.mxu0 %v1041
        %1060 = vmatprep.subr.bf16.mxu0 0
        %1061 = vmatpush1.bf16.msra.mxu0 %v1042
        %1062 = vmatprep.subr.bf16.mxu0 0
        %1063 = vmatpush1.bf16.msra.mxu0 %v1043
        %1064 = vmatprep.subr.bf16.mxu0 0
        %1065 = vmatpush1.bf16.msra.mxu0 %v1044
        %1066 = vmatprep.subr.bf16.mxu0 0
        %1067 = vmatpush1.bf16.msra.mxu0 %v1045
        %1068 = vmatprep.subr.bf16.mxu0 0
        %1069 = vmatpush1.bf16.msra.mxu0 %v1046
        %1070 = vmatprep.subr.bf16.mxu0 0
        %1071 = vmatpush1.bf16.msra.mxu0 %v1047
        %1072 = vmatprep.subr.bf16.mxu0 0
        %1073 = vmatpush1.bf16.msra.mxu0 0
        %1074 = vmatprep.subr.bf16.mxu0 0
        %1075 = vmatpush1.bf16.msra.mxu0 0
        %1076 = vmatprep.subr.bf16.mxu0 0
        %1077 = vmatpush1.bf16.msra.mxu0 0
        %1078 = vmatprep.subr.bf16.mxu0 0
        %1079 = vmatpush1.bf16.msra.mxu0 0
        %1080 = vmatprep.subr.bf16.mxu0 0
        %1081 = vmatpush1.bf16.msra.mxu0 0
        %1082 = vmatprep.subr.bf16.mxu0 0
        %1083 = vmatpush1.bf16.msra.mxu0 0
        %1084 = vmatprep.subr.bf16.mxu0 0
        %1085 = vmatpush1.bf16.msra.mxu0 0
        %1086 = vmatprep.subr.bf16.mxu0 0
        %1087 = vmatpush1.bf16.msra.mxu0 0
        %1088 = vmatprep.mubr.bf16.mxu0 0
        %1089 = vmatmul.mubr.bf16.gmra.mrb[0].mxu0 %v900
        %v1090 = vpop.f32.mrb[0].mxu0
        %v1091 = vadd.f32 0.0, %v1090
        %v1092 = vpop.f32.mrb[0].mxu0
        %v1093 = vpop.f32.mrb[0].mxu0
        %v1094 = vadd.f32 0.0, %v1093
        %v1095 = vpop.f32.mrb[0].mxu0
        %1096 = vdwg.mxu0
        %v1097 = vld [vmem:[%s664] sm:$0xf]
        %v1098 = vld [vmem:[%s664 + $0x4] sm:$0xf]
        %v1099 = vld [vmem:[%s664 + $0x8] sm:$0xf]
        %v1100 = vld [vmem:[%s664 + $0xc] sm:$0xf]
        %v1101 = vld [vmem:[%s664 + $0x10] sm:$0xf]
        %v1102 = vld [vmem:[%s664 + $0x14] sm:$0xf]
        %v1103 = vld [vmem:[%s664 + $0x18] sm:$0xf]
        %v1104 = vld [vmem:[%s664 + $0x1c] sm:$0xf]
        %v1105 = vld [vmem:[%s664 + $0x20] sm:$0xf]
        %v1106 = vld [vmem:[%s664 + $0x24] sm:$0xf]
        %v1107 = vld [vmem:[%s664 + $0x28] sm:$0xf]
        %v1108 = vld [vmem:[%s664 + $0x2c] sm:$0xf]
        %v1109 = vld [vmem:[%s664 + $0x30] sm:$0xf]
        %v1110 = vld [vmem:[%s664 + $0x34] sm:$0xf]
        %v1111 = vld [vmem:[%s664 + $0x38] sm:$0xf]
        %v1112 = vld [vmem:[%s664 + $0x3c] sm:$0xf]
        %v1129 = vunpack.c.l.b16 %v1097
        %v1130 = vunpack.c.l.b16 %v1098
        %v1131 = vunpack.c.l.b16 %v1099
        %v1132 = vunpack.c.l.b16 %v1100
        %v1133 = vunpack.c.l.b16 %v1101
        %v1134 = vunpack.c.l.b16 %v1102
        %v1135 = vunpack.c.l.b16 %v1103
        %v1136 = vunpack.c.l.b16 %v1104
        %v1137 = vunpack.c.l.b16 %v1105
        %v1138 = vunpack.c.l.b16 %v1106
        %v1139 = vunpack.c.l.b16 %v1107
        %v1140 = vunpack.c.l.b16 %v1108
        %v1141 = vunpack.c.l.b16 %v1109
        %v1142 = vunpack.c.l.b16 %v1110
        %v1143 = vunpack.c.l.b16 %v1111
        %v1144 = vunpack.c.l.b16 %v1112
        %v1145 = vpack.c.b16 %v1130, %v1129
        %v1146 = vpack.c.b16 %v1132, %v1131
        %v1147 = vpack.c.b16 %v1134, %v1133
        %v1148 = vpack.c.b16 %v1136, %v1135
        %v1149 = vpack.c.b16 %v1138, %v1137
        %v1150 = vpack.c.b16 %v1140, %v1139
        %v1151 = vpack.c.b16 %v1142, %v1141
        %v1152 = vpack.c.b16 %v1144, %v1143
        %1161 = vmatprep.subr.bf16.mxu0 0
        %1162 = vmatpush1.bf16.msra.mxu0 %v1145
        %1163 = vmatprep.subr.bf16.mxu0 0
        %1164 = vmatpush1.bf16.msra.mxu0 %v1146
        %1165 = vmatprep.subr.bf16.mxu0 0
        %1166 = vmatpush1.bf16.msra.mxu0 %v1147
        %1167 = vmatprep.subr.bf16.mxu0 0
        %1168 = vmatpush1.bf16.msra.mxu0 %v1148
        %1169 = vmatprep.subr.bf16.mxu0 0
        %1170 = vmatpush1.bf16.msra.mxu0 %v1149
        %1171 = vmatprep.subr.bf16.mxu0 0
        %1172 = vmatpush1.bf16.msra.mxu0 %v1150
        %1173 = vmatprep.subr.bf16.mxu0 0
        %1174 = vmatpush1.bf16.msra.mxu0 %v1151
        %1175 = vmatprep.subr.bf16.mxu0 0
        %1176 = vmatpush1.bf16.msra.mxu0 %v1152
        %1177 = vmatprep.subr.bf16.mxu0 0
        %1178 = vmatpush1.bf16.msra.mxu0 0
        %1179 = vmatprep.subr.bf16.mxu0 0
        %1180 = vmatpush1.bf16.msra.mxu0 0
        %1181 = vmatprep.subr.bf16.mxu0 0
        %1182 = vmatpush1.bf16.msra.mxu0 0
        %1183 = vmatprep.subr.bf16.mxu0 0
        %1184 = vmatpush1.bf16.msra.mxu0 0
        %1185 = vmatprep.subr.bf16.mxu0 0
        %1186 = vmatpush1.bf16.msra.mxu0 0
        %1187 = vmatprep.subr.bf16.mxu0 0
        %1188 = vmatpush1.bf16.msra.mxu0 0
        %1189 = vmatprep.subr.bf16.mxu0 0
        %1190 = vmatpush1.bf16.msra.mxu0 0
        %1191 = vmatprep.subr.bf16.mxu0 0
        %1192 = vmatpush1.bf16.msra.mxu0 0
        %1193 = vmatprep.mubr.bf16.mxu0 0
        %1194 = vmatmul.mubr.bf16.gmra.mrb[0].mxu0 %v900
        %v1195 = vpop.f32.mrb[0].mxu0
        %v1196 = vadd.f32 0.0, %v1195
        %v1197 = vpop.f32.mrb[0].mxu0
        %v1198 = vpop.f32.mrb[0].mxu0
        %v1199 = vadd.f32 0.0, %v1198
        %v1200 = vpop.f32.mrb[0].mxu0
        %1201 = vdwg.mxu0
        %1204 = vrot.lane.b32.xlu0 %v990, 96
        %v1205 = vpop.permute.xlu0 %1204
        %1206 = vrot.lane.b32.xlu0 %v991, 96
        %v1207 = vpop.permute.xlu0 %1206
        %1208 = vrot.lane.b32.xlu0 %v990, 64
        %v1209 = vpop.permute.xlu0 %1208
        %1210 = vrot.lane.b32.xlu0 %v991, 64
        %v1211 = vpop.permute.xlu0 %1210
        %1212 = vrot.lane.b32.xlu0 %v990, 32
        %v1213 = vpop.permute.xlu0 %1212
        %1214 = vrot.lane.b32.xlu0 %v991, 32
        %v1215 = vpop.permute.xlu0 %1214
        %1218 = vrot.lane.b32.xlu0 %v1091, 96
        %v1219 = vpop.permute.xlu0 %1218
        %1220 = vrot.lane.b32.xlu0 %v1094, 96
        %v1221 = vpop.permute.xlu0 %1220
        %1222 = vrot.lane.b32.xlu0 %v1091, 64
        %v1223 = vpop.permute.xlu0 %1222
        %1224 = vrot.lane.b32.xlu0 %v1094, 64
        %v1225 = vpop.permute.xlu0 %1224
        %1226 = vrot.lane.b32.xlu0 %v1091, 32
        %v1227 = vpop.permute.xlu0 %1226
        %1228 = vrot.lane.b32.xlu0 %v1094, 32
        %v1229 = vpop.permute.xlu0 %1228
        %1232 = vrot.lane.b32.xlu0 %v1196, 96
        %v1233 = vpop.permute.xlu0 %1232
        %1234 = vrot.lane.b32.xlu0 %v1199, 96
        %v1235 = vpop.permute.xlu0 %1234
        %1238 = vrot.lane.b32.xlu0 %v1196, 64
        %v1239 = vpop.permute.xlu0 %1238
        %1240 = vrot.lane.b32.xlu0 %v1199, 64
        %v1241 = vpop.permute.xlu0 %1240
        %1244 = vrot.lane.b32.xlu0 %v1196, 32
        %v1245 = vpop.permute.xlu0 %1244
        %1246 = vrot.lane.b32.xlu0 %v1199, 32
        %v1247 = vpop.permute.xlu0 %1246
        %vm1250 = vcmask 261120
        %v1251 = vsel %vm1250, %v990, 0
        %v1253 = vsel %vm1250, %v991, 0
        %v1255 = vsel %vm1250, %v1091, 0
        %v1257 = vsel %vm1250, %v1094, 0
        %1259 = vmatprep.subr.mxu0 0.0
        %1260 = vmatpush1.xpose.msra.mxu0 %v1255
        %1261 = vmatprep.subr.mxu0 0.0
        %1262 = vmatpush1.xpose.msra.mxu0 %v1257
        %1263 = vmatprep.subr.mxu0 0.0
        %1264 = vmatpush1.xpose.msra.mxu0 0.0
        %1265 = vmatprep.subr.mxu0 0.0
        %1266 = vmatpush1.xpose.msra.mxu0 0.0
        %1267 = vmatprep.subr.mxu0 0.0
        %1268 = vmatpush1.xpose.msra.mxu0 0.0
        %1269 = vmatprep.subr.mxu0 0.0
        %1270 = vmatpush1.xpose.msra.mxu0 0.0
        %1271 = vmatprep.subr.mxu0 0.0
        %1272 = vmatpush1.xpose.msra.mxu0 0.0
        %1273 = vmatprep.subr.mxu0 0.0
        %1274 = vmatpush1.xpose.msra.mxu0 0.0
        %1275 = vmatprep.subr.mxu0 0.0
        %1276 = vmatpush1.xpose.msra.mxu0 0.0
        %1277 = vmatprep.subr.mxu0 0.0
        %1278 = vmatpush1.xpose.msra.mxu0 0.0
        %1279 = vmatprep.subr.mxu0 0.0
        %1280 = vmatpush1.xpose.msra.mxu0 0.0
        %1281 = vmatprep.subr.mxu0 0.0
        %1282 = vmatpush1.xpose.msra.mxu0 0.0
        %1283 = vmatprep.subr.mxu0 0.0
        %1284 = vmatpush1.xpose.msra.mxu0 0.0
        %1285 = vmatprep.subr.mxu0 0.0
        %1286 = vmatpush1.xpose.msra.mxu0 0.0
        %1287 = vmatprep.subr.mxu0 0.0
        %1288 = vmatpush1.xpose.msra.mxu0 0.0
        %1289 = vmatprep.subr.mxu0 0.0
        %1290 = vmatpush1.xpose.msra.mxu0 0.0
        %1291 = vmatprep.subr.mxu0 0.0
        %1292 = vmatpush1.xpose.msra.mxu0 0.0
        %1293 = vmatprep.subr.mxu0 0.0
        %1294 = vmatpush1.xpose.msra.mxu0 0.0
        %1295 = vmatprep.subr.mxu0 0.0
        %1296 = vmatpush1.xpose.msra.mxu0 0.0
        %1297 = vmatprep.subr.mxu0 0.0
        %1298 = vmatpush1.xpose.msra.mxu0 0.0
        %1299 = vmatprep.subr.mxu0 0.0
        %1300 = vmatpush1.xpose.msra.mxu0 0.0
        %1301 = vmatprep.subr.mxu0 0.0
        %1302 = vmatpush1.xpose.msra.mxu0 0.0
        %1303 = vmatprep.subr.mxu0 0.0
        %1304 = vmatpush1.xpose.msra.mxu0 0.0
        %1305 = vmatprep.subr.mxu0 0.0
        %1306 = vmatpush1.xpose.msra.mxu0 0.0
        %1307 = vmatprep.subr.mxu0 0.0
        %1308 = vmatpush1.xpose.msra.mxu0 0.0
        %1309 = vmatprep.subr.mxu0 0.0
        %1310 = vmatpush1.xpose.msra.mxu0 0.0
        %1311 = vmatprep.subr.mxu0 0.0
        %1312 = vmatpush1.xpose.msra.mxu0 0.0
        %1313 = vmatprep.subr.mxu0 0.0
        %1314 = vmatpush1.xpose.msra.mxu0 0.0
        %1315 = vmatprep.subr.mxu0 0.0
        %1316 = vmatpush1.xpose.msra.mxu0 0.0
        %1317 = vmatprep.subr.mxu0 0.0
        %1318 = vmatpush1.xpose.msra.mxu0 0.0
        %1319 = vmatprep.subr.mxu0 0.0
        %1320 = vmatpush1.xpose.msra.mxu0 0.0
        %1321 = vmatprep.subr.mxu0 0.0
        %1322 = vmatpush1.xpose.msra.mxu0 0.0
        %1323 = vmatprep.mubr.f32.mxu0 0.0
        %1324 = vmatmul.mubr.f32.gmra.mrb[0].mxu0 %v1251
        %v1325 = vpop.f32.mrb[0].mxu0
        %v1326 = vadd.f32 %v882, %v1325
        %v1327 = vpop.f32.mrb[0].mxu0
        %1328 = vmatprep.mubr.f32.mxu0 0.0
        %1329 = vmatmul.mubr.f32.gmra.mrb[0].mxu0 %v1253
        %v1330 = vpop.f32.mrb[0].mxu0
        %v1331 = vadd.f32 %v883, %v1330
        %v1332 = vpop.f32.mrb[0].mxu0
        %1333 = vdwg.mxu0
        %v1334 = vsel %vm1250, %v1205, 0
        %v1336 = vsel %vm1250, %v1207, 0
        %v1338 = vsel %vm1250, %v1219, 0
        %v1340 = vsel %vm1250, %v1221, 0
        %1342 = vmatprep.subr.mxu0 0.0
        %1343 = vmatpush1.xpose.msra.mxu0 %v1338
        %1344 = vmatprep.subr.mxu0 0.0
        %1345 = vmatpush1.xpose.msra.mxu0 %v1340
        %1346 = vmatprep.subr.mxu0 0.0
        %1347 = vmatpush1.xpose.msra.mxu0 0.0
        %1348 = vmatprep.subr.mxu0 0.0
        %1349 = vmatpush1.xpose.msra.mxu0 0.0
        %1350 = vmatprep.subr.mxu0 0.0
        %1351 = vmatpush1.xpose.msra.mxu0 0.0
        %1352 = vmatprep.subr.mxu0 0.0
        %1353 = vmatpush1.xpose.msra.mxu0 0.0
        %1354 = vmatprep.subr.mxu0 0.0
        %1355 = vmatpush1.xpose.msra.mxu0 0.0
        %1356 = vmatprep.subr.mxu0 0.0
        %1357 = vmatpush1.xpose.msra.mxu0 0.0
        %1358 = vmatprep.subr.mxu0 0.0
        %1359 = vmatpush1.xpose.msra.mxu0 0.0
        %1360 = vmatprep.subr.mxu0 0.0
        %1361 = vmatpush1.xpose.msra.mxu0 0.0
        %1362 = vmatprep.subr.mxu0 0.0
        %1363 = vmatpush1.xpose.msra.mxu0 0.0
        %1364 = vmatprep.subr.mxu0 0.0
        %1365 = vmatpush1.xpose.msra.mxu0 0.0
        %1366 = vmatprep.subr.mxu0 0.0
        %1367 = vmatpush1.xpose.msra.mxu0 0.0
        %1368 = vmatprep.subr.mxu0 0.0
        %1369 = vmatpush1.xpose.msra.mxu0 0.0
        %1370 = vmatprep.subr.mxu0 0.0
        %1371 = vmatpush1.xpose.msra.mxu0 0.0
        %1372 = vmatprep.subr.mxu0 0.0
        %1373 = vmatpush1.xpose.msra.mxu0 0.0
        %1374 = vmatprep.subr.mxu0 0.0
        %1375 = vmatpush1.xpose.msra.mxu0 0.0
        %1376 = vmatprep.subr.mxu0 0.0
        %1377 = vmatpush1.xpose.msra.mxu0 0.0
        %1378 = vmatprep.subr.mxu0 0.0
        %1379 = vmatpush1.xpose.msra.mxu0 0.0
        %1380 = vmatprep.subr.mxu0 0.0
        %1381 = vmatpush1.xpose.msra.mxu0 0.0
        %1382 = vmatprep.subr.mxu0 0.0
        %1383 = vmatpush1.xpose.msra.mxu0 0.0
        %1384 = vmatprep.subr.mxu0 0.0
        %1385 = vmatpush1.xpose.msra.mxu0 0.0
        %1386 = vmatprep.subr.mxu0 0.0
        %1387 = vmatpush1.xpose.msra.mxu0 0.0
        %1388 = vmatprep.subr.mxu0 0.0
        %1389 = vmatpush1.xpose.msra.mxu0 0.0
        %1390 = vmatprep.subr.mxu0 0.0
        %1391 = vmatpush1.xpose.msra.mxu0 0.0
        %1392 = vmatprep.subr.mxu0 0.0
        %1393 = vmatpush1.xpose.msra.mxu0 0.0
        %1394 = vmatprep.subr.mxu0 0.0
        %1395 = vmatpush1.xpose.msra.mxu0 0.0
        %1396 = vmatprep.subr.mxu0 0.0
        %1397 = vmatpush1.xpose.msra.mxu0 0.0
        %1398 = vmatprep.subr.mxu0 0.0
        %1399 = vmatpush1.xpose.msra.mxu0 0.0
        %1400 = vmatprep.subr.mxu0 0.0
        %1401 = vmatpush1.xpose.msra.mxu0 0.0
        %1402 = vmatprep.subr.mxu0 0.0
        %1403 = vmatpush1.xpose.msra.mxu0 0.0
        %1404 = vmatprep.subr.mxu0 0.0
        %1405 = vmatpush1.xpose.msra.mxu0 0.0
        %1406 = vmatprep.mubr.f32.mxu0 0.0
        %1407 = vmatmul.mubr.f32.gmra.mrb[0].mxu0 %v1334
        %v1408 = vpop.f32.mrb[0].mxu0
        %v1409 = vadd.f32 %v882, %v1408
        %v1410 = vpop.f32.mrb[0].mxu0
        %1411 = vmatprep.mubr.f32.mxu0 0.0
        %1412 = vmatmul.mubr.f32.gmra.mrb[0].mxu0 %v1336
        %v1413 = vpop.f32.mrb[0].mxu0
        %v1414 = vadd.f32 %v883, %v1413
        %v1415 = vpop.f32.mrb[0].mxu0
        %1416 = vdwg.mxu0
        %v1417 = vsel %vm1250, %v1209, 0
        %v1419 = vsel %vm1250, %v1211, 0
        %v1421 = vsel %vm1250, %v1223, 0
        %v1423 = vsel %vm1250, %v1225, 0
        %1425 = vmatprep.subr.mxu0 0.0
        %1426 = vmatpush1.xpose.msra.mxu0 %v1421
        %1427 = vmatprep.subr.mxu0 0.0
        %1428 = vmatpush1.xpose.msra.mxu0 %v1423
        %1429 = vmatprep.subr.mxu0 0.0
        %1430 = vmatpush1.xpose.msra.mxu0 0.0
        %1431 = vmatprep.subr.mxu0 0.0
        %1432 = vmatpush1.xpose.msra.mxu0 0.0
        %1433 = vmatprep.subr.mxu0 0.0
        %1434 = vmatpush1.xpose.msra.mxu0 0.0
        %1435 = vmatprep.subr.mxu0 0.0
        %1436 = vmatpush1.xpose.msra.mxu0 0.0
        %1437 = vmatprep.subr.mxu0 0.0
        %1438 = vmatpush1.xpose.msra.mxu0 0.0
        %1439 = vmatprep.subr.mxu0 0.0
        %1440 = vmatpush1.xpose.msra.mxu0 0.0
        %1441 = vmatprep.subr.mxu0 0.0
        %1442 = vmatpush1.xpose.msra.mxu0 0.0
        %1443 = vmatprep.subr.mxu0 0.0
        %1444 = vmatpush1.xpose.msra.mxu0 0.0
        %1445 = vmatprep.subr.mxu0 0.0
        %1446 = vmatpush1.xpose.msra.mxu0 0.0
        %1447 = vmatprep.subr.mxu0 0.0
        %1448 = vmatpush1.xpose.msra.mxu0 0.0
        %1449 = vmatprep.subr.mxu0 0.0
        %1450 = vmatpush1.xpose.msra.mxu0 0.0
        %1451 = vmatprep.subr.mxu0 0.0
        %1452 = vmatpush1.xpose.msra.mxu0 0.0
        %1453 = vmatprep.subr.mxu0 0.0
        %1454 = vmatpush1.xpose.msra.mxu0 0.0
        %1455 = vmatprep.subr.mxu0 0.0
        %1456 = vmatpush1.xpose.msra.mxu0 0.0
        %1457 = vmatprep.subr.mxu0 0.0
        %1458 = vmatpush1.xpose.msra.mxu0 0.0
        %1459 = vmatprep.subr.mxu0 0.0
        %1460 = vmatpush1.xpose.msra.mxu0 0.0
        %1461 = vmatprep.subr.mxu0 0.0
        %1462 = vmatpush1.xpose.msra.mxu0 0.0
        %1463 = vmatprep.subr.mxu0 0.0
        %1464 = vmatpush1.xpose.msra.mxu0 0.0
        %1465 = vmatprep.subr.mxu0 0.0
        %1466 = vmatpush1.xpose.msra.mxu0 0.0
        %1467 = vmatprep.subr.mxu0 0.0
        %1468 = vmatpush1.xpose.msra.mxu0 0.0
        %1469 = vmatprep.subr.mxu0 0.0
        %1470 = vmatpush1.xpose.msra.mxu0 0.0
        %1471 = vmatprep.subr.mxu0 0.0
        %1472 = vmatpush1.xpose.msra.mxu0 0.0
        %1473 = vmatprep.subr.mxu0 0.0
        %1474 = vmatpush1.xpose.msra.mxu0 0.0
        %1475 = vmatprep.subr.mxu0 0.0
        %1476 = vmatpush1.xpose.msra.mxu0 0.0
        %1477 = vmatprep.subr.mxu0 0.0
        %1478 = vmatpush1.xpose.msra.mxu0 0.0
        %1479 = vmatprep.subr.mxu0 0.0
        %1480 = vmatpush1.xpose.msra.mxu0 0.0
        %1481 = vmatprep.subr.mxu0 0.0
        %1482 = vmatpush1.xpose.msra.mxu0 0.0
        %1483 = vmatprep.subr.mxu0 0.0
        %1484 = vmatpush1.xpose.msra.mxu0 0.0
        %1485 = vmatprep.subr.mxu0 0.0
        %1486 = vmatpush1.xpose.msra.mxu0 0.0
        %1487 = vmatprep.subr.mxu0 0.0
        %1488 = vmatpush1.xpose.msra.mxu0 0.0
        %1489 = vmatprep.mubr.f32.mxu0 0.0
        %1490 = vmatmul.mubr.f32.gmra.mrb[0].mxu0 %v1417
        %v1491 = vpop.f32.mrb[0].mxu0
        %v1492 = vadd.f32 %v882, %v1491
        %v1493 = vpop.f32.mrb[0].mxu0
        %1494 = vmatprep.mubr.f32.mxu0 0.0
        %1495 = vmatmul.mubr.f32.gmra.mrb[0].mxu0 %v1419
        %v1496 = vpop.f32.mrb[0].mxu0
        %v1497 = vadd.f32 %v883, %v1496
        %v1498 = vpop.f32.mrb[0].mxu0
        %1499 = vdwg.mxu0
        %v1500 = vsel %vm1250, %v1213, 0
        %v1502 = vsel %vm1250, %v1215, 0
        %v1504 = vsel %vm1250, %v1227, 0
        %v1506 = vsel %vm1250, %v1229, 0
        %1508 = vmatprep.subr.mxu0 0.0
        %1509 = vmatpush1.xpose.msra.mxu0 %v1504
        %1510 = vmatprep.subr.mxu0 0.0
        %1511 = vmatpush1.xpose.msra.mxu0 %v1506
        %1512 = vmatprep.subr.mxu0 0.0
        %1513 = vmatpush1.xpose.msra.mxu0 0.0
        %1514 = vmatprep.subr.mxu0 0.0
        %1515 = vmatpush1.xpose.msra.mxu0 0.0
        %1516 = vmatprep.subr.mxu0 0.0
        %1517 = vmatpush1.xpose.msra.mxu0 0.0
        %1518 = vmatprep.subr.mxu0 0.0
        %1519 = vmatpush1.xpose.msra.mxu0 0.0
        %1520 = vmatprep.subr.mxu0 0.0
        %1521 = vmatpush1.xpose.msra.mxu0 0.0
        %1522 = vmatprep.subr.mxu0 0.0
        %1523 = vmatpush1.xpose.msra.mxu0 0.0
        %1524 = vmatprep.subr.mxu0 0.0
        %1525 = vmatpush1.xpose.msra.mxu0 0.0
        %1526 = vmatprep.subr.mxu0 0.0
        %1527 = vmatpush1.xpose.msra.mxu0 0.0
        %1528 = vmatprep.subr.mxu0 0.0
        %1529 = vmatpush1.xpose.msra.mxu0 0.0
        %1530 = vmatprep.subr.mxu0 0.0
        %1531 = vmatpush1.xpose.msra.mxu0 0.0
        %1532 = vmatprep.subr.mxu0 0.0
        %1533 = vmatpush1.xpose.msra.mxu0 0.0
        %1534 = vmatprep.subr.mxu0 0.0
        %1535 = vmatpush1.xpose.msra.mxu0 0.0
        %1536 = vmatprep.subr.mxu0 0.0
        %1537 = vmatpush1.xpose.msra.mxu0 0.0
        %1538 = vmatprep.subr.mxu0 0.0
        %1539 = vmatpush1.xpose.msra.mxu0 0.0
        %1540 = vmatprep.subr.mxu0 0.0
        %1541 = vmatpush1.xpose.msra.mxu0 0.0
        %1542 = vmatprep.subr.mxu0 0.0
        %1543 = vmatpush1.xpose.msra.mxu0 0.0
        %1544 = vmatprep.subr.mxu0 0.0
        %1545 = vmatpush1.xpose.msra.mxu0 0.0
        %1546 = vmatprep.subr.mxu0 0.0
        %1547 = vmatpush1.xpose.msra.mxu0 0.0
        %1548 = vmatprep.subr.mxu0 0.0
        %1549 = vmatpush1.xpose.msra.mxu0 0.0
        %1550 = vmatprep.subr.mxu0 0.0
        %1551 = vmatpush1.xpose.msra.mxu0 0.0
        %1552 = vmatprep.subr.mxu0 0.0
        %1553 = vmatpush1.xpose.msra.mxu0 0.0
        %1554 = vmatprep.subr.mxu0 0.0
        %1555 = vmatpush1.xpose.msra.mxu0 0.0
        %1556 = vmatprep.subr.mxu0 0.0
        %1557 = vmatpush1.xpose.msra.mxu0 0.0
        %1558 = vmatprep.subr.mxu0 0.0
        %1559 = vmatpush1.xpose.msra.mxu0 0.0
        %1560 = vmatprep.subr.mxu0 0.0
        %1561 = vmatpush1.xpose.msra.mxu0 0.0
        %1562 = vmatprep.subr.mxu0 0.0
        %1563 = vmatpush1.xpose.msra.mxu0 0.0
        %1564 = vmatprep.subr.mxu0 0.0
        %1565 = vmatpush1.xpose.msra.mxu0 0.0
        %1566 = vmatprep.subr.mxu0 0.0
        %1567 = vmatpush1.xpose.msra.mxu0 0.0
        %1568 = vmatprep.subr.mxu0 0.0
        %1569 = vmatpush1.xpose.msra.mxu0 0.0
        %1570 = vmatprep.subr.mxu0 0.0
        %1571 = vmatpush1.xpose.msra.mxu0 0.0
        %1572 = vmatprep.mubr.f32.mxu0 0.0
        %1573 = vmatmul.mubr.f32.gmra.mrb[0].mxu0 %v1500
        %v1574 = vpop.f32.mrb[0].mxu0
        %v1575 = vadd.f32 %v882, %v1574
        %v1576 = vpop.f32.mrb[0].mxu0
        %1577 = vmatprep.mubr.f32.mxu0 0.0
        %1578 = vmatmul.mubr.f32.gmra.mrb[0].mxu0 %v1502
        %v1579 = vpop.f32.mrb[0].mxu0
        %v1580 = vadd.f32 %v883, %v1579
        %v1581 = vpop.f32.mrb[0].mxu0
        %1582 = vdwg.mxu0
        %vm1583 = vcmask 130048
        %v1584 = vsel %vm1583, %v1326, -inf
        %1585 = vmax.xlane.f32.xlu0 %v1584
        %v1586 = vpop.xlane.xlu0 %1585
        %v1587 = vsel %vm1583, %v1331, -inf
        %1588 = vmax.xlane.f32.xlu0 %v1587
        %v1589 = vpop.xlane.xlu0 %1588
        %v1590 = vsel %vm1583, %v1409, -inf
        %1591 = vmax.xlane.f32.xlu0 %v1590
        %v1592 = vpop.xlane.xlu0 %1591
        %v1593 = vsel %vm1583, %v1414, -inf
        %1594 = vmax.xlane.f32.xlu0 %v1593
        %v1595 = vpop.xlane.xlu0 %1594
        %v1596 = vsel %vm1583, %v1492, -inf
        %1597 = vmax.xlane.f32.xlu0 %v1596
        %v1598 = vpop.xlane.xlu0 %1597
        %v1599 = vsel %vm1583, %v1497, -inf
        %1600 = vmax.xlane.f32.xlu0 %v1599
        %v1601 = vpop.xlane.xlu0 %1600
        %v1602 = vsel %vm1583, %v1575, -inf
        %1603 = vmax.xlane.f32.xlu0 %v1602
        %v1604 = vpop.xlane.xlu0 %1603
        %v1605 = vsel %vm1583, %v1580, -inf
        %1606 = vmax.xlane.f32.xlu0 %v1605
        %v1607 = vpop.xlane.xlu0 %1606
        %v1608 = vsub.f32 %v1326, %v1586
        %v1609 = vsub.f32 %v1331, %v1589
        %v1610 = vsub.f32 %v1409, %v1592
        %v1611 = vsub.f32 %v1414, %v1595
        %v1612 = vsub.f32 %v1492, %v1598
        %v1613 = vsub.f32 %v1497, %v1601
        %v1614 = vsub.f32 %v1575, %v1604
        %v1615 = vsub.f32 %v1580, %v1607
        %v1616 = vmul.f32 %v1608, 1.442695
        %v1617 = vpow.pop %v1616
        %v1618 = vmul.f32 %v1609, 1.442695
        %v1619 = vpow.pop %v1618
        %v1620 = vmul.f32 %v1610, 1.442695
        %v1621 = vpow.pop %v1620
        %v1622 = vmul.f32 %v1611, 1.442695
        %v1623 = vpow.pop %v1622
        %v1624 = vmul.f32 %v1612, 1.442695
        %v1625 = vpow.pop %v1624
        %v1626 = vmul.f32 %v1613, 1.442695
        %v1627 = vpow.pop %v1626
        %v1628 = vmul.f32 %v1614, 1.442695
        %v1629 = vpow.pop %v1628
        %v1630 = vmul.f32 %v1615, 1.442695
        %v1631 = vpow.pop %v1630
        %v1632 = vsel %vm1583, %v1617, 0.0
        %1633 = vadd.xlane.f32.xlu0 %v1632
        %v1634 = vpop.xlane.xlu0 %1633
        %v1635 = vsel %vm1583, %v1619, 0.0
        %1636 = vadd.xlane.f32.xlu0 %v1635
        %v1637 = vpop.xlane.xlu0 %1636
        %v1638 = vsel %vm1583, %v1621, 0.0
        %1639 = vadd.xlane.f32.xlu0 %v1638
        %v1640 = vpop.xlane.xlu0 %1639
        %v1641 = vsel %vm1583, %v1623, 0.0
        %1642 = vadd.xlane.f32.xlu0 %v1641
        %v1643 = vpop.xlane.xlu0 %1642
        %v1644 = vsel %vm1583, %v1625, 0.0
        %1645 = vadd.xlane.f32.xlu0 %v1644
        %v1646 = vpop.xlane.xlu0 %1645
        %v1647 = vsel %vm1583, %v1627, 0.0
        %1648 = vadd.xlane.f32.xlu0 %v1647
        %v1649 = vpop.xlane.xlu0 %1648
        %v1650 = vsel %vm1583, %v1629, 0.0
        %1651 = vadd.xlane.f32.xlu0 %v1650
        %v1652 = vpop.xlane.xlu0 %1651
        %v1653 = vsel %vm1583, %v1631, 0.0
        %1654 = vadd.xlane.f32.xlu0 %v1653
        %v1655 = vpop.xlane.xlu0 %1654
        %v1656 = vrcp.pop %v1634
        %v1657 = vrcp.pop %v1637
        %v1658 = vrcp.pop %v1640
        %v1659 = vrcp.pop %v1643
        %v1660 = vrcp.pop %v1646
        %v1661 = vrcp.pop %v1649
        %v1662 = vrcp.pop %v1652
        %v1663 = vrcp.pop %v1655
        %v1664 = vmul.f32 %v1617, %v1656
        %v1665 = vmul.f32 %v1619, %v1657
        %v1666 = vmul.f32 %v1621, %v1658
        %v1667 = vmul.f32 %v1623, %v1659
        %v1668 = vmul.f32 %v1625, %v1660
        %v1669 = vmul.f32 %v1627, %v1661
        %v1670 = vmul.f32 %v1629, %v1662
        %v1671 = vmul.f32 %v1631, %v1663
        %v1672 = vmul.f32 %v1664, %v878
        %v1673 = vmul.f32 %v1665, %v879
        %v1674 = vmul.f32 %v1666, %v878
        %v1675 = vmul.f32 %v1667, %v879
        %v1676 = vmul.f32 %v1668, %v878
        %v1677 = vmul.f32 %v1669, %v879
        %v1678 = vmul.f32 %v1670, %v878
        %v1679 = vmul.f32 %v1671, %v879
        %v1681 = vsel %vm1583, %v1672, 0
        %v1684 = vsel %vm1583, %v1673, 0
        %1686 = vmatprep.subr.mxu0 0.0
        %1687 = vmatpush1.msra.mxu0 %v1196
        %1688 = vmatprep.subr.mxu0 0.0
        %1689 = vmatpush1.msra.mxu0 %v1199
        %1690 = vmatprep.subr.mxu0 0.0
        %1691 = vmatpush1.msra.mxu0 0.0
        %1692 = vmatprep.subr.mxu0 0.0
        %1693 = vmatpush1.msra.mxu0 0.0
        %1694 = vmatprep.subr.mxu0 0.0
        %1695 = vmatpush1.msra.mxu0 0.0
        %1696 = vmatprep.subr.mxu0 0.0
        %1697 = vmatpush1.msra.mxu0 0.0
        %1698 = vmatprep.subr.mxu0 0.0
        %1699 = vmatpush1.msra.mxu0 0.0
        %1700 = vmatprep.subr.mxu0 0.0
        %1701 = vmatpush1.msra.mxu0 0.0
        %1702 = vmatprep.subr.mxu0 0.0
        %1703 = vmatpush1.msra.mxu0 0.0
        %1704 = vmatprep.subr.mxu0 0.0
        %1705 = vmatpush1.msra.mxu0 0.0
        %1706 = vmatprep.subr.mxu0 0.0
        %1707 = vmatpush1.msra.mxu0 0.0
        %1708 = vmatprep.subr.mxu0 0.0
        %1709 = vmatpush1.msra.mxu0 0.0
        %1710 = vmatprep.subr.mxu0 0.0
        %1711 = vmatpush1.msra.mxu0 0.0
        %1712 = vmatprep.subr.mxu0 0.0
        %1713 = vmatpush1.msra.mxu0 0.0
        %1714 = vmatprep.subr.mxu0 0.0
        %1715 = vmatpush1.msra.mxu0 0.0
        %1716 = vmatprep.subr.mxu0 0.0
        %1717 = vmatpush1.msra.mxu0 0.0
        %1718 = vmatprep.subr.mxu0 0.0
        %1719 = vmatpush1.msra.mxu0 0.0
        %1720 = vmatprep.subr.mxu0 0.0
        %1721 = vmatpush1.msra.mxu0 0.0
        %1722 = vmatprep.subr.mxu0 0.0
        %1723 = vmatpush1.msra.mxu0 0.0
        %1724 = vmatprep.subr.mxu0 0.0
        %1725 = vmatpush1.msra.mxu0 0.0
        %1726 = vmatprep.subr.mxu0 0.0
        %1727 = vmatpush1.msra.mxu0 0.0
        %1728 = vmatprep.subr.mxu0 0.0
        %1729 = vmatpush1.msra.mxu0 0.0
        %1730 = vmatprep.subr.mxu0 0.0
        %1731 = vmatpush1.msra.mxu0 0.0
        %1732 = vmatprep.subr.mxu0 0.0
        %1733 = vmatpush1.msra.mxu0 0.0
        %1734 = vmatprep.subr.mxu0 0.0
        %1735 = vmatpush1.msra.mxu0 0.0
        %1736 = vmatprep.subr.mxu0 0.0
        %1737 = vmatpush1.msra.mxu0 0.0
        %1738 = vmatprep.subr.mxu0 0.0
        %1739 = vmatpush1.msra.mxu0 0.0
        %1740 = vmatprep.subr.mxu0 0.0
        %1741 = vmatpush1.msra.mxu0 0.0
        %1742 = vmatprep.subr.mxu0 0.0
        %1743 = vmatpush1.msra.mxu0 0.0
        %1744 = vmatprep.subr.mxu0 0.0
        %1745 = vmatpush1.msra.mxu0 0.0
        %1746 = vmatprep.subr.mxu0 0.0
        %1747 = vmatpush1.msra.mxu0 0.0
        %1748 = vmatprep.subr.mxu0 0.0
        %1749 = vmatpush1.msra.mxu0 0.0
        %1750 = vmatprep.mubr.f32.mxu0 0.0
        %1751 = vmatmul.mubr.f32.gmra.mrb[0].mxu0 %v1681
        %v1752 = vpop.f32.mrb[0].mxu0
        %v1753 = vadd.f32 0.0, %v1752
        %v1754 = vpop.f32.mrb[0].mxu0
        %1755 = vmatprep.mubr.f32.mxu0 0.0
        %1756 = vmatmul.mubr.f32.gmra.mrb[0].mxu0 %v1684
        %v1757 = vpop.f32.mrb[0].mxu0
        %v1758 = vadd.f32 0.0, %v1757
        %v1759 = vpop.f32.mrb[0].mxu0
        %1760 = vdwg.mxu0
        %v1762 = vsel %vm1583, %v1674, 0
        %v1765 = vsel %vm1583, %v1675, 0
        %1767 = vmatprep.subr.mxu0 0.0
        %1768 = vmatpush1.msra.mxu0 %v1233
        %1769 = vmatprep.subr.mxu0 0.0
        %1770 = vmatpush1.msra.mxu0 %v1235
        %1771 = vmatprep.subr.mxu0 0.0
        %1772 = vmatpush1.msra.mxu0 0.0
        %1773 = vmatprep.subr.mxu0 0.0
        %1774 = vmatpush1.msra.mxu0 0.0
        %1775 = vmatprep.subr.mxu0 0.0
        %1776 = vmatpush1.msra.mxu0 0.0
        %1777 = vmatprep.subr.mxu0 0.0
        %1778 = vmatpush1.msra.mxu0 0.0
        %1779 = vmatprep.subr.mxu0 0.0
        %1780 = vmatpush1.msra.mxu0 0.0
        %1781 = vmatprep.subr.mxu0 0.0
        %1782 = vmatpush1.msra.mxu0 0.0
        %1783 = vmatprep.subr.mxu0 0.0
        %1784 = vmatpush1.msra.mxu0 0.0
        %1785 = vmatprep.subr.mxu0 0.0
        %1786 = vmatpush1.msra.mxu0 0.0
        %1787 = vmatprep.subr.mxu0 0.0
        %1788 = vmatpush1.msra.mxu0 0.0
        %1789 = vmatprep.subr.mxu0 0.0
        %1790 = vmatpush1.msra.mxu0 0.0
        %1791 = vmatprep.subr.mxu0 0.0
        %1792 = vmatpush1.msra.mxu0 0.0
        %1793 = vmatprep.subr.mxu0 0.0
        %1794 = vmatpush1.msra.mxu0 0.0
        %1795 = vmatprep.subr.mxu0 0.0
        %1796 = vmatpush1.msra.mxu0 0.0
        %1797 = vmatprep.subr.mxu0 0.0
        %1798 = vmatpush1.msra.mxu0 0.0
        %1799 = vmatprep.subr.mxu0 0.0
        %1800 = vmatpush1.msra.mxu0 0.0
        %1801 = vmatprep.subr.mxu0 0.0
        %1802 = vmatpush1.msra.mxu0 0.0
        %1803 = vmatprep.subr.mxu0 0.0
        %1804 = vmatpush1.msra.mxu0 0.0
        %1805 = vmatprep.subr.mxu0 0.0
        %1806 = vmatpush1.msra.mxu0 0.0
        %1807 = vmatprep.subr.mxu0 0.0
        %1808 = vmatpush1.msra.mxu0 0.0
        %1809 = vmatprep.subr.mxu0 0.0
        %1810 = vmatpush1.msra.mxu0 0.0
        %1811 = vmatprep.subr.mxu0 0.0
        %1812 = vmatpush1.msra.mxu0 0.0
        %1813 = vmatprep.subr.mxu0 0.0
        %1814 = vmatpush1.msra.mxu0 0.0
        %1815 = vmatprep.subr.mxu0 0.0
        %1816 = vmatpush1.msra.mxu0 0.0
        %1817 = vmatprep.subr.mxu0 0.0
        %1818 = vmatpush1.msra.mxu0 0.0
        %1819 = vmatprep.subr.mxu0 0.0
        %1820 = vmatpush1.msra.mxu0 0.0
        %1821 = vmatprep.subr.mxu0 0.0
        %1822 = vmatpush1.msra.mxu0 0.0
        %1823 = vmatprep.subr.mxu0 0.0
        %1824 = vmatpush1.msra.mxu0 0.0
        %1825 = vmatprep.subr.mxu0 0.0
        %1826 = vmatpush1.msra.mxu0 0.0
        %1827 = vmatprep.subr.mxu0 0.0
        %1828 = vmatpush1.msra.mxu0 0.0
        %1829 = vmatprep.subr.mxu0 0.0
        %1830 = vmatpush1.msra.mxu0 0.0
        %1831 = vmatprep.mubr.f32.mxu0 0.0
        %1832 = vmatmul.mubr.f32.gmra.mrb[0].mxu0 %v1762
        %v1833 = vpop.f32.mrb[0].mxu0
        %v1834 = vadd.f32 0.0, %v1833
        %v1835 = vpop.f32.mrb[0].mxu0
        %1836 = vmatprep.mubr.f32.mxu0 0.0
        %1837 = vmatmul.mubr.f32.gmra.mrb[0].mxu0 %v1765
        %v1838 = vpop.f32.mrb[0].mxu0
        %v1839 = vadd.f32 0.0, %v1838
        %v1840 = vpop.f32.mrb[0].mxu0
        %1841 = vdwg.mxu0
        %v1843 = vsel %vm1583, %v1676, 0
        %v1846 = vsel %vm1583, %v1677, 0
        %1848 = vmatprep.subr.mxu0 0.0
        %1849 = vmatpush1.msra.mxu0 %v1239
        %1850 = vmatprep.subr.mxu0 0.0
        %1851 = vmatpush1.msra.mxu0 %v1241
        %1852 = vmatprep.subr.mxu0 0.0
        %1853 = vmatpush1.msra.mxu0 0.0
        %1854 = vmatprep.subr.mxu0 0.0
        %1855 = vmatpush1.msra.mxu0 0.0
        %1856 = vmatprep.subr.mxu0 0.0
        %1857 = vmatpush1.msra.mxu0 0.0
        %1858 = vmatprep.subr.mxu0 0.0
        %1859 = vmatpush1.msra.mxu0 0.0
        %1860 = vmatprep.subr.mxu0 0.0
        %1861 = vmatpush1.msra.mxu0 0.0
        %1862 = vmatprep.subr.mxu0 0.0
        %1863 = vmatpush1.msra.mxu0 0.0
        %1864 = vmatprep.subr.mxu0 0.0
        %1865 = vmatpush1.msra.mxu0 0.0
        %1866 = vmatprep.subr.mxu0 0.0
        %1867 = vmatpush1.msra.mxu0 0.0
        %1868 = vmatprep.subr.mxu0 0.0
        %1869 = vmatpush1.msra.mxu0 0.0
        %1870 = vmatprep.subr.mxu0 0.0
        %1871 = vmatpush1.msra.mxu0 0.0
        %1872 = vmatprep.subr.mxu0 0.0
        %1873 = vmatpush1.msra.mxu0 0.0
        %1874 = vmatprep.subr.mxu0 0.0
        %1875 = vmatpush1.msra.mxu0 0.0
        %1876 = vmatprep.subr.mxu0 0.0
        %1877 = vmatpush1.msra.mxu0 0.0
        %1878 = vmatprep.subr.mxu0 0.0
        %1879 = vmatpush1.msra.mxu0 0.0
        %1880 = vmatprep.subr.mxu0 0.0
        %1881 = vmatpush1.msra.mxu0 0.0
        %1882 = vmatprep.subr.mxu0 0.0
        %1883 = vmatpush1.msra.mxu0 0.0
        %1884 = vmatprep.subr.mxu0 0.0
        %1885 = vmatpush1.msra.mxu0 0.0
        %1886 = vmatprep.subr.mxu0 0.0
        %1887 = vmatpush1.msra.mxu0 0.0
        %1888 = vmatprep.subr.mxu0 0.0
        %1889 = vmatpush1.msra.mxu0 0.0
        %1890 = vmatprep.subr.mxu0 0.0
        %1891 = vmatpush1.msra.mxu0 0.0
        %1892 = vmatprep.subr.mxu0 0.0
        %1893 = vmatpush1.msra.mxu0 0.0
        %1894 = vmatprep.subr.mxu0 0.0
        %1895 = vmatpush1.msra.mxu0 0.0
        %1896 = vmatprep.subr.mxu0 0.0
        %1897 = vmatpush1.msra.mxu0 0.0
        %1898 = vmatprep.subr.mxu0 0.0
        %1899 = vmatpush1.msra.mxu0 0.0
        %1900 = vmatprep.subr.mxu0 0.0
        %1901 = vmatpush1.msra.mxu0 0.0
        %1902 = vmatprep.subr.mxu0 0.0
        %1903 = vmatpush1.msra.mxu0 0.0
        %1904 = vmatprep.subr.mxu0 0.0
        %1905 = vmatpush1.msra.mxu0 0.0
        %1906 = vmatprep.subr.mxu0 0.0
        %1907 = vmatpush1.msra.mxu0 0.0
        %1908 = vmatprep.subr.mxu0 0.0
        %1909 = vmatpush1.msra.mxu0 0.0
        %1910 = vmatprep.subr.mxu0 0.0
        %1911 = vmatpush1.msra.mxu0 0.0
        %1912 = vmatprep.mubr.f32.mxu0 0.0
        %1913 = vmatmul.mubr.f32.gmra.mrb[0].mxu0 %v1843
        %v1914 = vpop.f32.mrb[0].mxu0
        %v1915 = vadd.f32 0.0, %v1914
        %v1916 = vpop.f32.mrb[0].mxu0
        %1917 = vmatprep.mubr.f32.mxu0 0.0
        %1918 = vmatmul.mubr.f32.gmra.mrb[0].mxu0 %v1846
        %v1919 = vpop.f32.mrb[0].mxu0
        %v1920 = vadd.f32 0.0, %v1919
        %v1921 = vpop.f32.mrb[0].mxu0
        %1922 = vdwg.mxu0
        %v1924 = vsel %vm1583, %v1678, 0
        %v1927 = vsel %vm1583, %v1679, 0
        %1929 = vmatprep.subr.mxu0 0.0
        %1930 = vmatpush1.msra.mxu0 %v1245
        %1931 = vmatprep.subr.mxu0 0.0
        %1932 = vmatpush1.msra.mxu0 %v1247
        %1933 = vmatprep.subr.mxu0 0.0
        %1934 = vmatpush1.msra.mxu0 0.0
        %1935 = vmatprep.subr.mxu0 0.0
        %1936 = vmatpush1.msra.mxu0 0.0
        %1937 = vmatprep.subr.mxu0 0.0
        %1938 = vmatpush1.msra.mxu0 0.0
        %1939 = vmatprep.subr.mxu0 0.0
        %1940 = vmatpush1.msra.mxu0 0.0
        %1941 = vmatprep.subr.mxu0 0.0
        %1942 = vmatpush1.msra.mxu0 0.0
        %1943 = vmatprep.subr.mxu0 0.0
        %1944 = vmatpush1.msra.mxu0 0.0
        %1945 = vmatprep.subr.mxu0 0.0
        %1946 = vmatpush1.msra.mxu0 0.0
        %1947 = vmatprep.subr.mxu0 0.0
        %1948 = vmatpush1.msra.mxu0 0.0
        %1949 = vmatprep.subr.mxu0 0.0
        %1950 = vmatpush1.msra.mxu0 0.0
        %1951 = vmatprep.subr.mxu0 0.0
        %1952 = vmatpush1.msra.mxu0 0.0
        %1953 = vmatprep.subr.mxu0 0.0
        %1954 = vmatpush1.msra.mxu0 0.0
        %1955 = vmatprep.subr.mxu0 0.0
        %1956 = vmatpush1.msra.mxu0 0.0
        %1957 = vmatprep.subr.mxu0 0.0
        %1958 = vmatpush1.msra.mxu0 0.0
        %1959 = vmatprep.subr.mxu0 0.0
        %1960 = vmatpush1.msra.mxu0 0.0
        %1961 = vmatprep.subr.mxu0 0.0
        %1962 = vmatpush1.msra.mxu0 0.0
        %1963 = vmatprep.subr.mxu0 0.0
        %1964 = vmatpush1.msra.mxu0 0.0
        %1965 = vmatprep.subr.mxu0 0.0
        %1966 = vmatpush1.msra.mxu0 0.0
        %1967 = vmatprep.subr.mxu0 0.0
        %1968 = vmatpush1.msra.mxu0 0.0
        %1969 = vmatprep.subr.mxu0 0.0
        %1970 = vmatpush1.msra.mxu0 0.0
        %1971 = vmatprep.subr.mxu0 0.0
        %1972 = vmatpush1.msra.mxu0 0.0
        %1973 = vmatprep.subr.mxu0 0.0
        %1974 = vmatpush1.msra.mxu0 0.0
        %1975 = vmatprep.subr.mxu0 0.0
        %1976 = vmatpush1.msra.mxu0 0.0
        %1977 = vmatprep.subr.mxu0 0.0
        %1978 = vmatpush1.msra.mxu0 0.0
        %1979 = vmatprep.subr.mxu0 0.0
        %1980 = vmatpush1.msra.mxu0 0.0
        %1981 = vmatprep.subr.mxu0 0.0
        %1982 = vmatpush1.msra.mxu0 0.0
        %1983 = vmatprep.subr.mxu0 0.0
        %1984 = vmatpush1.msra.mxu0 0.0
        %1985 = vmatprep.subr.mxu0 0.0
        %1986 = vmatpush1.msra.mxu0 0.0
        %1987 = vmatprep.subr.mxu0 0.0
        %1988 = vmatpush1.msra.mxu0 0.0
        %1989 = vmatprep.subr.mxu0 0.0
        %1990 = vmatpush1.msra.mxu0 0.0
        %1991 = vmatprep.subr.mxu0 0.0
        %1992 = vmatpush1.msra.mxu0 0.0
        %1993 = vmatprep.mubr.f32.mxu0 0.0
        %1994 = vmatmul.mubr.f32.gmra.mrb[0].mxu0 %v1924
        %v1995 = vpop.f32.mrb[0].mxu0
        %v1996 = vadd.f32 0.0, %v1995
        %v1997 = vpop.f32.mrb[0].mxu0
        %1998 = vmatprep.mubr.f32.mxu0 0.0
        %1999 = vmatmul.mubr.f32.gmra.mrb[0].mxu0 %v1927
        %v2000 = vpop.f32.mrb[0].mxu0
        %v2001 = vadd.f32 0.0, %v2000
        %v2002 = vpop.f32.mrb[0].mxu0
        %2003 = vdwg.mxu0
        %v2004 = vld [vmem:[%s673] sm:$0xf]
        %v2005 = vld [vmem:[%s673 + $0x4] sm:$0xf]
        %v2006 = vld [vmem:[%s673 + $0x8] sm:$0xf]
        %v2007 = vld [vmem:[%s673 + $0xc] sm:$0xf]
        %v2008 = vld [vmem:[%s673 + $0x10] sm:$0xf]
        %v2009 = vld [vmem:[%s673 + $0x14] sm:$0xf]
        %v2010 = vld [vmem:[%s673 + $0x18] sm:$0xf]
        %v2011 = vld [vmem:[%s673 + $0x1c] sm:$0xf]
        %v2012 = vld [vmem:[%s673 + $0x20] sm:$0xf]
        %v2013 = vld [vmem:[%s673 + $0x24] sm:$0xf]
        %v2014 = vld [vmem:[%s673 + $0x28] sm:$0xf]
        %v2015 = vld [vmem:[%s673 + $0x2c] sm:$0xf]
        %v2016 = vld [vmem:[%s673 + $0x30] sm:$0xf]
        %v2017 = vld [vmem:[%s673 + $0x34] sm:$0xf]
        %v2018 = vld [vmem:[%s673 + $0x38] sm:$0xf]
        %v2019 = vld [vmem:[%s673 + $0x3c] sm:$0xf]
        %v2020 = vpack.c.bf16 %v1758, %v1753
        %v2021 = vpack.c.bf16 %v1839, %v1834
        %v2026 = vunpack.c.l.b16 %v2008
        %v2027 = vunpack.c.l.b16 %v2009
        %v2028 = vunpack.c.l.b16 %v2010
        %v2029 = vunpack.c.l.b16 %v2011
        %v2030 = vpack.c.b16 %v2027, %v2026
        %v2031 = vpack.c.b16 %v2029, %v2028
        %v2035 = vsel %vm1250, %v2021, 0
        %2037 = vmatprep.subr.bf16.mxu0 0
        %2038 = vmatpush1.bf16.msra.mxu0 %v2030
        %2039 = vmatprep.subr.bf16.mxu0 0
        %2040 = vmatpush1.bf16.msra.mxu0 %v2031
        %2041 = vmatprep.subr.bf16.mxu0 0
        %2042 = vmatpush1.bf16.msra.mxu0 0
        %2043 = vmatprep.subr.bf16.mxu0 0
        %2044 = vmatpush1.bf16.msra.mxu0 0
        %2045 = vmatprep.subr.bf16.mxu0 0
        %2046 = vmatpush1.bf16.msra.mxu0 0
        %2047 = vmatprep.subr.bf16.mxu0 0
        %2048 = vmatpush1.bf16.msra.mxu0 0
        %2049 = vmatprep.subr.bf16.mxu0 0
        %2050 = vmatpush1.bf16.msra.mxu0 0
        %2051 = vmatprep.subr.bf16.mxu0 0
        %2052 = vmatpush1.bf16.msra.mxu0 0
        %2053 = vmatprep.subr.bf16.mxu0 0
        %2054 = vmatpush1.bf16.msra.mxu0 0
        %2055 = vmatprep.subr.bf16.mxu0 0
        %2056 = vmatpush1.bf16.msra.mxu0 0
        %2057 = vmatprep.subr.bf16.mxu0 0
        %2058 = vmatpush1.bf16.msra.mxu0 0
        %2059 = vmatprep.subr.bf16.mxu0 0
        %2060 = vmatpush1.bf16.msra.mxu0 0
        %2061 = vmatprep.subr.bf16.mxu0 0
        %2062 = vmatpush1.bf16.msra.mxu0 0
        %2063 = vmatprep.subr.bf16.mxu0 0
        %2064 = vmatpush1.bf16.msra.mxu0 0
        %2065 = vmatprep.subr.bf16.mxu0 0
        %2066 = vmatpush1.bf16.msra.mxu0 0
        %2067 = vmatprep.subr.bf16.mxu0 0
        %2068 = vmatpush1.bf16.msra.mxu0 0
        %2069 = vmatprep.mubr.bf16.mxu0 0
        %2070 = vmatmul.mubr.bf16.gmra.mrb[0].mxu0 %v2035
        %v2071 = vpop.f32.mrb[0].mxu0
        %v2072 = vadd.f32 0.0, %v2071
        %v2073 = vpop.f32.mrb[0].mxu0
        %v2074 = vpop.f32.mrb[0].mxu0
        %v2075 = vadd.f32 0.0, %v2074
        %v2076 = vpop.f32.mrb[0].mxu0
        %2077 = vdwg.mxu0
        %v2082 = vunpack.c.l.b16 %v2004
        %v2083 = vunpack.c.l.b16 %v2005
        %v2084 = vunpack.c.l.b16 %v2006
        %v2085 = vunpack.c.l.b16 %v2007
        %v2086 = vpack.c.b16 %v2083, %v2082
        %v2087 = vpack.c.b16 %v2085, %v2084
        %v2091 = vsel %vm1250, %v2020, 0
        %2093 = vmatprep.subr.bf16.mxu0 0
        %2094 = vmatpush1.bf16.msra.mxu0 %v2086
        %2095 = vmatprep.subr.bf16.mxu0 0
        %2096 = vmatpush1.bf16.msra.mxu0 %v2087
        %2097 = vmatprep.subr.bf16.mxu0 0
        %2098 = vmatpush1.bf16.msra.mxu0 0
        %2099 = vmatprep.subr.bf16.mxu0 0
        %2100 = vmatpush1.bf16.msra.mxu0 0
        %2101 = vmatprep.subr.bf16.mxu0 0
        %2102 = vmatpush1.bf16.msra.mxu0 0
        %2103 = vmatprep.subr.bf16.mxu0 0
        %2104 = vmatpush1.bf16.msra.mxu0 0
        %2105 = vmatprep.subr.bf16.mxu0 0
        %2106 = vmatpush1.bf16.msra.mxu0 0
        %2107 = vmatprep.subr.bf16.mxu0 0
        %2108 = vmatpush1.bf16.msra.mxu0 0
        %2109 = vmatprep.subr.bf16.mxu0 0
        %2110 = vmatpush1.bf16.msra.mxu0 0
        %2111 = vmatprep.subr.bf16.mxu0 0
        %2112 = vmatpush1.bf16.msra.mxu0 0
        %2113 = vmatprep.subr.bf16.mxu0 0
        %2114 = vmatpush1.bf16.msra.mxu0 0
        %2115 = vmatprep.subr.bf16.mxu0 0
        %2116 = vmatpush1.bf16.msra.mxu0 0
        %2117 = vmatprep.subr.bf16.mxu0 0
        %2118 = vmatpush1.bf16.msra.mxu0 0
        %2119 = vmatprep.subr.bf16.mxu0 0
        %2120 = vmatpush1.bf16.msra.mxu0 0
        %2121 = vmatprep.subr.bf16.mxu0 0
        %2122 = vmatpush1.bf16.msra.mxu0 0
        %2123 = vmatprep.subr.bf16.mxu0 0
        %2124 = vmatpush1.bf16.msra.mxu0 0
        %2125 = vmatprep.mubr.bf16.mxu0 0
        %2126 = vmatmul.mubr.bf16.gmra.mrb[0].mxu0 %v2091
        %v2127 = vpop.f32.mrb[0].mxu0
        %v2128 = vadd.f32 %v2072, %v2127
        %v2129 = vpop.f32.mrb[0].mxu0
        %v2130 = vpop.f32.mrb[0].mxu0
        %v2131 = vadd.f32 %v2075, %v2130
        %v2132 = vpop.f32.mrb[0].mxu0
        %2133 = vdwg.mxu0
        %v2134 = vpack.c.bf16 %v1920, %v1915
        %v2139 = vunpack.c.l.b16 %v2012
        %v2140 = vunpack.c.l.b16 %v2013
        %v2141 = vunpack.c.l.b16 %v2014
        %v2142 = vunpack.c.l.b16 %v2015
        %v2143 = vpack.c.b16 %v2140, %v2139
        %v2144 = vpack.c.b16 %v2142, %v2141
        %v2148 = vsel %vm1250, %v2134, 0
        %2150 = vmatprep.subr.bf16.mxu0 0
        %2151 = vmatpush1.bf16.msra.mxu0 %v2143
        %2152 = vmatprep.subr.bf16.mxu0 0
        %2153 = vmatpush1.bf16.msra.mxu0 %v2144
        %2154 = vmatprep.subr.bf16.mxu0 0
        %2155 = vmatpush1.bf16.msra.mxu0 0
        %2156 = vmatprep.subr.bf16.mxu0 0
        %2157 = vmatpush1.bf16.msra.mxu0 0
        %2158 = vmatprep.subr.bf16.mxu0 0
        %2159 = vmatpush1.bf16.msra.mxu0 0
        %2160 = vmatprep.subr.bf16.mxu0 0
        %2161 = vmatpush1.bf16.msra.mxu0 0
        %2162 = vmatprep.subr.bf16.mxu0 0
        %2163 = vmatpush1.bf16.msra.mxu0 0
        %2164 = vmatprep.subr.bf16.mxu0 0
        %2165 = vmatpush1.bf16.msra.mxu0 0
        %2166 = vmatprep.subr.bf16.mxu0 0
        %2167 = vmatpush1.bf16.msra.mxu0 0
        %2168 = vmatprep.subr.bf16.mxu0 0
        %2169 = vmatpush1.bf16.msra.mxu0 0
        %2170 = vmatprep.subr.bf16.mxu0 0
        %2171 = vmatpush1.bf16.msra.mxu0 0
        %2172 = vmatprep.subr.bf16.mxu0 0
        %2173 = vmatpush1.bf16.msra.mxu0 0
        %2174 = vmatprep.subr.bf16.mxu0 0
        %2175 = vmatpush1.bf16.msra.mxu0 0
        %2176 = vmatprep.subr.bf16.mxu0 0
        %2177 = vmatpush1.bf16.msra.mxu0 0
        %2178 = vmatprep.subr.bf16.mxu0 0
        %2179 = vmatpush1.bf16.msra.mxu0 0
        %2180 = vmatprep.subr.bf16.mxu0 0
        %2181 = vmatpush1.bf16.msra.mxu0 0
        %2182 = vmatprep.mubr.bf16.mxu0 0
        %2183 = vmatmul.mubr.bf16.gmra.mrb[0].mxu0 %v2148
        %v2184 = vpop.f32.mrb[0].mxu0
        %v2185 = vadd.f32 0.0, %v2184
        %v2186 = vpop.f32.mrb[0].mxu0
        %v2187 = vpop.f32.mrb[0].mxu0
        %v2188 = vadd.f32 0.0, %v2187
        %v2189 = vpop.f32.mrb[0].mxu0
        %2190 = vdwg.mxu0
        %v2191 = vadd.f32 %v2128, %v2185
        %v2192 = vadd.f32 %v2131, %v2188
        %v2193 = vpack.c.bf16 %v2001, %v1996
        %v2198 = vunpack.c.l.b16 %v2016
        %v2199 = vunpack.c.l.b16 %v2017
        %v2200 = vunpack.c.l.b16 %v2018
        %v2201 = vunpack.c.l.b16 %v2019
        %v2202 = vpack.c.b16 %v2199, %v2198
        %v2203 = vpack.c.b16 %v2201, %v2200
        %v2207 = vsel %vm1250, %v2193, 0
        %2209 = vmatprep.subr.bf16.mxu0 0
        %2210 = vmatpush1.bf16.msra.mxu0 %v2202
        %2211 = vmatprep.subr.bf16.mxu0 0
        %2212 = vmatpush1.bf16.msra.mxu0 %v2203
        %2213 = vmatprep.subr.bf16.mxu0 0
        %2214 = vmatpush1.bf16.msra.mxu0 0
        %2215 = vmatprep.subr.bf16.mxu0 0
        %2216 = vmatpush1.bf16.msra.mxu0 0
        %2217 = vmatprep.subr.bf16.mxu0 0
        %2218 = vmatpush1.bf16.msra.mxu0 0
        %2219 = vmatprep.subr.bf16.mxu0 0
        %2220 = vmatpush1.bf16.msra.mxu0 0
        %2221 = vmatprep.subr.bf16.mxu0 0
        %2222 = vmatpush1.bf16.msra.mxu0 0
        %2223 = vmatprep.subr.bf16.mxu0 0
        %2224 = vmatpush1.bf16.msra.mxu0 0
        %2225 = vmatprep.subr.bf16.mxu0 0
        %2226 = vmatpush1.bf16.msra.mxu0 0
        %2227 = vmatprep.subr.bf16.mxu0 0
        %2228 = vmatpush1.bf16.msra.mxu0 0
        %2229 = vmatprep.subr.bf16.mxu0 0
        %2230 = vmatpush1.bf16.msra.mxu0 0
        %2231 = vmatprep.subr.bf16.mxu0 0
        %2232 = vmatpush1.bf16.msra.mxu0 0
        %2233 = vmatprep.subr.bf16.mxu0 0
        %2234 = vmatpush1.bf16.msra.mxu0 0
        %2235 = vmatprep.subr.bf16.mxu0 0
        %2236 = vmatpush1.bf16.msra.mxu0 0
        %2237 = vmatprep.subr.bf16.mxu0 0
        %2238 = vmatpush1.bf16.msra.mxu0 0
        %2239 = vmatprep.subr.bf16.mxu0 0
        %2240 = vmatpush1.bf16.msra.mxu0 0
        %2241 = vmatprep.mubr.bf16.mxu0 0
        %2242 = vmatmul.mubr.bf16.gmra.mrb[0].mxu0 %v2207
        %v2243 = vpop.f32.mrb[0].mxu0
        %v2244 = vadd.f32 0.0, %v2243
        %v2245 = vpop.f32.mrb[0].mxu0
        %v2246 = vpop.f32.mrb[0].mxu0
        %v2247 = vadd.f32 0.0, %v2246
        %v2248 = vpop.f32.mrb[0].mxu0
        %2249 = vdwg.mxu0
        %v2250 = vadd.f32 %v2191, %v2244
        %v2251 = vadd.f32 %v2192, %v2247
        %v2252 = vmul.f32 %v2250, %v867
        %v2253 = vmul.f32 %v2251, %v872
        %v2254 = vadd.f32 %v828, %v2252
        %v2255 = vadd.f32 %v829, %v2253
        %v2256 = vld [vmem:[%s802] sm:$0x1]
        %v2257 = vld [vmem:[%s805] sm:$0x1]
        %2258 = vadd.xlane.f32.xlu0 %v2254
        %v2259 = vpop.xlane.xlu0 %2258
        %2260 = vadd.xlane.f32.xlu0 %v2255
        %v2261 = vpop.xlane.xlu0 %2260
        %v2262 = vrcp.pop 128.0
        %v2263 = vmul.f32 %v2259, %v2262
        %v2264 = vmul.f32 %v2261, %v2262
        %v2265 = vsub.f32 %v2254, %v2263
        %v2266 = vsub.f32 %v2255, %v2264
        %v2267 = vmul.f32 %v2265, %v2265
        %v2268 = vmul.f32 %v2266, %v2266
        %2269 = vadd.xlane.f32.xlu0 %v2267
        %v2270 = vpop.xlane.xlu0 %2269
        %2271 = vadd.xlane.f32.xlu0 %v2268
        %v2272 = vpop.xlane.xlu0 %2271
        %v2273 = vmul.f32 %v2270, %v2262
        %v2274 = vmul.f32 %v2272, %v2262
        %v2275 = vadd.f32 %v2273, 1e-05
        %v2276 = vadd.f32 %v2274, 1e-05
        %v2277 = vrsqrt.pop %v2275
        %v2278 = vrsqrt.pop %v2276
        %v2279 = vmul.f32 %v2265, %v2277
        %v2280 = vmul.f32 %v2266, %v2278
        %v2282 = vlaneseq
        %v2283 = vshrl.u32 %v2282, 7
        %v2284 = vsub.s32 0, %v2283
        %v2285 = vrot.slane %v2256, %v2284
        %v2287 = vmul.f32 %v2279, %v2285
        %v2288 = vmul.f32 %v2280, %v2285
        %v2290 = vlaneseq
        %v2291 = vshrl.u32 %v2290, 7
        %v2292 = vsub.s32 0, %v2291
        %v2293 = vrot.slane %v2257, %v2292
        %v2295 = vadd.f32 %v2287, %v2293
        %v2296 = vadd.f32 %v2288, %v2293
        %v2297 = vmul.f32 %v2295, %v867
        %v2298 = vmul.f32 %v2296, %v872
        %v2299 = vld [vmem:[%s682] sm:$0xff]
        %v2300 = vld [vmem:[%s682 + $0x8] sm:$0xff]
        %v2301 = vld [vmem:[%s682 + $0x10] sm:$0xff]
        %v2302 = vld [vmem:[%s682 + $0x18] sm:$0xff]
        %v2303 = vld [vmem:[%s682 + $0x20] sm:$0xff]
        %v2304 = vld [vmem:[%s682 + $0x28] sm:$0xff]
        %v2305 = vld [vmem:[%s682 + $0x30] sm:$0xff]
        %v2306 = vld [vmem:[%s682 + $0x38] sm:$0xff]
        %v2307 = vld [vmem:[%s682 + $0x40] sm:$0xff]
        %v2308 = vld [vmem:[%s682 + $0x48] sm:$0xff]
        %v2309 = vld [vmem:[%s682 + $0x50] sm:$0xff]
        %v2310 = vld [vmem:[%s682 + $0x58] sm:$0xff]
        %v2311 = vld [vmem:[%s682 + $0x60] sm:$0xff]
        %v2312 = vld [vmem:[%s682 + $0x68] sm:$0xff]
        %v2313 = vld [vmem:[%s682 + $0x70] sm:$0xff]
        %v2314 = vld [vmem:[%s682 + $0x78] sm:$0xff]
        %v2315 = vpack.c.bf16 %v2298, %v2297
        %v2316 = vld [vmem:[%s809] sm:$0x3]
        %v2318 = vlaneseq
        %v2319 = vshrl.u32 %v2318, 7
        %v2320 = vsub.s32 0, %v2319
        %v2321 = vrot.slane %v2316, %v2320
        %v2322 = vlaneseq
        %v2323 = vshrl.u32 %v2322, 7
        %v2324 = vsub.s32 1, %v2323
        %v2325 = vrot.slane %v2316, %v2324
        %v2344 = vunpack.c.l.b16 %v2299
        %v2345 = vunpack.c.h.b16 %v2299
        %v2346 = vunpack.c.l.b16 %v2300
        %v2347 = vunpack.c.h.b16 %v2300
        %v2348 = vunpack.c.l.b16 %v2301
        %v2349 = vunpack.c.h.b16 %v2301
        %v2350 = vunpack.c.l.b16 %v2302
        %v2351 = vunpack.c.h.b16 %v2302
        %v2352 = vunpack.c.l.b16 %v2303
        %v2353 = vunpack.c.h.b16 %v2303
        %v2354 = vunpack.c.l.b16 %v2304
        %v2355 = vunpack.c.h.b16 %v2304
        %v2356 = vunpack.c.l.b16 %v2305
        %v2357 = vunpack.c.h.b16 %v2305
        %v2358 = vunpack.c.l.b16 %v2306
        %v2359 = vunpack.c.h.b16 %v2306
        %v2360 = vunpack.c.l.b16 %v2307
        %v2361 = vunpack.c.h.b16 %v2307
        %v2362 = vunpack.c.l.b16 %v2308
        %v2363 = vunpack.c.h.b16 %v2308
        %v2364 = vunpack.c.l.b16 %v2309
        %v2365 = vunpack.c.h.b16 %v2309
        %v2366 = vunpack.c.l.b16 %v2310
        %v2367 = vunpack.c.h.b16 %v2310
        %v2368 = vunpack.c.l.b16 %v2311
        %v2369 = vunpack.c.h.b16 %v2311
        %v2370 = vunpack.c.l.b16 %v2312
        %v2371 = vunpack.c.h.b16 %v2312
        %v2372 = vunpack.c.l.b16 %v2313
        %v2373 = vunpack.c.h.b16 %v2313
        %v2374 = vunpack.c.l.b16 %v2314
        %v2375 = vunpack.c.h.b16 %v2314
        %v2376 = vpack.c.b16 %v2346, %v2344
        %v2377 = vpack.c.b16 %v2347, %v2345
        %v2378 = vpack.c.b16 %v2350, %v2348
        %v2379 = vpack.c.b16 %v2351, %v2349
        %v2380 = vpack.c.b16 %v2354, %v2352
        %v2381 = vpack.c.b16 %v2355, %v2353
        %v2382 = vpack.c.b16 %v2358, %v2356
        %v2383 = vpack.c.b16 %v2359, %v2357
        %v2384 = vpack.c.b16 %v2362, %v2360
        %v2385 = vpack.c.b16 %v2363, %v2361
        %v2386 = vpack.c.b16 %v2366, %v2364
        %v2387 = vpack.c.b16 %v2367, %v2365
        %v2388 = vpack.c.b16 %v2370, %v2368
        %v2389 = vpack.c.b16 %v2371, %v2369
        %v2390 = vpack.c.b16 %v2374, %v2372
        %v2391 = vpack.c.b16 %v2375, %v2373
        %2408 = vmatprep.subr.bf16.mxu0 %v2377
        %2409 = vmatpush1.bf16.msra.mxu0 %v2376
        %2410 = vmatprep.subr.bf16.mxu0 %v2379
        %2411 = vmatpush1.bf16.msra.mxu0 %v2378
        %2412 = vmatprep.subr.bf16.mxu0 %v2381
        %2413 = vmatpush1.bf16.msra.mxu0 %v2380
        %2414 = vmatprep.subr.bf16.mxu0 %v2383
        %2415 = vmatpush1.bf16.msra.mxu0 %v2382
        %2416 = vmatprep.subr.bf16.mxu0 %v2385
        %2417 = vmatpush1.bf16.msra.mxu0 %v2384
        %2418 = vmatprep.subr.bf16.mxu0 %v2387
        %2419 = vmatpush1.bf16.msra.mxu0 %v2386
        %2420 = vmatprep.subr.bf16.mxu0 %v2389
        %2421 = vmatpush1.bf16.msra.mxu0 %v2388
        %2422 = vmatprep.subr.bf16.mxu0 %v2391
        %2423 = vmatpush1.bf16.msra.mxu0 %v2390
        %2424 = vmatprep.subr.bf16.mxu0 0
        %2425 = vmatpush1.bf16.msra.mxu0 0
        %2426 = vmatprep.subr.bf16.mxu0 0
        %2427 = vmatpush1.bf16.msra.mxu0 0
        %2428 = vmatprep.subr.bf16.mxu0 0
        %2429 = vmatpush1.bf16.msra.mxu0 0
        %2430 = vmatprep.subr.bf16.mxu0 0
        %2431 = vmatpush1.bf16.msra.mxu0 0
        %2432 = vmatprep.subr.bf16.mxu0 0
        %2433 = vmatpush1.bf16.msra.mxu0 0
        %2434 = vmatprep.subr.bf16.mxu0 0
        %2435 = vmatpush1.bf16.msra.mxu0 0
        %2436 = vmatprep.subr.bf16.mxu0 0
        %2437 = vmatpush1.bf16.msra.mxu0 0
        %2438 = vmatprep.subr.bf16.mxu0 0
        %2439 = vmatpush1.bf16.msra.mxu0 0
        %2440 = vmatprep.mubr.bf16.mxu0 0
        %2441 = vmatmul.mubr.bf16.gmra.mrb[0].mxu0 %v2315
        %v2442 = vpop.f32.mrb[0].mxu0
        %v2443 = vadd.f32 %v2321, %v2442
        %v2444 = vpop.f32.mrb[0].mxu0
        %v2445 = vadd.f32 %v2325, %v2444
        %v2446 = vpop.f32.mrb[0].mxu0
        %v2447 = vadd.f32 %v2321, %v2446
        %v2448 = vpop.f32.mrb[0].mxu0
        %v2449 = vadd.f32 %v2325, %v2448
        %2450 = vdwg.mxu0
        %v2451 = vmax.f32 %v2443, 0.0
        %v2452 = vmax.f32 %v2445, 0.0
        %v2453 = vmax.f32 %v2447, 0.0
        %v2454 = vmax.f32 %v2449, 0.0
        %v2455 = vld [vmem:[%s691] sm:$0xf]
        %v2456 = vld [vmem:[%s691 + $0x4] sm:$0xf]
        %v2457 = vld [vmem:[%s691 + $0x8] sm:$0xf]
        %v2458 = vld [vmem:[%s691 + $0xc] sm:$0xf]
        %v2459 = vld [vmem:[%s691 + $0x10] sm:$0xf]
        %v2460 = vld [vmem:[%s691 + $0x14] sm:$0xf]
        %v2461 = vld [vmem:[%s691 + $0x18] sm:$0xf]
        %v2462 = vld [vmem:[%s691 + $0x1c] sm:$0xf]
        %v2463 = vld [vmem:[%s691 + $0x20] sm:$0xf]
        %v2464 = vld [vmem:[%s691 + $0x24] sm:$0xf]
        %v2465 = vld [vmem:[%s691 + $0x28] sm:$0xf]
        %v2466 = vld [vmem:[%s691 + $0x2c] sm:$0xf]
        %v2467 = vld [vmem:[%s691 + $0x30] sm:$0xf]
        %v2468 = vld [vmem:[%s691 + $0x34] sm:$0xf]
        %v2469 = vld [vmem:[%s691 + $0x38] sm:$0xf]
        %v2470 = vld [vmem:[%s691 + $0x3c] sm:$0xf]
        %v2471 = vld [vmem:[%s691 + $0x40] sm:$0xf]
        %v2472 = vld [vmem:[%s691 + $0x44] sm:$0xf]
        %v2473 = vld [vmem:[%s691 + $0x48] sm:$0xf]
        %v2474 = vld [vmem:[%s691 + $0x4c] sm:$0xf]
        %v2475 = vld [vmem:[%s691 + $0x50] sm:$0xf]
        %v2476 = vld [vmem:[%s691 + $0x54] sm:$0xf]
        %v2477 = vld [vmem:[%s691 + $0x58] sm:$0xf]
        %v2478 = vld [vmem:[%s691 + $0x5c] sm:$0xf]
        %v2479 = vld [vmem:[%s691 + $0x60] sm:$0xf]
        %v2480 = vld [vmem:[%s691 + $0x64] sm:$0xf]
        %v2481 = vld [vmem:[%s691 + $0x68] sm:$0xf]
        %v2482 = vld [vmem:[%s691 + $0x6c] sm:$0xf]
        %v2483 = vld [vmem:[%s691 + $0x70] sm:$0xf]
        %v2484 = vld [vmem:[%s691 + $0x74] sm:$0xf]
        %v2485 = vld [vmem:[%s691 + $0x78] sm:$0xf]
        %v2486 = vld [vmem:[%s691 + $0x7c] sm:$0xf]
        %v2487 = vpack.c.bf16 %v2453, %v2451
        %v2488 = vpack.c.bf16 %v2454, %v2452
        %v2489 = vld [vmem:[%s812] sm:$0x1]
        %v2491 = vlaneseq
        %v2492 = vshrl.u32 %v2491, 7
        %v2493 = vsub.s32 0, %v2492
        %v2494 = vrot.slane %v2489, %v2493
        %v2528 = vunpack.c.l.b16 %v2455
        %v2529 = vunpack.c.l.b16 %v2456
        %v2530 = vunpack.c.l.b16 %v2457
        %v2531 = vunpack.c.l.b16 %v2458
        %v2532 = vunpack.c.l.b16 %v2459
        %v2533 = vunpack.c.l.b16 %v2460
        %v2534 = vunpack.c.l.b16 %v2461
        %v2535 = vunpack.c.l.b16 %v2462
        %v2536 = vunpack.c.l.b16 %v2463
        %v2537 = vunpack.c.l.b16 %v2464
        %v2538 = vunpack.c.l.b16 %v2465
        %v2539 = vunpack.c.l.b16 %v2466
        %v2540 = vunpack.c.l.b16 %v2467
        %v2541 = vunpack.c.l.b16 %v2468
        %v2542 = vunpack.c.l.b16 %v2469
        %v2543 = vunpack.c.l.b16 %v2470
        %v2544 = vunpack.c.l.b16 %v2471
        %v2545 = vunpack.c.l.b16 %v2472
        %v2546 = vunpack.c.l.b16 %v2473
        %v2547 = vunpack.c.l.b16 %v2474
        %v2548 = vunpack.c.l.b16 %v2475
        %v2549 = vunpack.c.l.b16 %v2476
        %v2550 = vunpack.c.l.b16 %v2477
        %v2551 = vunpack.c.l.b16 %v2478
        %v2552 = vunpack.c.l.b16 %v2479
        %v2553 = vunpack.c.l.b16 %v2480
        %v2554 = vunpack.c.l.b16 %v2481
        %v2555 = vunpack.c.l.b16 %v2482
        %v2556 = vunpack.c.l.b16 %v2483
        %v2557 = vunpack.c.l.b16 %v2484
        %v2558 = vunpack.c.l.b16 %v2485
        %v2559 = vunpack.c.l.b16 %v2486
        %v2560 = vpack.c.b16 %v2529, %v2528
        %v2561 = vpack.c.b16 %v2531, %v2530
        %v2562 = vpack.c.b16 %v2533, %v2532
        %v2563 = vpack.c.b16 %v2535, %v2534
        %v2564 = vpack.c.b16 %v2537, %v2536
        %v2565 = vpack.c.b16 %v2539, %v2538
        %v2566 = vpack.c.b16 %v2541, %v2540
        %v2567 = vpack.c.b16 %v2543, %v2542
        %v2568 = vpack.c.b16 %v2545, %v2544
        %v2569 = vpack.c.b16 %v2547, %v2546
        %v2570 = vpack.c.b16 %v2549, %v2548
        %v2571 = vpack.c.b16 %v2551, %v2550
        %v2572 = vpack.c.b16 %v2553, %v2552
        %v2573 = vpack.c.b16 %v2555, %v2554
        %v2574 = vpack.c.b16 %v2557, %v2556
        %v2575 = vpack.c.b16 %v2559, %v2558
        %2592 = vmatprep.subr.bf16.mxu0 0
        %2593 = vmatpush1.bf16.msra.mxu0 %v2560
        %2594 = vmatprep.subr.bf16.mxu0 0
        %2595 = vmatpush1.bf16.msra.mxu0 %v2561
        %2596 = vmatprep.subr.bf16.mxu0 0
        %2597 = vmatpush1.bf16.msra.mxu0 %v2562
        %2598 = vmatprep.subr.bf16.mxu0 0
        %2599 = vmatpush1.bf16.msra.mxu0 %v2563
        %2600 = vmatprep.subr.bf16.mxu0 0
        %2601 = vmatpush1.bf16.msra.mxu0 %v2564
        %2602 = vmatprep.subr.bf16.mxu0 0
        %2603 = vmatpush1.bf16.msra.mxu0 %v2565
        %2604 = vmatprep.subr.bf16.mxu0 0
        %2605 = vmatpush1.bf16.msra.mxu0 %v2566
        %2606 = vmatprep.subr.bf16.mxu0 0
        %2607 = vmatpush1.bf16.msra.mxu0 %v2567
        %2608 = vmatprep.subr.bf16.mxu0 0
        %2609 = vmatpush1.bf16.msra.mxu0 %v2568
        %2610 = vmatprep.subr.bf16.mxu0 0
        %2611 = vmatpush1.bf16.msra.mxu0 %v2569
        %2612 = vmatprep.subr.bf16.mxu0 0
        %2613 = vmatpush1.bf16.msra.mxu0 %v2570
        %2614 = vmatprep.subr.bf16.mxu0 0
        %2615 = vmatpush1.bf16.msra.mxu0 %v2571
        %2616 = vmatprep.subr.bf16.mxu0 0
        %2617 = vmatpush1.bf16.msra.mxu0 %v2572
        %2618 = vmatprep.subr.bf16.mxu0 0
        %2619 = vmatpush1.bf16.msra.mxu0 %v2573
        %2620 = vmatprep.subr.bf16.mxu0 0
        %2621 = vmatpush1.bf16.msra.mxu0 %v2574
        %2622 = vmatprep.subr.bf16.mxu0 0
        %2623 = vmatpush1.bf16.msra.mxu0 %v2575
        %2624 = vmatprep.mubr.bf16.mxu0 %v2488
        %2625 = vmatmul.mubr.bf16.gmra.mrb[0].mxu0 %v2487
        %v2626 = vpop.f32.mrb[0].mxu0
        %v2627 = vadd.f32 %v2494, %v2626
        %v2628 = vpop.f32.mrb[0].mxu0
        %v2629 = vpop.f32.mrb[0].mxu0
        %v2630 = vadd.f32 %v2494, %v2629
        %v2631 = vpop.f32.mrb[0].mxu0
        %2632 = vdwg.mxu0
        %v2633 = vmul.f32 %v2627, %v867
        %v2634 = vmul.f32 %v2630, %v872
        %v2635 = vadd.f32 %v2297, %v2633
        %v2636 = vadd.f32 %v2298, %v2634
        %v2637 = vld [vmem:[%s815] sm:$0x1]
        %v2638 = vld [vmem:[%s818] sm:$0x1]
        %2639 = vadd.xlane.f32.xlu0 %v2635
        %v2640 = vpop.xlane.xlu0 %2639
        %2641 = vadd.xlane.f32.xlu0 %v2636
        %v2642 = vpop.xlane.xlu0 %2641
        %v2643 = vmul.f32 %v2640, %v2262
        %v2644 = vmul.f32 %v2642, %v2262
        %v2645 = vsub.f32 %v2635, %v2643
        %v2646 = vsub.f32 %v2636, %v2644
        %v2647 = vmul.f32 %v2645, %v2645
        %v2648 = vmul.f32 %v2646, %v2646
        %2649 = vadd.xlane.f32.xlu0 %v2647
        %v2650 = vpop.xlane.xlu0 %2649
        %2651 = vadd.xlane.f32.xlu0 %v2648
        %v2652 = vpop.xlane.xlu0 %2651
        %v2653 = vmul.f32 %v2650, %v2262
        %v2654 = vmul.f32 %v2652, %v2262
        %v2655 = vadd.f32 %v2653, 1e-05
        %v2656 = vadd.f32 %v2654, 1e-05
        %v2657 = vrsqrt.pop %v2655
        %v2658 = vrsqrt.pop %v2656
        %v2659 = vmul.f32 %v2645, %v2657
        %v2660 = vmul.f32 %v2646, %v2658
        %v2662 = vlaneseq
        %v2663 = vshrl.u32 %v2662, 7
        %v2664 = vsub.s32 0, %v2663
        %v2665 = vrot.slane %v2637, %v2664
        %v2667 = vmul.f32 %v2659, %v2665
        %v2668 = vmul.f32 %v2660, %v2665
        %v2670 = vlaneseq
        %v2671 = vshrl.u32 %v2670, 7
        %v2672 = vsub.s32 0, %v2671
        %v2673 = vrot.slane %v2638, %v2672
        %v2675 = vadd.f32 %v2667, %v2673
        %v2676 = vadd.f32 %v2668, %v2673
        %v2677 = vmul.f32 %v2675, %v867
        %v2678 = vmul.f32 %v2676, %v872
        %2679 = vst [vmem:[%s789] sm:$0xff] %v2677
        %2680 = vst [vmem:[%s789 + $0x8] sm:$0xff] %v2678
        %s2681 = sand.u32 %s424, 1
        %s2682 = scalar_lea.sflag [#allocation4], %s2681
        %s2683 = sand.u32 %s424, 1
        %s2684 = smul.addr %s2683, 16
        %s2685 = scalar_lea.vmem [#allocation13], %s2684
        // Predicated region
        $region105: #{tpu_custom_call.1} parent=75 // pred_check
          %p2686 = pneg %p434
        $region106: #{tpu_custom_call.1} parent=75 // pred_check_branch
          %2688 = sbr.rel (%p2686) target = $region108
        $region107: #{tpu_custom_call.1} parent=75 // pred_region
          %s2690 = ssub.s32 256, 256
          %2691 = vsyncadd %s2682, %s2690
          %s2692 = smul.addr %s44, 2
          %s2693 = smul.addr %s2692, 128
          %s2694 = scalar_lea.hbm %s14, %s2693
          %s2695 = sshll.u32 %s2685, 4
          %s2696 = int_to_ptr.vmem [resolvable:$true] %s2695
          %2701 = dma.vmem_to_hbm [thread:$0]  %s2696, 256, %s2694, %s2682, 128, 128, 8
        $region108: #{tpu_custom_call.1} parent=75 // pred_fallthru
          _
      $region76: #{tpu_custom_call.1} parent=5 // pred_fallthru
        _
      %p2702 = scmp.le.s32.totalorder 2, %s35
      // Predicated region
      $region109: #{tpu_custom_call.1} parent=5 // pred_check
        %p2703 = pneg %p2702
      $region110: #{tpu_custom_call.1} parent=5 // pred_check_branch
        %2705 = sbr.rel (%p2703) target = $region112
      $region111: #{tpu_custom_call.1} parent=5 // pred_region
        %s2706 = ssub.s32 %s35, 2
        // Predicated region
        $region113: #{tpu_custom_call.1} parent=111 // pred_check
          %p2707 = pneg %p440
        $region114: #{tpu_custom_call.1} parent=111 // pred_check_branch
          %2709 = sbr.rel (%p2707) target = $region116
        $region115: #{tpu_custom_call.1} parent=111 // pred_region
          %s2710 = sand.u32 %s425, 1
          %s2711 = scalar_lea.sflag [#allocation4], %s2710
          %s2712 = sand.u32 %s425, 1
          %s2713 = smul.addr %s2712, 16
          %s2714 = scalar_lea.vmem [#allocation13], %s2713
          %2715 = dma.done %s2711, 256
        $region116: #{tpu_custom_call.1} parent=111 // pred_fallthru
          _
      $region112: #{tpu_custom_call.1} parent=5 // pred_fallthru
        _
    $region6: #{tpu_custom_call.1} parent=1 // loop_footer
      %s39 = sadd.s32 1, %s35
    $region7: #{tpu_custom_call.1} parent=1 // loop_footer_branch
      %34 = sbr.rel target = $region3
    $region8: #{tpu_custom_call.1} parent=1 // loop_exit
      _
    %2716 = vsyncpa [#allocation3], 1
    %s2717 = scalar_lea.sflag [#allocation3], 1
    %2718 = vsyncpa %s2717, 1
    %2719 = vsyncpa [#allocation6], 1
    %s2720 = scalar_lea.sflag [#allocation6], 1
    %2721 = vsyncpa %s2720, 1
    %2722 = vsyncpa [#allocation9], 1
    %s2723 = scalar_lea.sflag [#allocation9], 1
    %2724 = vsyncpa %s2723, 1
    %2725 = vsyncpa [#allocation12], 1
    %s2726 = scalar_lea.sflag [#allocation12], 1
    %2727 = vsyncpa %s2726, 1
    %2728 = vsyncpa [#allocation4], 1
    %s2729 = scalar_lea.sflag [#allocation4], 1
    %2730 = vsyncpa %s2729, 1

</llo_original>
